<compile_context>
chip_gen: v5e
topology: v5e:2x2
jax: 0.10.0
libtpu: 0.0.40
codegen_flags: <defaults>
</compile_context>

<pallas_src>
import functools
import math

import jax
import jax.numpy as jnp
from jax.experimental import pallas as pl
from jax.experimental.pallas import tpu as pltpu

# ---------------------------------------------------------------------------
# Small Llama-style config (toy sizes, lane-friendly: head_dim = 128)
# ---------------------------------------------------------------------------
BATCH = 2
SEQ = 8
HIDDEN = 256
NUM_HEADS = 2
HEAD_DIM = HIDDEN // NUM_HEADS          # 128
INTERMEDIATE = 512
RMS_EPS = 1e-6
MASK_NEG = -100.0                       # config.mask_neg analogue
ROPE_BASE = 10000.0
MAX_POS = 64                            # rotary cache length (>= SEQ)
COMPUTE_DTYPE = jnp.bfloat16            # MXU operand dtype (f32 accumulation)


# ---------------------------------------------------------------------------
# Fused decoder-layer kernel: one invocation, rows = B*S.
# ---------------------------------------------------------------------------
def _decoder_layer_kernel(x_ref, cos_ref, sins_ref, mask_ref,
                          ln1_ref, ln2_ref,
                          wqkv_ref, wo_ref, wgu_ref, wd_ref,
                          o_ref, attn_scratch,
                          *, batch, seq, num_heads, head_dim, eps, scale):
    cdt = wqkv_ref.dtype                                  # MXU operand dtype
    H = num_heads * head_dim
    half = head_dim // 2

    x = x_ref[...].astype(jnp.float32)                    # (BS, H) residual #1

    # ---- input RMSNorm (f32, torch-parity) ----
    var = jnp.mean(x * x, axis=-1, keepdims=True)
    normed = (x * jax.lax.rsqrt(var + eps)) * ln1_ref[...].astype(jnp.float32)

    # ---- fused Q|K|V projection: one wide matmul on the folded (B*S) rows ----
    qkv = jnp.dot(normed.astype(cdt), wqkv_ref[...],
                  preferred_element_type=jnp.float32)     # (BS, 3H) f32

    cos = cos_ref[...].astype(jnp.float32)                # (BS, D)
    sins = sins_ref[...].astype(jnp.float32)              # (BS, D) pre-signed sin
    mask = mask_ref[...].astype(jnp.float32)              # (B, S, S)

    # Cast the V slab to bf16 once (hoisted out of the per-head loop).
    v_c = qkv[:, 2 * H:3 * H].astype(cdt)                 # (BS, H) bf16

    # ---- attention: block-diagonal over batch (static unroll: heads x batch) ----
    for h in range(num_heads):
        lo = h * head_dim
        q_h = qkv[:, lo:lo + head_dim]                    # (BS, D) f32
        k_h = qkv[:, H + lo:H + lo + head_dim]

        # RoPE:  x*cos + rotate_half(x)*sin  ==  x*cos + roll(x, D/2)*sin_signed
        q_h = q_h * cos + pltpu.roll(q_h, shift=half, axis=1) * sins
        k_h = k_h * cos + pltpu.roll(k_h, shift=half, axis=1) * sins

        q_c = (q_h * scale).astype(cdt)                   # fold 1/sqrt(D) into Q
        k_c = k_h.astype(cdt)

        for b in range(batch):
            r0 = b * seq
            qb = q_c[r0:r0 + seq, :]                      # (S, D)
            kb = k_c[r0:r0 + seq, :]

            # scores = q @ k^T (transposed-RHS MXU matmul, no explicit transpose)
            scores = jax.lax.dot_general(qb, kb, (((1,), (1,)), ((), ())),
                                         preferred_element_type=jnp.float32)
            scores = scores + mask[b]                     # (S, S)

            # f32 softmax; denominator via EUP approx reciprocal
            m = jnp.max(scores, axis=-1, keepdims=True)
            p = jnp.exp(scores - m)
            probs = p * pl.reciprocal(jnp.sum(p, axis=-1, keepdims=True),
                                      approx=True)

            out = jnp.dot(probs.astype(cdt), v_c[r0:r0 + seq, lo:lo + head_dim],
                          preferred_element_type=jnp.float32)   # (S, D)
            attn_scratch[r0:r0 + seq, lo:lo + head_dim] = out

    # ---- o_proj + fused residual add ----
    hidden = x + jnp.dot(attn_scratch[...].astype(cdt), wo_ref[...],
                         preferred_element_type=jnp.float32)

    # ---- post-attention RMSNorm ----
    var2 = jnp.mean(hidden * hidden, axis=-1, keepdims=True)
    normed2 = (hidden * jax.lax.rsqrt(var2 + eps)) * ln2_ref[...].astype(jnp.float32)

    # ---- fused gate|up MLP + down_proj + fused residual add ----
    gu = jnp.dot(normed2.astype(cdt), wgu_ref[...],
                 preferred_element_type=jnp.float32)      # (BS, 2I)
    inter = wgu_ref.shape[1] // 2
    gate = gu[:, :inter]
    up = gu[:, inter:]
    act = gate * jax.nn.sigmoid(gate)                     # SiLU ('silu'), f32
    mlp_out = jnp.dot((act * up).astype(cdt), wd_ref[...],
                      preferred_element_type=jnp.float32)
    o_ref[...] = (hidden + mlp_out).astype(o_ref.dtype)


# ---------------------------------------------------------------------------
# Decoder layer wrapper (rotary-cache gather + batch-fold reshape in JAX)
# ---------------------------------------------------------------------------
def llama_decoder_layer(hidden_states, attention_mask, position_ids, params):
    # TODO(synk): past_key_value concat / use_cache & output_attentions paths
    #             are not exercised (forward with no KV cache, default call).
    B, S, H = hidden_states.shape
    D = HEAD_DIM

    # Gather RoPE tables to the folded-row layout (handles per-batch positions).
    cos = params["cos_cached"][position_ids].reshape(B * S, D)         # (BS, D)
    sins = params["sin_signed_cached"][position_ids].reshape(B * S, D)  # (BS, D)

    x_flat = hidden_states.reshape(B * S, H)
    mask = attention_mask.reshape(B, S, S).astype(jnp.float32)          # drop head axis

    kern = functools.partial(_decoder_layer_kernel,
                             batch=B, seq=S,
                             num_heads=NUM_HEADS, head_dim=D,
                             eps=RMS_EPS, scale=1.0 / math.sqrt(D))

    vmem = pl.BlockSpec(memory_space=pltpu.MemorySpace.VMEM)

    out_flat = pl.pallas_call(
        kern,
        out_shape=jax.ShapeDtypeStruct((B * S, H), hidden_states.dtype),
        in_specs=[vmem] * 10,
        out_specs=vmem,
        scratch_shapes=[pltpu.VMEM((B * S, H), jnp.float32)],   # attn assembly buffer
    )(x_flat, cos, sins, mask,
      params["ln1_2d"], params["ln2_2d"],
      params["wqkv_c"], params["wo_c"], params["wgu_c"], params["wd_c"])

    return out_flat.reshape(B, S, H)


# ---------------------------------------------------------------------------
# Pure-JAX reference (mirrors the PyTorch forward, f32) for a sanity check
# ---------------------------------------------------------------------------
def reference_decoder_layer(hidden_states, attention_mask, position_ids, params):
    hp = jax.lax.Precision.HIGHEST

    def rmsnorm_ref(x, w):
        var = jnp.mean(x.astype(jnp.float32) ** 2, axis=-1, keepdims=True)
        return (w * (x * jax.lax.rsqrt(var + RMS_EPS))).astype(x.dtype)

    def rotate_half(x):
        x1 = x[..., : HEAD_DIM // 2]
        x2 = x[..., HEAD_DIM // 2:]
        return jnp.concatenate([-x2, x1], axis=-1)

    B, S, H = hidden_states.shape
    residual = hidden_states
    x = rmsnorm_ref(hidden_states, params["input_ln_w"])
    q = jnp.einsum("bsh,hd->bsd", x, params["wq_t"], precision=hp)
    k = jnp.einsum("bsh,hd->bsd", x, params["wk_t"], precision=hp)
    v = jnp.einsum("bsh,hd->bsd", x, params["wv_t"], precision=hp)
    q = q.reshape(B, S, NUM_HEADS, HEAD_DIM).transpose(0, 2, 1, 3)
    k = k.reshape(B, S, NUM_HEADS, HEAD_DIM).transpose(0, 2, 1, 3)
    v = v.reshape(B, S, NUM_HEADS, HEAD_DIM).transpose(0, 2, 1, 3)

    cos = params["cos_cached"][position_ids][:, None]     # (B,1,S,D)
    sin = params["sin_cached"][position_ids][:, None]
    q = q * cos + rotate_half(q) * sin
    k = k * cos + rotate_half(k) * sin

    scores = jnp.einsum("bhqd,bhkd->bhqk", q, k, precision=hp) / math.sqrt(HEAD_DIM)
    scores = scores + attention_mask
    probs = jax.nn.softmax(scores.astype(jnp.float32), axis=-1).astype(q.dtype)
    attn = jnp.einsum("bhqk,bhkd->bhqd", probs, v, precision=hp)
    attn = attn.transpose(0, 2, 1, 3).reshape(B, S, H)
    attn = jnp.einsum("bsh,hd->bsd", attn, params["wo_t"], precision=hp)
    hidden = residual + attn

    residual = hidden
    x = rmsnorm_ref(hidden, params["post_ln_w"])
    gate = jnp.einsum("bsh,hi->bsi", x, params["wg_t"], precision=hp)
    up = jnp.einsum("bsh,hi->bsi", x, params["wu_t"], precision=hp)
    down = jnp.einsum("bsi,ih->bsh", jax.nn.silu(gate) * up, params["wd_t"], precision=hp)
    return residual + down


# ---------------------------------------------------------------------------
if __name__ == "__main__":
    key = jax.random.PRNGKey(0)
    ks = jax.random.split(key, 12)
    scale = 0.02
    # torch nn.Linear weights are (out_features, in_features); transpose for kernels
    wq = jax.random.normal(ks[0], (HIDDEN, HIDDEN), jnp.float32) * scale
    wk = jax.random.normal(ks[1], (HIDDEN, HIDDEN), jnp.float32) * scale
    wv = jax.random.normal(ks[2], (HIDDEN, HIDDEN), jnp.float32) * scale
    wo = jax.random.normal(ks[3], (HIDDEN, HIDDEN), jnp.float32) * scale
    wg = jax.random.normal(ks[4], (INTERMEDIATE, HIDDEN), jnp.float32) * scale
    wu = jax.random.normal(ks[5], (INTERMEDIATE, HIDDEN), jnp.float32) * scale
    wd = jax.random.normal(ks[6], (HIDDEN, INTERMEDIATE), jnp.float32) * scale
    ln1 = 1.0 + 0.1 * jax.random.normal(ks[7], (HIDDEN,), jnp.float32)
    ln2 = 1.0 + 0.1 * jax.random.normal(ks[8], (HIDDEN,), jnp.float32)

    # LlamaRotaryEmbedding cache
    inv_freq = 1.0 / (ROPE_BASE ** (jnp.arange(0, HEAD_DIM, 2, dtype=jnp.float32) / HEAD_DIM))
    t = jnp.arange(MAX_POS, dtype=jnp.float32)
    freqs = jnp.einsum("i,j->ij", t, inv_freq)
    emb = jnp.concatenate([freqs, freqs], axis=-1)
    cos_cached = jnp.cos(emb)                              # (MAX_POS, D)
    sin_cached = jnp.sin(emb)
    half = HEAD_DIM // 2
    # Pre-signed sin: rotate_half(x)*sin == roll(x, D/2)*sin_signed
    sin_signed_cached = jnp.concatenate(
        [-sin_cached[:, :half], sin_cached[:, half:]], axis=-1)

    params = {
        # f32 torch-parity weights (reference path), pre-transposed to (in, out)
        "wq_t": wq.T, "wk_t": wk.T, "wv_t": wv.T, "wo_t": wo.T,
        "wg_t": wg.T, "wu_t": wu.T, "wd_t": wd.T,
        "input_ln_w": ln1, "post_ln_w": ln2,
        "cos_cached": cos_cached, "sin_cached": sin_cached,
        "sin_signed_cached": sin_signed_cached,
        # packed bf16 weights for the fused kernel (one-time prep)
        "wqkv_c": jnp.concatenate([wq.T, wk.T, wv.T], axis=1).astype(COMPUTE_DTYPE),
        "wo_c": wo.T.astype(COMPUTE_DTYPE),
        "wgu_c": jnp.concatenate([wg.T, wu.T], axis=1).astype(COMPUTE_DTYPE),
        "wd_c": wd.T.astype(COMPUTE_DTYPE),
        "ln1_2d": ln1.reshape(1, HIDDEN),
        "ln2_2d": ln2.reshape(1, HIDDEN),
    }

    hidden_states = jax.random.normal(ks[9], (BATCH, SEQ, HIDDEN), jnp.float32)
    position_ids = jnp.broadcast_to(jnp.arange(SEQ, dtype=jnp.int32)[None, :], (BATCH, SEQ))
    causal = jnp.where(jnp.arange(SEQ)[:, None] >= jnp.arange(SEQ)[None, :], 0.0, MASK_NEG)
    attention_mask = jnp.broadcast_to(causal[None, None], (BATCH, 1, SEQ, SEQ)).astype(jnp.float32)

    out = llama_decoder_layer(hidden_states, attention_mask, position_ids, params)
    out = jax.block_until_ready(out)

    ref = reference_decoder_layer(hidden_states, attention_mask, position_ids, params)
    assert out.shape == (BATCH, SEQ, HIDDEN)
    max_err = float(jnp.max(jnp.abs(out - ref)))
    assert jnp.allclose(out, ref, rtol=5e-2, atol=5e-2), f"max abs err {max_err}"
    print("KERNEL_OK")
</pallas_src>

<mosaic_0001>
module attributes {stable_mosaic.version = 11 : i64} {
  func.func @_decoder_layer_kernel(%arg0: memref<16x256xf32, #tpu.memory_space<vmem>>, %arg1: memref<16x128xf32, #tpu.memory_space<vmem>>, %arg2: memref<16x128xf32, #tpu.memory_space<vmem>>, %arg3: memref<2x8x8xf32, #tpu.memory_space<vmem>>, %arg4: memref<1x256xf32, #tpu.memory_space<vmem>>, %arg5: memref<1x256xf32, #tpu.memory_space<vmem>>, %arg6: memref<256x768xbf16, #tpu.memory_space<vmem>>, %arg7: memref<256x256xbf16, #tpu.memory_space<vmem>>, %arg8: memref<256x1024xbf16, #tpu.memory_space<vmem>>, %arg9: memref<512x256xbf16, #tpu.memory_space<vmem>>, %arg10: memref<16x256xf32, #tpu.memory_space<vmem>>, %arg11: memref<16x256xf32, #tpu.memory_space<vmem>>) attributes {dimension_semantics = [], scalar_prefetch = 0 : i64, scratch_operands = 1 : i64, tpu.core_type = #tpu.core_type<tc>} {
    %c0 = arith.constant 0 : index
    %c0_0 = arith.constant 0 : index
    %0 = vector.load %arg0[%c0, %c0_0] : memref<16x256xf32, #tpu.memory_space<vmem>>, vector<16x256xf32>
    %1 = arith.mulf %0, %0 : vector<16x256xf32>
    %cst = arith.constant dense<0.000000e+00> : vector<16xf32>
    %2 = vector.multi_reduction <add>, %1, %cst [1] : vector<16x256xf32> to vector<16xf32>
    %3 = vector.shape_cast %2 : vector<16xf32> to vector<16x1xf32>
    %cst_1 = arith.constant 2.560000e+02 : f32
    %4 = vector.broadcast %cst_1 : f32 to vector<16x1xf32>
    %5 = arith.divf %3, %4 : vector<16x1xf32>
    %cst_2 = arith.constant 9.99999997E-7 : f32
    %6 = vector.broadcast %cst_2 : f32 to vector<16x1xf32>
    %7 = arith.addf %5, %6 : vector<16x1xf32>
    %8 = math.rsqrt %7 : vector<16x1xf32>
    %9 = vector.broadcast %8 : vector<16x1xf32> to vector<16x256xf32>
    %10 = arith.mulf %0, %9 : vector<16x256xf32>
    %c0_3 = arith.constant 0 : index
    %c0_4 = arith.constant 0 : index
    %11 = vector.load %arg4[%c0_3, %c0_4] : memref<1x256xf32, #tpu.memory_space<vmem>>, vector<1x256xf32>
    %12 = vector.broadcast %11 : vector<1x256xf32> to vector<16x256xf32>
    %13 = arith.mulf %10, %12 : vector<16x256xf32>
    %14 = arith.truncf %13 : vector<16x256xf32> to vector<16x256xbf16>
    %c0_5 = arith.constant 0 : index
    %c0_6 = arith.constant 0 : index
    %15 = vector.load %arg6[%c0_5, %c0_6] : memref<256x768xbf16, #tpu.memory_space<vmem>>, vector<256x768xbf16>
    %cst_7 = arith.constant dense<0.000000e+00> : vector<16x768xf32>
    %16 = tpu.matmul %14, %15, %cst_7 {dimension_numbers = #tpu.dot_dimension_numbers<[1], [0], [0], [1], [0, 0, 1, 1], [], []>} : vector<16x256xbf16>, vector<256x768xbf16>, vector<16x768xf32> -> vector<16x768xf32>
    %c0_8 = arith.constant 0 : index
    %c0_9 = arith.constant 0 : index
    %17 = vector.load %arg1[%c0_8, %c0_9] : memref<16x128xf32, #tpu.memory_space<vmem>>, vector<16x128xf32>
    %c0_10 = arith.constant 0 : index
    %c0_11 = arith.constant 0 : index
    %18 = vector.load %arg2[%c0_10, %c0_11] : memref<16x128xf32, #tpu.memory_space<vmem>>, vector<16x128xf32>
    %c0_12 = arith.constant 0 : index
    %c0_13 = arith.constant 0 : index
    %c0_14 = arith.constant 0 : index
    %19 = vector.load %arg3[%c0_12, %c0_13, %c0_14] : memref<2x8x8xf32, #tpu.memory_space<vmem>>, vector<2x8x8xf32>
    %20 = vector.extract_strided_slice %16 {offsets = [0, 512], sizes = [16, 256], strides = [1, 1]} : vector<16x768xf32> to vector<16x256xf32>
    %21 = arith.truncf %20 : vector<16x256xf32> to vector<16x256xbf16>
    %22 = vector.extract_strided_slice %16 {offsets = [0, 0], sizes = [16, 128], strides = [1, 1]} : vector<16x768xf32> to vector<16x128xf32>
    %23 = vector.extract_strided_slice %16 {offsets = [0, 256], sizes = [16, 128], strides = [1, 1]} : vector<16x768xf32> to vector<16x128xf32>
    %24 = arith.mulf %22, %17 : vector<16x128xf32>
    %c64_i32 = arith.constant 64 : i32
    %25 = tpu.dynamic_rotate %22 by %c64_i32 dim 1 : vector<16x128xf32>, i32 -> vector<16x128xf32>
    %26 = arith.mulf %25, %18 : vector<16x128xf32>
    %27 = arith.addf %24, %26 : vector<16x128xf32>
    %28 = arith.mulf %23, %17 : vector<16x128xf32>
    %c64_i32_15 = arith.constant 64 : i32
    %29 = tpu.dynamic_rotate %23 by %c64_i32_15 dim 1 : vector<16x128xf32>, i32 -> vector<16x128xf32>
    %30 = arith.mulf %29, %18 : vector<16x128xf32>
    %31 = arith.addf %28, %30 : vector<16x128xf32>
    %cst_16 = arith.constant 0.0883883461 : f32
    %32 = vector.broadcast %cst_16 : f32 to vector<16x128xf32>
    %33 = arith.mulf %27, %32 : vector<16x128xf32>
    %34 = arith.truncf %33 : vector<16x128xf32> to vector<16x128xbf16>
    %35 = arith.truncf %31 : vector<16x128xf32> to vector<16x128xbf16>
    %36 = vector.extract_strided_slice %34 {offsets = [0, 0], sizes = [8, 128], strides = [1, 1]} : vector<16x128xbf16> to vector<8x128xbf16>
    %37 = vector.extract_strided_slice %35 {offsets = [0, 0], sizes = [8, 128], strides = [1, 1]} : vector<16x128xbf16> to vector<8x128xbf16>
    %cst_17 = arith.constant dense<0.000000e+00> : vector<8x8xf32>
    %38 = tpu.matmul %36, %37, %cst_17 {dimension_numbers = #tpu.dot_dimension_numbers<[1], [1], [0], [0], [0, 0, 1, 0], [], []>} : vector<8x128xbf16>, vector<8x128xbf16>, vector<8x8xf32> -> vector<8x8xf32>
    %39 = vector.extract_strided_slice %19 {offsets = [0, 0, 0], sizes = [1, 8, 8], strides = [1, 1, 1]} : vector<2x8x8xf32> to vector<1x8x8xf32>
    %40 = vector.shape_cast %39 : vector<1x8x8xf32> to vector<8x8xf32>
    %41 = arith.addf %38, %40 : vector<8x8xf32>
    %cst_18 = arith.constant dense<0xFF800000> : vector<8xf32>
    %42 = vector.multi_reduction <maximumf>, %41, %cst_18 [1] : vector<8x8xf32> to vector<8xf32>
    %43 = vector.shape_cast %42 : vector<8xf32> to vector<8x1xf32>
    %44 = vector.broadcast %43 : vector<8x1xf32> to vector<8x8xf32>
    %45 = arith.subf %41, %44 : vector<8x8xf32>
    %46 = math.exp %45 : vector<8x8xf32>
    %cst_19 = arith.constant dense<0.000000e+00> : vector<8xf32>
    %47 = vector.multi_reduction <add>, %46, %cst_19 [1] : vector<8x8xf32> to vector<8xf32>
    %48 = vector.shape_cast %47 : vector<8xf32> to vector<8x1xf32>
    %49 = tpu.reciprocal %48 {approx = true} : vector<8x1xf32> -> vector<8x1xf32>
    %50 = vector.broadcast %49 : vector<8x1xf32> to vector<8x8xf32>
    %51 = arith.mulf %46, %50 : vector<8x8xf32>
    %52 = arith.truncf %51 : vector<8x8xf32> to vector<8x8xbf16>
    %53 = vector.extract_strided_slice %21 {offsets = [0, 0], sizes = [8, 128], strides = [1, 1]} : vector<16x256xbf16> to vector<8x128xbf16>
    %cst_20 = arith.constant dense<0.000000e+00> : vector<8x128xf32>
    %54 = tpu.matmul %52, %53, %cst_20 {dimension_numbers = #tpu.dot_dimension_numbers<[1], [0], [0], [1], [0, 0, 1, 1], [], []>} : vector<8x8xbf16>, vector<8x128xbf16>, vector<8x128xf32> -> vector<8x128xf32>
    %c0_21 = arith.constant 0 : index
    %c0_22 = arith.constant 0 : index
    %55 = vector.load %arg11[%c0_21, %c0_22] : memref<16x256xf32, #tpu.memory_space<vmem>>, vector<8x128xf32>
    tpu.vector_store %arg11[%c0_21, %c0_22], %54 {strides = array<i32>} : memref<16x256xf32, #tpu.memory_space<vmem>>, vector<8x128xf32>,
    %56 = vector.extract_strided_slice %34 {offsets = [8, 0], sizes = [8, 128], strides = [1, 1]} : vector<16x128xbf16> to vector<8x128xbf16>
    %57 = vector.extract_strided_slice %35 {offsets = [8, 0], sizes = [8, 128], strides = [1, 1]} : vector<16x128xbf16> to vector<8x128xbf16>
    %cst_23 = arith.constant dense<0.000000e+00> : vector<8x8xf32>
    %58 = tpu.matmul %56, %57, %cst_23 {dimension_numbers = #tpu.dot_dimension_numbers<[1], [1], [0], [0], [0, 0, 1, 0], [], []>} : vector<8x128xbf16>, vector<8x128xbf16>, vector<8x8xf32> -> vector<8x8xf32>
    %59 = vector.extract_strided_slice %19 {offsets = [1, 0, 0], sizes = [1, 8, 8], strides = [1, 1, 1]} : vector<2x8x8xf32> to vector<1x8x8xf32>
    %60 = vector.shape_cast %59 : vector<1x8x8xf32> to vector<8x8xf32>
    %61 = arith.addf %58, %60 : vector<8x8xf32>
    %cst_24 = arith.constant dense<0xFF800000> : vector<8xf32>
    %62 = vector.multi_reduction <maximumf>, %61, %cst_24 [1] : vector<8x8xf32> to vector<8xf32>
    %63 = vector.shape_cast %62 : vector<8xf32> to vector<8x1xf32>
    %64 = vector.broadcast %63 : vector<8x1xf32> to vector<8x8xf32>
    %65 = arith.subf %61, %64 : vector<8x8xf32>
    %66 = math.exp %65 : vector<8x8xf32>
    %cst_25 = arith.constant dense<0.000000e+00> : vector<8xf32>
    %67 = vector.multi_reduction <add>, %66, %cst_25 [1] : vector<8x8xf32> to vector<8xf32>
    %68 = vector.shape_cast %67 : vector<8xf32> to vector<8x1xf32>
    %69 = tpu.reciprocal %68 {approx = true} : vector<8x1xf32> -> vector<8x1xf32>
    %70 = vector.broadcast %69 : vector<8x1xf32> to vector<8x8xf32>
    %71 = arith.mulf %66, %70 : vector<8x8xf32>
    %72 = arith.truncf %71 : vector<8x8xf32> to vector<8x8xbf16>
    %73 = vector.extract_strided_slice %21 {offsets = [8, 0], sizes = [8, 128], strides = [1, 1]} : vector<16x256xbf16> to vector<8x128xbf16>
    %cst_26 = arith.constant dense<0.000000e+00> : vector<8x128xf32>
    %74 = tpu.matmul %72, %73, %cst_26 {dimension_numbers = #tpu.dot_dimension_numbers<[1], [0], [0], [1], [0, 0, 1, 1], [], []>} : vector<8x8xbf16>, vector<8x128xbf16>, vector<8x128xf32> -> vector<8x128xf32>
    %c8 = arith.constant 8 : index
    %c0_27 = arith.constant 0 : index
    %75 = vector.load %arg11[%c8, %c0_27] : memref<16x256xf32, #tpu.memory_space<vmem>>, vector<8x128xf32>
    tpu.vector_store %arg11[%c8, %c0_27], %74 {strides = array<i32>} : memref<16x256xf32, #tpu.memory_space<vmem>>, vector<8x128xf32>,
    %76 = vector.extract_strided_slice %16 {offsets = [0, 128], sizes = [16, 128], strides = [1, 1]} : vector<16x768xf32> to vector<16x128xf32>
    %77 = vector.extract_strided_slice %16 {offsets = [0, 384], sizes = [16, 128], strides = [1, 1]} : vector<16x768xf32> to vector<16x128xf32>
    %78 = arith.mulf %76, %17 : vector<16x128xf32>
    %c64_i32_28 = arith.constant 64 : i32
    %79 = tpu.dynamic_rotate %76 by %c64_i32_28 dim 1 : vector<16x128xf32>, i32 -> vector<16x128xf32>
    %80 = arith.mulf %79, %18 : vector<16x128xf32>
    %81 = arith.addf %78, %80 : vector<16x128xf32>
    %82 = arith.mulf %77, %17 : vector<16x128xf32>
    %c64_i32_29 = arith.constant 64 : i32
    %83 = tpu.dynamic_rotate %77 by %c64_i32_29 dim 1 : vector<16x128xf32>, i32 -> vector<16x128xf32>
    %84 = arith.mulf %83, %18 : vector<16x128xf32>
    %85 = arith.addf %82, %84 : vector<16x128xf32>
    %cst_30 = arith.constant 0.0883883461 : f32
    %86 = vector.broadcast %cst_30 : f32 to vector<16x128xf32>
    %87 = arith.mulf %81, %86 : vector<16x128xf32>
    %88 = arith.truncf %87 : vector<16x128xf32> to vector<16x128xbf16>
    %89 = arith.truncf %85 : vector<16x128xf32> to vector<16x128xbf16>
    %90 = vector.extract_strided_slice %88 {offsets = [0, 0], sizes = [8, 128], strides = [1, 1]} : vector<16x128xbf16> to vector<8x128xbf16>
    %91 = vector.extract_strided_slice %89 {offsets = [0, 0], sizes = [8, 128], strides = [1, 1]} : vector<16x128xbf16> to vector<8x128xbf16>
    %cst_31 = arith.constant dense<0.000000e+00> : vector<8x8xf32>
    %92 = tpu.matmul %90, %91, %cst_31 {dimension_numbers = #tpu.dot_dimension_numbers<[1], [1], [0], [0], [0, 0, 1, 0], [], []>} : vector<8x128xbf16>, vector<8x128xbf16>, vector<8x8xf32> -> vector<8x8xf32>
    %93 = vector.extract_strided_slice %19 {offsets = [0, 0, 0], sizes = [1, 8, 8], strides = [1, 1, 1]} : vector<2x8x8xf32> to vector<1x8x8xf32>
    %94 = vector.shape_cast %93 : vector<1x8x8xf32> to vector<8x8xf32>
    %95 = arith.addf %92, %94 : vector<8x8xf32>
    %cst_32 = arith.constant dense<0xFF800000> : vector<8xf32>
    %96 = vector.multi_reduction <maximumf>, %95, %cst_32 [1] : vector<8x8xf32> to vector<8xf32>
    %97 = vector.shape_cast %96 : vector<8xf32> to vector<8x1xf32>
    %98 = vector.broadcast %97 : vector<8x1xf32> to vector<8x8xf32>
    %99 = arith.subf %95, %98 : vector<8x8xf32>
    %100 = math.exp %99 : vector<8x8xf32>
    %cst_33 = arith.constant dense<0.000000e+00> : vector<8xf32>
    %101 = vector.multi_reduction <add>, %100, %cst_33 [1] : vector<8x8xf32> to vector<8xf32>
    %102 = vector.shape_cast %101 : vector<8xf32> to vector<8x1xf32>
    %103 = tpu.reciprocal %102 {approx = true} : vector<8x1xf32> -> vector<8x1xf32>
    %104 = vector.broadcast %103 : vector<8x1xf32> to vector<8x8xf32>
    %105 = arith.mulf %100, %104 : vector<8x8xf32>
    %106 = arith.truncf %105 : vector<8x8xf32> to vector<8x8xbf16>
    %107 = vector.extract_strided_slice %21 {offsets = [0, 128], sizes = [8, 128], strides = [1, 1]} : vector<16x256xbf16> to vector<8x128xbf16>
    %cst_34 = arith.constant dense<0.000000e+00> : vector<8x128xf32>
    %108 = tpu.matmul %106, %107, %cst_34 {dimension_numbers = #tpu.dot_dimension_numbers<[1], [0], [0], [1], [0, 0, 1, 1], [], []>} : vector<8x8xbf16>, vector<8x128xbf16>, vector<8x128xf32> -> vector<8x128xf32>
    %c0_35 = arith.constant 0 : index
    %c128 = arith.constant 128 : index
    %109 = vector.load %arg11[%c0_35, %c128] : memref<16x256xf32, #tpu.memory_space<vmem>>, vector<8x128xf32>
    tpu.vector_store %arg11[%c0_35, %c128], %108 {strides = array<i32>} : memref<16x256xf32, #tpu.memory_space<vmem>>, vector<8x128xf32>,
    %110 = vector.extract_strided_slice %88 {offsets = [8, 0], sizes = [8, 128], strides = [1, 1]} : vector<16x128xbf16> to vector<8x128xbf16>
    %111 = vector.extract_strided_slice %89 {offsets = [8, 0], sizes = [8, 128], strides = [1, 1]} : vector<16x128xbf16> to vector<8x128xbf16>
    %cst_36 = arith.constant dense<0.000000e+00> : vector<8x8xf32>
    %112 = tpu.matmul %110, %111, %cst_36 {dimension_numbers = #tpu.dot_dimension_numbers<[1], [1], [0], [0], [0, 0, 1, 0], [], []>} : vector<8x128xbf16>, vector<8x128xbf16>, vector<8x8xf32> -> vector<8x8xf32>
    %113 = vector.extract_strided_slice %19 {offsets = [1, 0, 0], sizes = [1, 8, 8], strides = [1, 1, 1]} : vector<2x8x8xf32> to vector<1x8x8xf32>
    %114 = vector.shape_cast %113 : vector<1x8x8xf32> to vector<8x8xf32>
    %115 = arith.addf %112, %114 : vector<8x8xf32>
    %cst_37 = arith.constant dense<0xFF800000> : vector<8xf32>
    %116 = vector.multi_reduction <maximumf>, %115, %cst_37 [1] : vector<8x8xf32> to vector<8xf32>
    %117 = vector.shape_cast %116 : vector<8xf32> to vector<8x1xf32>
    %118 = vector.broadcast %117 : vector<8x1xf32> to vector<8x8xf32>
    %119 = arith.subf %115, %118 : vector<8x8xf32>
    %120 = math.exp %119 : vector<8x8xf32>
    %cst_38 = arith.constant dense<0.000000e+00> : vector<8xf32>
    %121 = vector.multi_reduction <add>, %120, %cst_38 [1] : vector<8x8xf32> to vector<8xf32>
    %122 = vector.shape_cast %121 : vector<8xf32> to vector<8x1xf32>
    %123 = tpu.reciprocal %122 {approx = true} : vector<8x1xf32> -> vector<8x1xf32>
    %124 = vector.broadcast %123 : vector<8x1xf32> to vector<8x8xf32>
    %125 = arith.mulf %120, %124 : vector<8x8xf32>
    %126 = arith.truncf %125 : vector<8x8xf32> to vector<8x8xbf16>
    %127 = vector.extract_strided_slice %21 {offsets = [8, 128], sizes = [8, 128], strides = [1, 1]} : vector<16x256xbf16> to vector<8x128xbf16>
    %cst_39 = arith.constant dense<0.000000e+00> : vector<8x128xf32>
    %128 = tpu.matmul %126, %127, %cst_39 {dimension_numbers = #tpu.dot_dimension_numbers<[1], [0], [0], [1], [0, 0, 1, 1], [], []>} : vector<8x8xbf16>, vector<8x128xbf16>, vector<8x128xf32> -> vector<8x128xf32>
    %c8_40 = arith.constant 8 : index
    %c128_41 = arith.constant 128 : index
    %129 = vector.load %arg11[%c8_40, %c128_41] : memref<16x256xf32, #tpu.memory_space<vmem>>, vector<8x128xf32>
    tpu.vector_store %arg11[%c8_40, %c128_41], %128 {strides = array<i32>} : memref<16x256xf32, #tpu.memory_space<vmem>>, vector<8x128xf32>,
    %c0_42 = arith.constant 0 : index
    %c0_43 = arith.constant 0 : index
    %130 = vector.load %arg11[%c0_42, %c0_43] : memref<16x256xf32, #tpu.memory_space<vmem>>, vector<16x256xf32>
    %131 = arith.truncf %130 : vector<16x256xf32> to vector<16x256xbf16>
    %c0_44 = arith.constant 0 : index
    %c0_45 = arith.constant 0 : index
    %132 = vector.load %arg7[%c0_44, %c0_45] : memref<256x256xbf16, #tpu.memory_space<vmem>>, vector<256x256xbf16>
    %cst_46 = arith.constant dense<0.000000e+00> : vector<16x256xf32>
    %133 = tpu.matmul %131, %132, %cst_46 {dimension_numbers = #tpu.dot_dimension_numbers<[1], [0], [0], [1], [0, 0, 1, 1], [], []>} : vector<16x256xbf16>, vector<256x256xbf16>, vector<16x256xf32> -> vector<16x256xf32>
    %134 = arith.addf %0, %133 : vector<16x256xf32>
    %135 = arith.mulf %134, %134 : vector<16x256xf32>
    %cst_47 = arith.constant dense<0.000000e+00> : vector<16xf32>
    %136 = vector.multi_reduction <add>, %135, %cst_47 [1] : vector<16x256xf32> to vector<16xf32>
    %137 = vector.shape_cast %136 : vector<16xf32> to vector<16x1xf32>
    %cst_48 = arith.constant 2.560000e+02 : f32
    %138 = vector.broadcast %cst_48 : f32 to vector<16x1xf32>
    %139 = arith.divf %137, %138 : vector<16x1xf32>
    %cst_49 = arith.constant 9.99999997E-7 : f32
    %140 = vector.broadcast %cst_49 : f32 to vector<16x1xf32>
    %141 = arith.addf %139, %140 : vector<16x1xf32>
    %142 = math.rsqrt %141 : vector<16x1xf32>
    %143 = vector.broadcast %142 : vector<16x1xf32> to vector<16x256xf32>
    %144 = arith.mulf %134, %143 : vector<16x256xf32>
    %c0_50 = arith.constant 0 : index
    %c0_51 = arith.constant 0 : index
    %145 = vector.load %arg5[%c0_50, %c0_51] : memref<1x256xf32, #tpu.memory_space<vmem>>, vector<1x256xf32>
    %146 = vector.broadcast %145 : vector<1x256xf32> to vector<16x256xf32>
    %147 = arith.mulf %144, %146 : vector<16x256xf32>
    %148 = arith.truncf %147 : vector<16x256xf32> to vector<16x256xbf16>
    %c0_52 = arith.constant 0 : index
    %c0_53 = arith.constant 0 : index
    %149 = vector.load %arg8[%c0_52, %c0_53] : memref<256x1024xbf16, #tpu.memory_space<vmem>>, vector<256x1024xbf16>
    %cst_54 = arith.constant dense<0.000000e+00> : vector<16x1024xf32>
    %150 = tpu.matmul %148, %149, %cst_54 {dimension_numbers = #tpu.dot_dimension_numbers<[1], [0], [0], [1], [0, 0, 1, 1], [], []>} : vector<16x256xbf16>, vector<256x1024xbf16>, vector<16x1024xf32> -> vector<16x1024xf32>
    %151 = vector.extract_strided_slice %150 {offsets = [0, 0], sizes = [16, 512], strides = [1, 1]} : vector<16x1024xf32> to vector<16x512xf32>
    %152 = vector.extract_strided_slice %150 {offsets = [0, 512], sizes = [16, 512], strides = [1, 1]} : vector<16x1024xf32> to vector<16x512xf32>
    %153 = arith.negf %151 : vector<16x512xf32>
    %154 = math.exp %153 : vector<16x512xf32>
    %cst_55 = arith.constant 1.000000e+00 : f32
    %155 = vector.broadcast %cst_55 : f32 to vector<16x512xf32>
    %156 = arith.addf %155, %154 : vector<16x512xf32>
    %157 = arith.divf %155, %156 : vector<16x512xf32>
    %158 = arith.mulf %151, %157 : vector<16x512xf32>
    %159 = arith.mulf %158, %152 : vector<16x512xf32>
    %160 = arith.truncf %159 : vector<16x512xf32> to vector<16x512xbf16>
    %c0_56 = arith.constant 0 : index
    %c0_57 = arith.constant 0 : index
    %161 = vector.load %arg9[%c0_56, %c0_57] : memref<512x256xbf16, #tpu.memory_space<vmem>>, vector<512x256xbf16>
    %cst_58 = arith.constant dense<0.000000e+00> : vector<16x256xf32>
    %162 = tpu.matmul %160, %161, %cst_58 {dimension_numbers = #tpu.dot_dimension_numbers<[1], [0], [0], [1], [0, 0, 1, 1], [], []>} : vector<16x512xbf16>, vector<512x256xbf16>, vector<16x256xf32> -> vector<16x256xf32>
    %163 = arith.addf %134, %162 : vector<16x256xf32>
    %c0_59 = arith.constant 0 : index
    %c0_60 = arith.constant 0 : index
    %164 = vector.load %arg10[%c0_59, %c0_60] : memref<16x256xf32, #tpu.memory_space<vmem>>, vector<16x256xf32>
    tpu.vector_store %arg10[%c0_59, %c0_60], %163 {strides = array<i32>} : memref<16x256xf32, #tpu.memory_space<vmem>>, vector<16x256xf32>,
    return
  }
}

</mosaic_0001>

<llo_original>
// kernel: tpu_custom_call.1
$region0: #{tpu_custom_call.1}
  #allocation0 [shape = 'u32[]', space=smem, size = 0x4, offset = 0x4, fixed_abs, tag = 'smem constant byte address 0x4 - core index']
  #allocation1 [shape = 'u32[72,128]{1,0:T(1,128)}', space=vmem, size = 0x9000, scoped, tag = 'internal scratch']
  #allocation2 [shape = 'f32[16,256]{1,0:T(8,128)}', space=vmem, size = 0x4000, scoped, tag = 'scratch operand']
  %s0 = inlined_call_operand.hbm [shape: f32[16,256], index: 0, kind: input, shape index: {}]
  %s1 = inlined_call_operand.hbm [shape: f32[16,128], index: 1, kind: input, shape index: {}]
  %s2 = inlined_call_operand.hbm [shape: f32[16,128], index: 2, kind: input, shape index: {}]
  %s3 = inlined_call_operand.hbm [shape: f32[2,8,8], index: 3, kind: input, shape index: {}]
  %s4 = inlined_call_operand.vmem [shape: f32[1,256], index: 4, kind: input, shape index: {}]
  %s5 = inlined_call_operand.vmem [shape: f32[1,256], index: 5, kind: input, shape index: {}]
  %s6 = inlined_call_operand.hbm [shape: bf16[256,768], index: 6, kind: input, shape index: {}]
  %s7 = inlined_call_operand.hbm [shape: bf16[256,256], index: 7, kind: input, shape index: {}]
  %s8 = inlined_call_operand.hbm [shape: bf16[256,1024], index: 8, kind: input, shape index: {}]
  %s9 = inlined_call_operand.hbm [shape: bf16[512,256], index: 9, kind: input, shape index: {}]
  %s10 = inlined_call_operand.hbm [shape: f32[16,256], index: 10, kind: output, shape index: {}]
  %s11 = sld [smem:[#allocation0]]
  $region82: #{tpu_custom_call.1} parent=0
    _
  %s13 = ssub.s32 1, %s11
  %s14 = scalar_select 0, %s13, %s11
  $region1: #{tpu_custom_call.1} parent=0
    #allocation3 [shape = 'u8[16384]{0}', space=vmem, size = 0x4000, scoped, tag = 'input window, operand 0, single buffered']
    #allocation4 [shape = 's32[1]{0}', space=sflag, size = 0x4, scoped, tag = 'scoped memory for tpu_custom_call.1']
    #allocation5 [shape = 's32[1]{0}', space=sflag, size = 0x4, scoped, tag = 'scoped memory for tpu_custom_call.1']
    #allocation6 [shape = 'u8[8192]{0}', space=vmem, size = 0x2000, scoped, tag = 'input window, operand 1, single buffered']
    #allocation7 [shape = 's32[1]{0}', space=sflag, size = 0x4, scoped, tag = 'scoped memory for tpu_custom_call.1']
    #allocation8 [shape = 'u8[8192]{0}', space=vmem, size = 0x2000, scoped, tag = 'input window, operand 2, single buffered']
    #allocation9 [shape = 'u8[8192]{0}', space=vmem, size = 0x2000, scoped, tag = 'input window, operand 3, single buffered']
    #allocation10 [shape = 's32[1]{0}', space=sflag, size = 0x4, scoped, tag = 'scoped memory for tpu_custom_call.1']
    #allocation11 [shape = 'u8[393216]{0}', space=vmem, size = 0x60000, scoped, tag = 'input window, operand 6, single buffered']
    #allocation12 [shape = 'u8[131072]{0}', space=vmem, size = 0x20000, scoped, tag = 'input window, operand 7, single buffered']
    #allocation13 [shape = 's32[1]{0}', space=sflag, size = 0x4, scoped, tag = 'scoped memory for tpu_custom_call.1']
    #allocation14 [shape = 'u8[524288]{0}', space=vmem, size = 0x80000, scoped, tag = 'input window, operand 8, single buffered']
    #allocation15 [shape = 'u8[262144]{0}', space=vmem, size = 0x40000, scoped, tag = 'input window, operand 9, single buffered']
    #allocation16 [shape = 's32[1]{0}', space=sflag, size = 0x4, scoped, tag = 'scoped memory for tpu_custom_call.1']
    #allocation17 [shape = 'u8[16384]{0}', space=vmem, size = 0x4000, scoped, tag = 'output window, operand 0, single buffered']
    %15 = vsyncpa [#allocation4], 0
    %16 = vsyncpa [#allocation7], 0
    %17 = vsyncpa [#allocation10], 0
    %18 = vsyncpa [#allocation13], 0
    %19 = vsyncpa [#allocation16], 0
    %20 = vsyncpa [#allocation5], 0
    // Predicated region
    $region2: #{tpu_custom_call.1} parent=1 // pred_check
      _
    $region3: #{tpu_custom_call.1} parent=1 // pred_check_branch
      %22 = sbr.rel (0) target = $region5
    $region4: #{tpu_custom_call.1} parent=1 // pred_region
      %24 = vsyncadd [#allocation4], 0
      %s25 = sshll.u32 %s0, 4
      %s26 = int_to_ptr.hbm [resolvable:$true] %s25
      %s27 = sshll.u32 [#allocation3], 4
      %s28 = int_to_ptr.vmem [resolvable:$true] %s27
      %33 = dma.hbm_to_vmem [thread:$0]  %s26, 512, %s28, [#allocation4], 256, 256, 16
    $region5: #{tpu_custom_call.1} parent=1 // pred_fallthru
      _
    // Predicated region
    $region6: #{tpu_custom_call.1} parent=1 // pred_check
      _
    $region7: #{tpu_custom_call.1} parent=1 // pred_check_branch
      %35 = sbr.rel (0) target = $region9
    $region8: #{tpu_custom_call.1} parent=1 // pred_region
      %37 = vsyncadd [#allocation7], 0
      %s38 = sshll.u32 %s1, 4
      %s39 = int_to_ptr.hbm [resolvable:$true] %s38
      %s40 = sshll.u32 [#allocation6], 4
      %s41 = int_to_ptr.vmem [resolvable:$true] %s40
      %46 = dma.hbm_to_vmem [thread:$0]  %s39, 256, %s41, [#allocation7], 128, 128, 8
    $region9: #{tpu_custom_call.1} parent=1 // pred_fallthru
      _
    // Predicated region
    $region10: #{tpu_custom_call.1} parent=1 // pred_check
      _
    $region11: #{tpu_custom_call.1} parent=1 // pred_check_branch
      %48 = sbr.rel (0) target = $region13
    $region12: #{tpu_custom_call.1} parent=1 // pred_region
      %50 = vsyncadd [#allocation7], 0
      %s51 = sshll.u32 %s2, 4
      %s52 = int_to_ptr.hbm [resolvable:$true] %s51
      %s53 = sshll.u32 [#allocation8], 4
      %s54 = int_to_ptr.vmem [resolvable:$true] %s53
      %59 = dma.hbm_to_vmem [thread:$0]  %s52, 256, %s54, [#allocation7], 128, 128, 8
    $region13: #{tpu_custom_call.1} parent=1 // pred_fallthru
      _
    // Predicated region
    $region14: #{tpu_custom_call.1} parent=1 // pred_check
      _
    $region15: #{tpu_custom_call.1} parent=1 // pred_check_branch
      %61 = sbr.rel (0) target = $region17
    $region16: #{tpu_custom_call.1} parent=1 // pred_region
      %63 = vsyncadd [#allocation10], 0
      %s64 = sshll.u32 %s3, 4
      %s65 = int_to_ptr.hbm [resolvable:$true] %s64
      %s66 = sshll.u32 [#allocation9], 4
      %s67 = int_to_ptr.vmem [resolvable:$true] %s66
      %72 = dma.hbm_to_vmem [thread:$0]  %s65, 256, %s67, [#allocation10], 128, 128, 8
    $region17: #{tpu_custom_call.1} parent=1 // pred_fallthru
      _
    // Predicated region
    $region18: #{tpu_custom_call.1} parent=1 // pred_check
      _
    $region19: #{tpu_custom_call.1} parent=1 // pred_check_branch
      %74 = sbr.rel (0) target = $region21
    $region20: #{tpu_custom_call.1} parent=1 // pred_region
      _
    $region21: #{tpu_custom_call.1} parent=1 // pred_fallthru
      _
    // Predicated region
    $region22: #{tpu_custom_call.1} parent=1 // pred_check
      _
    $region23: #{tpu_custom_call.1} parent=1 // pred_check_branch
      %76 = sbr.rel (0) target = $region25
    $region24: #{tpu_custom_call.1} parent=1 // pred_region
      _
    $region25: #{tpu_custom_call.1} parent=1 // pred_fallthru
      _
    // Predicated region
    $region26: #{tpu_custom_call.1} parent=1 // pred_check
      _
    $region27: #{tpu_custom_call.1} parent=1 // pred_check_branch
      %78 = sbr.rel (0) target = $region29
    $region28: #{tpu_custom_call.1} parent=1 // pred_region
      %80 = vsyncadd [#allocation10], 0
      %s81 = sshll.u32 %s6, 4
      %s82 = int_to_ptr.hbm [resolvable:$true] %s81
      %s83 = sshll.u32 [#allocation11], 4
      %s84 = int_to_ptr.vmem [resolvable:$true] %s83
      %89 = dma.hbm_to_vmem [thread:$0]  %s82, 12288, %s84, [#allocation10], 384, 384, 24
    $region29: #{tpu_custom_call.1} parent=1 // pred_fallthru
      _
    // Predicated region
    $region30: #{tpu_custom_call.1} parent=1 // pred_check
      _
    $region31: #{tpu_custom_call.1} parent=1 // pred_check_branch
      %91 = sbr.rel (0) target = $region33
    $region32: #{tpu_custom_call.1} parent=1 // pred_region
      %93 = vsyncadd [#allocation13], 0
      %s94 = sshll.u32 %s7, 4
      %s95 = int_to_ptr.hbm [resolvable:$true] %s94
      %s96 = sshll.u32 [#allocation12], 4
      %s97 = int_to_ptr.vmem [resolvable:$true] %s96
      %102 = dma.hbm_to_vmem [thread:$0]  %s95, 4096, %s97, [#allocation13], 128, 128, 8
    $region33: #{tpu_custom_call.1} parent=1 // pred_fallthru
      _
    // Predicated region
    $region34: #{tpu_custom_call.1} parent=1 // pred_check
      _
    $region35: #{tpu_custom_call.1} parent=1 // pred_check_branch
      %104 = sbr.rel (0) target = $region37
    $region36: #{tpu_custom_call.1} parent=1 // pred_region
      %106 = vsyncadd [#allocation13], 0
      %s107 = sshll.u32 %s8, 4
      %s108 = int_to_ptr.hbm [resolvable:$true] %s107
      %s109 = sshll.u32 [#allocation14], 4
      %s110 = int_to_ptr.vmem [resolvable:$true] %s109
      %115 = dma.hbm_to_vmem [thread:$0]  %s108, 16384, %s110, [#allocation13], 512, 512, 32
    $region37: #{tpu_custom_call.1} parent=1 // pred_fallthru
      _
    // Predicated region
    $region38: #{tpu_custom_call.1} parent=1 // pred_check
      _
    $region39: #{tpu_custom_call.1} parent=1 // pred_check_branch
      %117 = sbr.rel (0) target = $region41
    $region40: #{tpu_custom_call.1} parent=1 // pred_region
      %119 = vsyncadd [#allocation16], 0
      %s120 = sshll.u32 %s9, 4
      %s121 = int_to_ptr.hbm [resolvable:$true] %s120
      %s122 = sshll.u32 [#allocation15], 4
      %s123 = int_to_ptr.vmem [resolvable:$true] %s122
      %128 = dma.hbm_to_vmem [thread:$0]  %s121, 8192, %s123, [#allocation16], 128, 128, 8
    $region41: #{tpu_custom_call.1} parent=1 // pred_fallthru
      _
    // Predicated region
    $region42: #{tpu_custom_call.1} parent=1 // pred_check
      _
    $region43: #{tpu_custom_call.1} parent=1 // pred_check_branch
      %130 = sbr.rel (0) target = $region45
    $region44: #{tpu_custom_call.1} parent=1 // pred_region
      %132 = dma.done [#allocation4], 512
    $region45: #{tpu_custom_call.1} parent=1 // pred_fallthru
      _
    // Predicated region
    $region46: #{tpu_custom_call.1} parent=1 // pred_check
      _
    $region47: #{tpu_custom_call.1} parent=1 // pred_check_branch
      %134 = sbr.rel (0) target = $region49
    $region48: #{tpu_custom_call.1} parent=1 // pred_region
      %136 = dma.done [#allocation7], 256
    $region49: #{tpu_custom_call.1} parent=1 // pred_fallthru
      _
    // Predicated region
    $region50: #{tpu_custom_call.1} parent=1 // pred_check
      _
    $region51: #{tpu_custom_call.1} parent=1 // pred_check_branch
      %138 = sbr.rel (0) target = $region53
    $region52: #{tpu_custom_call.1} parent=1 // pred_region
      %140 = dma.done [#allocation7], 256
    $region53: #{tpu_custom_call.1} parent=1 // pred_fallthru
      _
    // Predicated region
    $region54: #{tpu_custom_call.1} parent=1 // pred_check
      _
    $region55: #{tpu_custom_call.1} parent=1 // pred_check_branch
      %142 = sbr.rel (0) target = $region57
    $region56: #{tpu_custom_call.1} parent=1 // pred_region
      %144 = dma.done [#allocation10], 256
    $region57: #{tpu_custom_call.1} parent=1 // pred_fallthru
      _
    // Predicated region
    $region58: #{tpu_custom_call.1} parent=1 // pred_check
      _
    $region59: #{tpu_custom_call.1} parent=1 // pred_check_branch
      %146 = sbr.rel (0) target = $region61
    $region60: #{tpu_custom_call.1} parent=1 // pred_region
      %148 = dma.done [#allocation10], 12288
    $region61: #{tpu_custom_call.1} parent=1 // pred_fallthru
      _
    // Predicated region
    $region62: #{tpu_custom_call.1} parent=1 // pred_check
      _
    $region63: #{tpu_custom_call.1} parent=1 // pred_check_branch
      %150 = sbr.rel (0) target = $region65
    $region64: #{tpu_custom_call.1} parent=1 // pred_region
      %152 = dma.done [#allocation13], 4096
    $region65: #{tpu_custom_call.1} parent=1 // pred_fallthru
      _
    // Predicated region
    $region66: #{tpu_custom_call.1} parent=1 // pred_check
      _
    $region67: #{tpu_custom_call.1} parent=1 // pred_check_branch
      %154 = sbr.rel (0) target = $region69
    $region68: #{tpu_custom_call.1} parent=1 // pred_region
      %156 = dma.done [#allocation13], 16384
    $region69: #{tpu_custom_call.1} parent=1 // pred_fallthru
      _
    // Predicated region
    $region70: #{tpu_custom_call.1} parent=1 // pred_check
      _
    $region71: #{tpu_custom_call.1} parent=1 // pred_check_branch
      %158 = sbr.rel (0) target = $region73
    $region72: #{tpu_custom_call.1} parent=1 // pred_region
      %160 = dma.done [#allocation16], 8192
    $region73: #{tpu_custom_call.1} parent=1 // pred_fallthru
      _
    %v162 = vld [vmem:[#allocation3] sm:$0xff]
    %v163 = vld [vmem:[#allocation3 + $0x8] sm:$0xff]
    %v164 = vld [vmem:[#allocation3 + $0x10] sm:$0xff]
    %v165 = vld [vmem:[#allocation3 + $0x18] sm:$0xff]
    %v166 = vmul.f32 %v162, %v162
    %v167 = vmul.f32 %v163, %v163
    %v168 = vmul.f32 %v164, %v164
    %v169 = vmul.f32 %v165, %v165
    %v170 = vadd.f32 %v166, %v167
    %171 = vadd.xlane.f32.xlu0 %v170
    %v172 = vpop.xlane.xlu0 %171
    %v173 = vadd.f32 %v168, %v169
    %174 = vadd.xlane.f32.xlu0 %v173
    %v175 = vpop.xlane.xlu0 %174
    %v176 = vrcp.pop 256.0
    %v177 = vmul.f32 256.0, %v176
    %v178 = vsub.f32 1.0, %v177
    %v179 = vmul.f32 %v176, %v178
    %v180 = vadd.f32 %v176, %v179
    %vm181 = vweird.f32 %v176
    %v182 = vsel %vm181, %v176, %v180
    %v183 = vmul.f32 %v172, %v182
    %v184 = vmul.f32 %v175, %v182
    %v185 = vadd.f32 %v183, 1e-06
    %v186 = vadd.f32 %v184, 1e-06
    %v187 = vrsqrt.pop %v185
    %v188 = vmul.f32 %v187, %v185
    %v189 = vmul.f32 %v188, %v187
    %v190 = vmul.f32 0.5, %v189
    %v191 = vsub.f32 1.5, %v190
    %v192 = vmul.f32 %v187, %v191
    %vm193 = vweird.f32 %v185
    %vm194 = vweird.f32 %v187
    %vm195 = vmor %vm193, %vm194
    %v196 = vsel %vm195, %v187, %v192
    %v197 = vrsqrt.pop %v186
    %v198 = vmul.f32 %v197, %v186
    %v199 = vmul.f32 %v198, %v197
    %v200 = vmul.f32 0.5, %v199
    %v201 = vsub.f32 1.5, %v200
    %v202 = vmul.f32 %v197, %v201
    %vm203 = vweird.f32 %v186
    %vm204 = vweird.f32 %v197
    %vm205 = vmor %vm203, %vm204
    %v206 = vsel %vm205, %v197, %v202
    %v207 = vmul.f32 %v162, %v196
    %v208 = vmul.f32 %v163, %v196
    %v209 = vmul.f32 %v164, %v206
    %v210 = vmul.f32 %v165, %v206
    %v211 = vld [vmem:[%s4] sm:$0x3]
    %v213 = vperm.slane %v211, 0
    %v214 = vperm.slane %v211, 1
    %v217 = vmul.f32 %v207, %v213
    %v218 = vmul.f32 %v208, %v214
    %v219 = vmul.f32 %v209, %v213
    %v220 = vmul.f32 %v210, %v214
    %v221 = vpack.c.bf16 %v219, %v217
    %v222 = vpack.c.bf16 %v220, %v218
    %v223 = vld [vmem:[#allocation11] sm:$0xff]
    %v224 = vld [vmem:[#allocation11 + $0x8] sm:$0xff]
    %v225 = vld [vmem:[#allocation11 + $0x10] sm:$0xff]
    %v226 = vld [vmem:[#allocation11 + $0x18] sm:$0xff]
    %v227 = vld [vmem:[#allocation11 + $0x20] sm:$0xff]
    %v228 = vld [vmem:[#allocation11 + $0x28] sm:$0xff]
    %v229 = vld [vmem:[#allocation11 + $0x30] sm:$0xff]
    %v230 = vld [vmem:[#allocation11 + $0x38] sm:$0xff]
    %v231 = vld [vmem:[#allocation11 + $0x40] sm:$0xff]
    %v232 = vld [vmem:[#allocation11 + $0x48] sm:$0xff]
    %v233 = vld [vmem:[#allocation11 + $0x50] sm:$0xff]
    %v234 = vld [vmem:[#allocation11 + $0x58] sm:$0xff]
    %v235 = vld [vmem:[#allocation11 + $0x60] sm:$0xff]
    %v236 = vld [vmem:[#allocation11 + $0x68] sm:$0xff]
    %v237 = vld [vmem:[#allocation11 + $0x70] sm:$0xff]
    %v238 = vld [vmem:[#allocation11 + $0x78] sm:$0xff]
    %v239 = vld [vmem:[#allocation11 + $0x80] sm:$0xff]
    %v240 = vld [vmem:[#allocation11 + $0x88] sm:$0xff]
    %v241 = vld [vmem:[#allocation11 + $0x90] sm:$0xff]
    %v242 = vld [vmem:[#allocation11 + $0x98] sm:$0xff]
    %v243 = vld [vmem:[#allocation11 + $0xa0] sm:$0xff]
    %v244 = vld [vmem:[#allocation11 + $0xa8] sm:$0xff]
    %v245 = vld [vmem:[#allocation11 + $0xb0] sm:$0xff]
    %v246 = vld [vmem:[#allocation11 + $0xb8] sm:$0xff]
    %v247 = vld [vmem:[#allocation11 + $0xc0] sm:$0xff]
    %v248 = vld [vmem:[#allocation11 + $0xc8] sm:$0xff]
    %v249 = vld [vmem:[#allocation11 + $0xd0] sm:$0xff]
    %v250 = vld [vmem:[#allocation11 + $0xd8] sm:$0xff]
    %v251 = vld [vmem:[#allocation11 + $0xe0] sm:$0xff]
    %v252 = vld [vmem:[#allocation11 + $0xe8] sm:$0xff]
    %v253 = vld [vmem:[#allocation11 + $0xf0] sm:$0xff]
    %v254 = vld [vmem:[#allocation11 + $0xf8] sm:$0xff]
    %v255 = vld [vmem:[#allocation11 + $0x100] sm:$0xff]
    %v256 = vld [vmem:[#allocation11 + $0x108] sm:$0xff]
    %v257 = vld [vmem:[#allocation11 + $0x110] sm:$0xff]
    %v258 = vld [vmem:[#allocation11 + $0x118] sm:$0xff]
    %v259 = vld [vmem:[#allocation11 + $0x120] sm:$0xff]
    %v260 = vld [vmem:[#allocation11 + $0x128] sm:$0xff]
    %v261 = vld [vmem:[#allocation11 + $0x130] sm:$0xff]
    %v262 = vld [vmem:[#allocation11 + $0x138] sm:$0xff]
    %v263 = vld [vmem:[#allocation11 + $0x140] sm:$0xff]
    %v264 = vld [vmem:[#allocation11 + $0x148] sm:$0xff]
    %v265 = vld [vmem:[#allocation11 + $0x150] sm:$0xff]
    %v266 = vld [vmem:[#allocation11 + $0x158] sm:$0xff]
    %v267 = vld [vmem:[#allocation11 + $0x160] sm:$0xff]
    %v268 = vld [vmem:[#allocation11 + $0x168] sm:$0xff]
    %v269 = vld [vmem:[#allocation11 + $0x170] sm:$0xff]
    %v270 = vld [vmem:[#allocation11 + $0x178] sm:$0xff]
    %v271 = vld [vmem:[#allocation11 + $0x180] sm:$0xff]
    %v272 = vld [vmem:[#allocation11 + $0x188] sm:$0xff]
    %v273 = vld [vmem:[#allocation11 + $0x190] sm:$0xff]
    %v274 = vld [vmem:[#allocation11 + $0x198] sm:$0xff]
    %v275 = vld [vmem:[#allocation11 + $0x1a0] sm:$0xff]
    %v276 = vld [vmem:[#allocation11 + $0x1a8] sm:$0xff]
    %v277 = vld [vmem:[#allocation11 + $0x1b0] sm:$0xff]
    %v278 = vld [vmem:[#allocation11 + $0x1b8] sm:$0xff]
    %v279 = vld [vmem:[#allocation11 + $0x1c0] sm:$0xff]
    %v280 = vld [vmem:[#allocation11 + $0x1c8] sm:$0xff]
    %v281 = vld [vmem:[#allocation11 + $0x1d0] sm:$0xff]
    %v282 = vld [vmem:[#allocation11 + $0x1d8] sm:$0xff]
    %v283 = vld [vmem:[#allocation11 + $0x1e0] sm:$0xff]
    %v284 = vld [vmem:[#allocation11 + $0x1e8] sm:$0xff]
    %v285 = vld [vmem:[#allocation11 + $0x1f0] sm:$0xff]
    %v286 = vld [vmem:[#allocation11 + $0x1f8] sm:$0xff]
    %v287 = vld [vmem:[#allocation11 + $0x200] sm:$0xff]
    %v288 = vld [vmem:[#allocation11 + $0x208] sm:$0xff]
    %v289 = vld [vmem:[#allocation11 + $0x210] sm:$0xff]
    %v290 = vld [vmem:[#allocation11 + $0x218] sm:$0xff]
    %v291 = vld [vmem:[#allocation11 + $0x220] sm:$0xff]
    %v292 = vld [vmem:[#allocation11 + $0x228] sm:$0xff]
    %v293 = vld [vmem:[#allocation11 + $0x230] sm:$0xff]
    %v294 = vld [vmem:[#allocation11 + $0x238] sm:$0xff]
    %v295 = vld [vmem:[#allocation11 + $0x240] sm:$0xff]
    %v296 = vld [vmem:[#allocation11 + $0x248] sm:$0xff]
    %v297 = vld [vmem:[#allocation11 + $0x250] sm:$0xff]
    %v298 = vld [vmem:[#allocation11 + $0x258] sm:$0xff]
    %v299 = vld [vmem:[#allocation11 + $0x260] sm:$0xff]
    %v300 = vld [vmem:[#allocation11 + $0x268] sm:$0xff]
    %v301 = vld [vmem:[#allocation11 + $0x270] sm:$0xff]
    %v302 = vld [vmem:[#allocation11 + $0x278] sm:$0xff]
    %v303 = vld [vmem:[#allocation11 + $0x280] sm:$0xff]
    %v304 = vld [vmem:[#allocation11 + $0x288] sm:$0xff]
    %v305 = vld [vmem:[#allocation11 + $0x290] sm:$0xff]
    %v306 = vld [vmem:[#allocation11 + $0x298] sm:$0xff]
    %v307 = vld [vmem:[#allocation11 + $0x2a0] sm:$0xff]
    %v308 = vld [vmem:[#allocation11 + $0x2a8] sm:$0xff]
    %v309 = vld [vmem:[#allocation11 + $0x2b0] sm:$0xff]
    %v310 = vld [vmem:[#allocation11 + $0x2b8] sm:$0xff]
    %v311 = vld [vmem:[#allocation11 + $0x2c0] sm:$0xff]
    %v312 = vld [vmem:[#allocation11 + $0x2c8] sm:$0xff]
    %v313 = vld [vmem:[#allocation11 + $0x2d0] sm:$0xff]
    %v314 = vld [vmem:[#allocation11 + $0x2d8] sm:$0xff]
    %v315 = vld [vmem:[#allocation11 + $0x2e0] sm:$0xff]
    %v316 = vld [vmem:[#allocation11 + $0x2e8] sm:$0xff]
    %v317 = vld [vmem:[#allocation11 + $0x2f0] sm:$0xff]
    %v318 = vld [vmem:[#allocation11 + $0x2f8] sm:$0xff]
    %v415 = vunpack.c.l.b16 %v223
    %v416 = vunpack.c.h.b16 %v223
    %v417 = vunpack.c.l.b16 %v224
    %v418 = vunpack.c.h.b16 %v224
    %v419 = vunpack.c.l.b16 %v225
    %v420 = vunpack.c.h.b16 %v225
    %v421 = vunpack.c.l.b16 %v226
    %v422 = vunpack.c.h.b16 %v226
    %v423 = vunpack.c.l.b16 %v227
    %v424 = vunpack.c.h.b16 %v227
    %v425 = vunpack.c.l.b16 %v228
    %v426 = vunpack.c.h.b16 %v228
    %v427 = vunpack.c.l.b16 %v229
    %v428 = vunpack.c.h.b16 %v229
    %v429 = vunpack.c.l.b16 %v230
    %v430 = vunpack.c.h.b16 %v230
    %v431 = vunpack.c.l.b16 %v231
    %v432 = vunpack.c.h.b16 %v231
    %v433 = vunpack.c.l.b16 %v232
    %v434 = vunpack.c.h.b16 %v232
    %v435 = vunpack.c.l.b16 %v233
    %v436 = vunpack.c.h.b16 %v233
    %v437 = vunpack.c.l.b16 %v234
    %v438 = vunpack.c.h.b16 %v234
    %v439 = vunpack.c.l.b16 %v235
    %v440 = vunpack.c.h.b16 %v235
    %v441 = vunpack.c.l.b16 %v236
    %v442 = vunpack.c.h.b16 %v236
    %v443 = vunpack.c.l.b16 %v237
    %v444 = vunpack.c.h.b16 %v237
    %v445 = vunpack.c.l.b16 %v238
    %v446 = vunpack.c.h.b16 %v238
    %v447 = vunpack.c.l.b16 %v239
    %v448 = vunpack.c.h.b16 %v239
    %v449 = vunpack.c.l.b16 %v240
    %v450 = vunpack.c.h.b16 %v240
    %v451 = vunpack.c.l.b16 %v241
    %v452 = vunpack.c.h.b16 %v241
    %v453 = vunpack.c.l.b16 %v242
    %v454 = vunpack.c.h.b16 %v242
    %v455 = vunpack.c.l.b16 %v243
    %v456 = vunpack.c.h.b16 %v243
    %v457 = vunpack.c.l.b16 %v244
    %v458 = vunpack.c.h.b16 %v244
    %v459 = vunpack.c.l.b16 %v245
    %v460 = vunpack.c.h.b16 %v245
    %v461 = vunpack.c.l.b16 %v246
    %v462 = vunpack.c.h.b16 %v246
    %v463 = vunpack.c.l.b16 %v247
    %v464 = vunpack.c.h.b16 %v247
    %v465 = vunpack.c.l.b16 %v248
    %v466 = vunpack.c.h.b16 %v248
    %v467 = vunpack.c.l.b16 %v249
    %v468 = vunpack.c.h.b16 %v249
    %v469 = vunpack.c.l.b16 %v250
    %v470 = vunpack.c.h.b16 %v250
    %v471 = vunpack.c.l.b16 %v251
    %v472 = vunpack.c.h.b16 %v251
    %v473 = vunpack.c.l.b16 %v252
    %v474 = vunpack.c.h.b16 %v252
    %v475 = vunpack.c.l.b16 %v253
    %v476 = vunpack.c.h.b16 %v253
    %v477 = vunpack.c.l.b16 %v254
    %v478 = vunpack.c.h.b16 %v254
    %v479 = vunpack.c.l.b16 %v255
    %v480 = vunpack.c.h.b16 %v255
    %v481 = vunpack.c.l.b16 %v256
    %v482 = vunpack.c.h.b16 %v256
    %v483 = vunpack.c.l.b16 %v257
    %v484 = vunpack.c.h.b16 %v257
    %v485 = vunpack.c.l.b16 %v258
    %v486 = vunpack.c.h.b16 %v258
    %v487 = vunpack.c.l.b16 %v259
    %v488 = vunpack.c.h.b16 %v259
    %v489 = vunpack.c.l.b16 %v260
    %v490 = vunpack.c.h.b16 %v260
    %v491 = vunpack.c.l.b16 %v261
    %v492 = vunpack.c.h.b16 %v261
    %v493 = vunpack.c.l.b16 %v262
    %v494 = vunpack.c.h.b16 %v262
    %v495 = vunpack.c.l.b16 %v263
    %v496 = vunpack.c.h.b16 %v263
    %v497 = vunpack.c.l.b16 %v264
    %v498 = vunpack.c.h.b16 %v264
    %v499 = vunpack.c.l.b16 %v265
    %v500 = vunpack.c.h.b16 %v265
    %v501 = vunpack.c.l.b16 %v266
    %v502 = vunpack.c.h.b16 %v266
    %v503 = vunpack.c.l.b16 %v267
    %v504 = vunpack.c.h.b16 %v267
    %v505 = vunpack.c.l.b16 %v268
    %v506 = vunpack.c.h.b16 %v268
    %v507 = vunpack.c.l.b16 %v269
    %v508 = vunpack.c.h.b16 %v269
    %v509 = vunpack.c.l.b16 %v270
    %v510 = vunpack.c.h.b16 %v270
    %v511 = vunpack.c.l.b16 %v271
    %v512 = vunpack.c.h.b16 %v271
    %v513 = vunpack.c.l.b16 %v272
    %v514 = vunpack.c.h.b16 %v272
    %v515 = vunpack.c.l.b16 %v273
    %v516 = vunpack.c.h.b16 %v273
    %v517 = vunpack.c.l.b16 %v274
    %v518 = vunpack.c.h.b16 %v274
    %v519 = vunpack.c.l.b16 %v275
    %v520 = vunpack.c.h.b16 %v275
    %v521 = vunpack.c.l.b16 %v276
    %v522 = vunpack.c.h.b16 %v276
    %v523 = vunpack.c.l.b16 %v277
    %v524 = vunpack.c.h.b16 %v277
    %v525 = vunpack.c.l.b16 %v278
    %v526 = vunpack.c.h.b16 %v278
    %v527 = vunpack.c.l.b16 %v279
    %v528 = vunpack.c.h.b16 %v279
    %v529 = vunpack.c.l.b16 %v280
    %v530 = vunpack.c.h.b16 %v280
    %v531 = vunpack.c.l.b16 %v281
    %v532 = vunpack.c.h.b16 %v281
    %v533 = vunpack.c.l.b16 %v282
    %v534 = vunpack.c.h.b16 %v282
    %v535 = vunpack.c.l.b16 %v283
    %v536 = vunpack.c.h.b16 %v283
    %v537 = vunpack.c.l.b16 %v284
    %v538 = vunpack.c.h.b16 %v284
    %v539 = vunpack.c.l.b16 %v285
    %v540 = vunpack.c.h.b16 %v285
    %v541 = vunpack.c.l.b16 %v286
    %v542 = vunpack.c.h.b16 %v286
    %v543 = vunpack.c.l.b16 %v287
    %v544 = vunpack.c.h.b16 %v287
    %v545 = vunpack.c.l.b16 %v288
    %v546 = vunpack.c.h.b16 %v288
    %v547 = vunpack.c.l.b16 %v289
    %v548 = vunpack.c.h.b16 %v289
    %v549 = vunpack.c.l.b16 %v290
    %v550 = vunpack.c.h.b16 %v290
    %v551 = vunpack.c.l.b16 %v291
    %v552 = vunpack.c.h.b16 %v291
    %v553 = vunpack.c.l.b16 %v292
    %v554 = vunpack.c.h.b16 %v292
    %v555 = vunpack.c.l.b16 %v293
    %v556 = vunpack.c.h.b16 %v293
    %v557 = vunpack.c.l.b16 %v294
    %v558 = vunpack.c.h.b16 %v294
    %v559 = vunpack.c.l.b16 %v295
    %v560 = vunpack.c.h.b16 %v295
    %v561 = vunpack.c.l.b16 %v296
    %v562 = vunpack.c.h.b16 %v296
    %v563 = vunpack.c.l.b16 %v297
    %v564 = vunpack.c.h.b16 %v297
    %v565 = vunpack.c.l.b16 %v298
    %v566 = vunpack.c.h.b16 %v298
    %v567 = vunpack.c.l.b16 %v299
    %v568 = vunpack.c.h.b16 %v299
    %v569 = vunpack.c.l.b16 %v300
    %v570 = vunpack.c.h.b16 %v300
    %v571 = vunpack.c.l.b16 %v301
    %v572 = vunpack.c.h.b16 %v301
    %v573 = vunpack.c.l.b16 %v302
    %v574 = vunpack.c.h.b16 %v302
    %v575 = vunpack.c.l.b16 %v303
    %v576 = vunpack.c.h.b16 %v303
    %v577 = vunpack.c.l.b16 %v304
    %v578 = vunpack.c.h.b16 %v304
    %v579 = vunpack.c.l.b16 %v305
    %v580 = vunpack.c.h.b16 %v305
    %v581 = vunpack.c.l.b16 %v306
    %v582 = vunpack.c.h.b16 %v306
    %v583 = vunpack.c.l.b16 %v307
    %v584 = vunpack.c.h.b16 %v307
    %v585 = vunpack.c.l.b16 %v308
    %v586 = vunpack.c.h.b16 %v308
    %v587 = vunpack.c.l.b16 %v309
    %v588 = vunpack.c.h.b16 %v309
    %v589 = vunpack.c.l.b16 %v310
    %v590 = vunpack.c.h.b16 %v310
    %v591 = vunpack.c.l.b16 %v311
    %v592 = vunpack.c.h.b16 %v311
    %v593 = vunpack.c.l.b16 %v312
    %v594 = vunpack.c.h.b16 %v312
    %v595 = vunpack.c.l.b16 %v313
    %v596 = vunpack.c.h.b16 %v313
    %v597 = vunpack.c.l.b16 %v314
    %v598 = vunpack.c.h.b16 %v314
    %v599 = vunpack.c.l.b16 %v315
    %v600 = vunpack.c.h.b16 %v315
    %v601 = vunpack.c.l.b16 %v316
    %v602 = vunpack.c.h.b16 %v316
    %v603 = vunpack.c.l.b16 %v317
    %v604 = vunpack.c.h.b16 %v317
    %v605 = vunpack.c.l.b16 %v318
    %v606 = vunpack.c.h.b16 %v318
    %v607 = vpack.c.b16 %v421, %v415
    %v608 = vpack.c.b16 %v422, %v416
    %v609 = vpack.c.b16 %v423, %v417
    %v610 = vpack.c.b16 %v424, %v418
    %v611 = vpack.c.b16 %v425, %v419
    %v612 = vpack.c.b16 %v426, %v420
    %v613 = vpack.c.b16 %v433, %v427
    %v614 = vpack.c.b16 %v434, %v428
    %v615 = vpack.c.b16 %v435, %v429
    %v616 = vpack.c.b16 %v436, %v430
    %v617 = vpack.c.b16 %v437, %v431
    %v618 = vpack.c.b16 %v438, %v432
    %v619 = vpack.c.b16 %v445, %v439
    %v620 = vpack.c.b16 %v446, %v440
    %v621 = vpack.c.b16 %v447, %v441
    %v622 = vpack.c.b16 %v448, %v442
    %v623 = vpack.c.b16 %v449, %v443
    %v624 = vpack.c.b16 %v450, %v444
    %v625 = vpack.c.b16 %v457, %v451
    %v626 = vpack.c.b16 %v458, %v452
    %v627 = vpack.c.b16 %v459, %v453
    %v628 = vpack.c.b16 %v460, %v454
    %v629 = vpack.c.b16 %v461, %v455
    %v630 = vpack.c.b16 %v462, %v456
    %v631 = vpack.c.b16 %v469, %v463
    %v632 = vpack.c.b16 %v470, %v464
    %v633 = vpack.c.b16 %v471, %v465
    %v634 = vpack.c.b16 %v472, %v466
    %v635 = vpack.c.b16 %v473, %v467
    %v636 = vpack.c.b16 %v474, %v468
    %v637 = vpack.c.b16 %v481, %v475
    %v638 = vpack.c.b16 %v482, %v476
    %v639 = vpack.c.b16 %v483, %v477
    %v640 = vpack.c.b16 %v484, %v478
    %v641 = vpack.c.b16 %v485, %v479
    %v642 = vpack.c.b16 %v486, %v480
    %v643 = vpack.c.b16 %v493, %v487
    %v644 = vpack.c.b16 %v494, %v488
    %v645 = vpack.c.b16 %v495, %v489
    %v646 = vpack.c.b16 %v496, %v490
    %v647 = vpack.c.b16 %v497, %v491
    %v648 = vpack.c.b16 %v498, %v492
    %v649 = vpack.c.b16 %v505, %v499
    %v650 = vpack.c.b16 %v506, %v500
    %v651 = vpack.c.b16 %v507, %v501
    %v652 = vpack.c.b16 %v508, %v502
    %v653 = vpack.c.b16 %v509, %v503
    %v654 = vpack.c.b16 %v510, %v504
    %v655 = vpack.c.b16 %v517, %v511
    %v656 = vpack.c.b16 %v518, %v512
    %v657 = vpack.c.b16 %v519, %v513
    %v658 = vpack.c.b16 %v520, %v514
    %v659 = vpack.c.b16 %v521, %v515
    %v660 = vpack.c.b16 %v522, %v516
    %v661 = vpack.c.b16 %v529, %v523
    %v662 = vpack.c.b16 %v530, %v524
    %v663 = vpack.c.b16 %v531, %v525
    %v664 = vpack.c.b16 %v532, %v526
    %v665 = vpack.c.b16 %v533, %v527
    %v666 = vpack.c.b16 %v534, %v528
    %v667 = vpack.c.b16 %v541, %v535
    %v668 = vpack.c.b16 %v542, %v536
    %v669 = vpack.c.b16 %v543, %v537
    %v670 = vpack.c.b16 %v544, %v538
    %v671 = vpack.c.b16 %v545, %v539
    %v672 = vpack.c.b16 %v546, %v540
    %v673 = vpack.c.b16 %v553, %v547
    %v674 = vpack.c.b16 %v554, %v548
    %v675 = vpack.c.b16 %v555, %v549
    %v676 = vpack.c.b16 %v556, %v550
    %v677 = vpack.c.b16 %v557, %v551
    %v678 = vpack.c.b16 %v558, %v552
    %v679 = vpack.c.b16 %v565, %v559
    %v680 = vpack.c.b16 %v566, %v560
    %v681 = vpack.c.b16 %v567, %v561
    %v682 = vpack.c.b16 %v568, %v562
    %v683 = vpack.c.b16 %v569, %v563
    %v684 = vpack.c.b16 %v570, %v564
    %v685 = vpack.c.b16 %v577, %v571
    %v686 = vpack.c.b16 %v578, %v572
    %v687 = vpack.c.b16 %v579, %v573
    %v688 = vpack.c.b16 %v580, %v574
    %v689 = vpack.c.b16 %v581, %v575
    %v690 = vpack.c.b16 %v582, %v576
    %v691 = vpack.c.b16 %v589, %v583
    %v692 = vpack.c.b16 %v590, %v584
    %v693 = vpack.c.b16 %v591, %v585
    %v694 = vpack.c.b16 %v592, %v586
    %v695 = vpack.c.b16 %v593, %v587
    %v696 = vpack.c.b16 %v594, %v588
    %v697 = vpack.c.b16 %v601, %v595
    %v698 = vpack.c.b16 %v602, %v596
    %v699 = vpack.c.b16 %v603, %v597
    %v700 = vpack.c.b16 %v604, %v598
    %v701 = vpack.c.b16 %v605, %v599
    %v702 = vpack.c.b16 %v606, %v600
    %799 = vmatpush.bf16.msra.mxu0 %v649
    %800 = vmatpush.bf16.msra.mxu0 %v643
    %801 = vmatpush.bf16.msra.mxu0 %v637
    %802 = vmatpush.bf16.msra.mxu0 %v631
    %803 = vmatpush.bf16.msra.mxu0 %v625
    %804 = vmatpush.bf16.msra.mxu0 %v619
    %805 = vmatpush.bf16.msra.mxu0 %v613
    %806 = vmatpush.bf16.msra.mxu0 %v607
    %807 = vmatmul.bf16.gmra.mxu0 %v221
    %v808 = vpop.f32.mrf.mxu0
    %v809 = vadd.f32 0.0, %v808
    %v810 = vpop.f32.mrf.mxu0
    %v811 = vadd.f32 0.0, %v810
    %812 = vdwg.mxu0
    %813 = vmatpush.bf16.msra.mxu0 %v697
    %814 = vmatpush.bf16.msra.mxu0 %v691
    %815 = vmatpush.bf16.msra.mxu0 %v685
    %816 = vmatpush.bf16.msra.mxu0 %v679
    %817 = vmatpush.bf16.msra.mxu0 %v673
    %818 = vmatpush.bf16.msra.mxu0 %v667
    %819 = vmatpush.bf16.msra.mxu0 %v661
    %820 = vmatpush.bf16.msra.mxu0 %v655
    %821 = vmatmul.bf16.gmra.mxu0 %v222
    %v822 = vpop.f32.mrf.mxu0
    %v823 = vadd.f32 %v809, %v822
    %v824 = vpop.f32.mrf.mxu0
    %v825 = vadd.f32 %v811, %v824
    %826 = vdwg.mxu0
    %827 = vmatpush.bf16.msra.mxu0 %v650
    %828 = vmatpush.bf16.msra.mxu0 %v644
    %829 = vmatpush.bf16.msra.mxu0 %v638
    %830 = vmatpush.bf16.msra.mxu0 %v632
    %831 = vmatpush.bf16.msra.mxu0 %v626
    %832 = vmatpush.bf16.msra.mxu0 %v620
    %833 = vmatpush.bf16.msra.mxu0 %v614
    %834 = vmatpush.bf16.msra.mxu0 %v608
    %835 = vmatmul.bf16.gmra.mxu0 %v221
    %v836 = vpop.f32.mrf.mxu0
    %v837 = vadd.f32 0.0, %v836
    %v838 = vpop.f32.mrf.mxu0
    %v839 = vadd.f32 0.0, %v838
    %840 = vdwg.mxu0
    %841 = vmatpush.bf16.msra.mxu0 %v698
    %842 = vmatpush.bf16.msra.mxu0 %v692
    %843 = vmatpush.bf16.msra.mxu0 %v686
    %844 = vmatpush.bf16.msra.mxu0 %v680
    %845 = vmatpush.bf16.msra.mxu0 %v674
    %846 = vmatpush.bf16.msra.mxu0 %v668
    %847 = vmatpush.bf16.msra.mxu0 %v662
    %848 = vmatpush.bf16.msra.mxu0 %v656
    %849 = vmatmul.bf16.gmra.mxu0 %v222
    %v850 = vpop.f32.mrf.mxu0
    %v851 = vadd.f32 %v837, %v850
    %v852 = vpop.f32.mrf.mxu0
    %v853 = vadd.f32 %v839, %v852
    %854 = vdwg.mxu0
    %855 = vmatpush.bf16.msra.mxu0 %v651
    %856 = vmatpush.bf16.msra.mxu0 %v645
    %857 = vmatpush.bf16.msra.mxu0 %v639
    %858 = vmatpush.bf16.msra.mxu0 %v633
    %859 = vmatpush.bf16.msra.mxu0 %v627
    %860 = vmatpush.bf16.msra.mxu0 %v621
    %861 = vmatpush.bf16.msra.mxu0 %v615
    %862 = vmatpush.bf16.msra.mxu0 %v609
    %863 = vmatmul.bf16.gmra.mxu0 %v221
    %v864 = vpop.f32.mrf.mxu0
    %v865 = vadd.f32 0.0, %v864
    %v866 = vpop.f32.mrf.mxu0
    %v867 = vadd.f32 0.0, %v866
    %868 = vdwg.mxu0
    %869 = vmatpush.bf16.msra.mxu0 %v699
    %870 = vmatpush.bf16.msra.mxu0 %v693
    %871 = vmatpush.bf16.msra.mxu0 %v687
    %872 = vmatpush.bf16.msra.mxu0 %v681
    %873 = vmatpush.bf16.msra.mxu0 %v675
    %874 = vmatpush.bf16.msra.mxu0 %v669
    %875 = vmatpush.bf16.msra.mxu0 %v663
    %876 = vmatpush.bf16.msra.mxu0 %v657
    %877 = vmatmul.bf16.gmra.mxu0 %v222
    %v878 = vpop.f32.mrf.mxu0
    %v879 = vadd.f32 %v865, %v878
    %v880 = vpop.f32.mrf.mxu0
    %v881 = vadd.f32 %v867, %v880
    %882 = vdwg.mxu0
    %883 = vmatpush.bf16.msra.mxu0 %v652
    %884 = vmatpush.bf16.msra.mxu0 %v646
    %885 = vmatpush.bf16.msra.mxu0 %v640
    %886 = vmatpush.bf16.msra.mxu0 %v634
    %887 = vmatpush.bf16.msra.mxu0 %v628
    %888 = vmatpush.bf16.msra.mxu0 %v622
    %889 = vmatpush.bf16.msra.mxu0 %v616
    %890 = vmatpush.bf16.msra.mxu0 %v610
    %891 = vmatmul.bf16.gmra.mxu0 %v221
    %v892 = vpop.f32.mrf.mxu0
    %v893 = vadd.f32 0.0, %v892
    %v894 = vpop.f32.mrf.mxu0
    %v895 = vadd.f32 0.0, %v894
    %896 = vdwg.mxu0
    %897 = vmatpush.bf16.msra.mxu0 %v700
    %898 = vmatpush.bf16.msra.mxu0 %v694
    %899 = vmatpush.bf16.msra.mxu0 %v688
    %900 = vmatpush.bf16.msra.mxu0 %v682
    %901 = vmatpush.bf16.msra.mxu0 %v676
    %902 = vmatpush.bf16.msra.mxu0 %v670
    %903 = vmatpush.bf16.msra.mxu0 %v664
    %904 = vmatpush.bf16.msra.mxu0 %v658
    %905 = vmatmul.bf16.gmra.mxu0 %v222
    %v906 = vpop.f32.mrf.mxu0
    %v907 = vadd.f32 %v893, %v906
    %v908 = vpop.f32.mrf.mxu0
    %v909 = vadd.f32 %v895, %v908
    %910 = vdwg.mxu0
    %911 = vmatpush.bf16.msra.mxu0 %v653
    %912 = vmatpush.bf16.msra.mxu0 %v647
    %913 = vmatpush.bf16.msra.mxu0 %v641
    %914 = vmatpush.bf16.msra.mxu0 %v635
    %915 = vmatpush.bf16.msra.mxu0 %v629
    %916 = vmatpush.bf16.msra.mxu0 %v623
    %917 = vmatpush.bf16.msra.mxu0 %v617
    %918 = vmatpush.bf16.msra.mxu0 %v611
    %919 = vmatmul.bf16.gmra.mxu0 %v221
    %v920 = vpop.f32.mrf.mxu0
    %v921 = vadd.f32 0.0, %v920
    %v922 = vpop.f32.mrf.mxu0
    %v923 = vadd.f32 0.0, %v922
    %924 = vdwg.mxu0
    %925 = vmatpush.bf16.msra.mxu0 %v701
    %926 = vmatpush.bf16.msra.mxu0 %v695
    %927 = vmatpush.bf16.msra.mxu0 %v689
    %928 = vmatpush.bf16.msra.mxu0 %v683
    %929 = vmatpush.bf16.msra.mxu0 %v677
    %930 = vmatpush.bf16.msra.mxu0 %v671
    %931 = vmatpush.bf16.msra.mxu0 %v665
    %932 = vmatpush.bf16.msra.mxu0 %v659
    %933 = vmatmul.bf16.gmra.mxu0 %v222
    %v934 = vpop.f32.mrf.mxu0
    %v935 = vadd.f32 %v921, %v934
    %v936 = vpop.f32.mrf.mxu0
    %v937 = vadd.f32 %v923, %v936
    %938 = vdwg.mxu0
    %939 = vmatpush.bf16.msra.mxu0 %v654
    %940 = vmatpush.bf16.msra.mxu0 %v648
    %941 = vmatpush.bf16.msra.mxu0 %v642
    %942 = vmatpush.bf16.msra.mxu0 %v636
    %943 = vmatpush.bf16.msra.mxu0 %v630
    %944 = vmatpush.bf16.msra.mxu0 %v624
    %945 = vmatpush.bf16.msra.mxu0 %v618
    %946 = vmatpush.bf16.msra.mxu0 %v612
    %947 = vmatmul.bf16.gmra.mxu0 %v221
    %v948 = vpop.f32.mrf.mxu0
    %v949 = vadd.f32 0.0, %v948
    %v950 = vpop.f32.mrf.mxu0
    %v951 = vadd.f32 0.0, %v950
    %952 = vdwg.mxu0
    %953 = vmatpush.bf16.msra.mxu0 %v702
    %954 = vmatpush.bf16.msra.mxu0 %v696
    %955 = vmatpush.bf16.msra.mxu0 %v690
    %956 = vmatpush.bf16.msra.mxu0 %v684
    %957 = vmatpush.bf16.msra.mxu0 %v678
    %958 = vmatpush.bf16.msra.mxu0 %v672
    %959 = vmatpush.bf16.msra.mxu0 %v666
    %960 = vmatpush.bf16.msra.mxu0 %v660
    %961 = vmatmul.bf16.gmra.mxu0 %v222
    %v962 = vpop.f32.mrf.mxu0
    %v963 = vadd.f32 %v949, %v962
    %v964 = vpop.f32.mrf.mxu0
    %v965 = vadd.f32 %v951, %v964
    %966 = vdwg.mxu0
    %v967 = vld [vmem:[#allocation6] sm:$0xff]
    %v968 = vld [vmem:[#allocation6 + $0x8] sm:$0xff]
    %v969 = vld [vmem:[#allocation8] sm:$0xff]
    %v970 = vld [vmem:[#allocation8 + $0x8] sm:$0xff]
    %v971 = vld [vmem:[#allocation9] sm:$0xff]
    %v972 = vld [vmem:[#allocation9 + $0x8] sm:$0xff]
    %v973 = vpack.c.bf16 %v963, %v935
    %v974 = vpack.c.bf16 %v965, %v937
    %v975 = vmul.f32 %v823, %v967
    %v976 = vmul.f32 %v825, %v968
    %977 = vrot.lane.b32.xlu0 %v823, 64
    %v978 = vpop.permute.xlu0 %977
    %979 = vrot.lane.b32.xlu0 %v825, 64
    %v980 = vpop.permute.xlu0 %979
    %v981 = vmul.f32 %v978, %v969
    %v982 = vmul.f32 %v980, %v970
    %v983 = vadd.f32 %v975, %v981
    %v984 = vadd.f32 %v976, %v982
    %v985 = vmul.f32 %v879, %v967
    %v986 = vmul.f32 %v881, %v968
    %987 = vrot.lane.b32.xlu0 %v879, 64
    %v988 = vpop.permute.xlu0 %987
    %989 = vrot.lane.b32.xlu0 %v881, 64
    %v990 = vpop.permute.xlu0 %989
    %v991 = vmul.f32 %v988, %v969
    %v992 = vmul.f32 %v990, %v970
    %v993 = vadd.f32 %v985, %v991
    %v994 = vadd.f32 %v986, %v992
    %v995 = vmul.f32 %v983, 0.088388346
    %v996 = vmul.f32 %v984, 0.088388346
    %v997 = vpack.c.bf16 %v995, %v995
    %v998 = vpack.c.bf16 %v996, %v996
    %v999 = vpack.c.bf16 %v993, %v993
    %v1000 = vpack.c.bf16 %v994, %v994
    %1001 = vmatpush.bf16.xpose.msra.mxu0 0
    %1002 = vmatpush.bf16.xpose.msra.mxu0 0
    %1003 = vmatpush.bf16.xpose.msra.mxu0 0
    %1004 = vmatpush.bf16.xpose.msra.mxu0 0
    %1005 = vmatpush.bf16.xpose.msra.mxu0 0
    %1006 = vmatpush.bf16.xpose.msra.mxu0 0
    %1007 = vmatpush.bf16.xpose.msra.mxu0 0
    %1008 = vmatpush.bf16.xpose.msra.mxu0 %v999
    %1009 = vmatmul.bf16.gmra.mxu0 %v997
    %v1010 = vpop.f32.mrf.mxu0
    %v1011 = vadd.f32 %v971, %v1010
    %v1012 = vpop.f32.mrf.mxu0
    %1013 = vdwg.mxu0
    %vm1014 = vcmask 64512
    %v1015 = vsel %vm1014, %v1011, -inf
    %1016 = vmax.xlane.f32.xlu0 %v1015
    %v1017 = vpop.xlane.xlu0 %1016
    %v1018 = vsub.f32 %v1011, %v1017
    %v1019 = vmul.f32 %v1018, 1.442695
    %v1020 = vpow.pop %v1019
    %v1021 = vsel %vm1014, %v1020, 0.0
    %1022 = vadd.xlane.f32.xlu0 %v1021
    %v1023 = vpop.xlane.xlu0 %1022
    %v1024 = vrcp.pop %v1023
    %v1025 = vmul.f32 %v1020, %v1024
    %v1026 = vpack.c.bf16 %v1025, %v1025
    %v1028 = vsel %vm1014, %v1026, 0
    %vm1030 = vcmask 1043456
    %v1032 = vsel %vm1030, %v973, 0
    %1034 = vmatpush.bf16.msra.mxu0 0
    %1035 = vmatpush.bf16.msra.mxu0 0
    %1036 = vmatpush.bf16.msra.mxu0 0
    %1037 = vmatpush.bf16.msra.mxu0 0
    %1038 = vmatpush.bf16.msra.mxu0 0
    %1039 = vmatpush.bf16.msra.mxu0 0
    %1040 = vmatpush.bf16.msra.mxu0 0
    %1041 = vmatpush.bf16.msra.mxu0 %v1032
    %1042 = vmatmul.bf16.gmra.mxu0 %v1028
    %v1043 = vpop.f32.mrf.mxu0
    %v1044 = vadd.f32 0.0, %v1043
    %v1045 = vpop.f32.mrf.mxu0
    %1046 = vdwg.mxu0
    %1047 = vst [vmem:[#allocation2] sm:$0xff] %v1044
    %1048 = vmatpush.bf16.xpose.msra.mxu0 0
    %1049 = vmatpush.bf16.xpose.msra.mxu0 0
    %1050 = vmatpush.bf16.xpose.msra.mxu0 0
    %1051 = vmatpush.bf16.xpose.msra.mxu0 0
    %1052 = vmatpush.bf16.xpose.msra.mxu0 0
    %1053 = vmatpush.bf16.xpose.msra.mxu0 0
    %1054 = vmatpush.bf16.xpose.msra.mxu0 0
    %1055 = vmatpush.bf16.xpose.msra.mxu0 %v1000
    %1056 = vmatmul.bf16.gmra.mxu0 %v998
    %v1057 = vpop.f32.mrf.mxu0
    %v1058 = vadd.f32 %v972, %v1057
    %v1059 = vpop.f32.mrf.mxu0
    %1060 = vdwg.mxu0
    %v1061 = vsel %vm1014, %v1058, -inf
    %1062 = vmax.xlane.f32.xlu0 %v1061
    %v1063 = vpop.xlane.xlu0 %1062
    %v1064 = vsub.f32 %v1058, %v1063
    %v1065 = vmul.f32 %v1064, 1.442695
    %v1066 = vpow.pop %v1065
    %v1067 = vsel %vm1014, %v1066, 0.0
    %1068 = vadd.xlane.f32.xlu0 %v1067
    %v1069 = vpop.xlane.xlu0 %1068
    %v1070 = vrcp.pop %v1069
    %v1071 = vmul.f32 %v1066, %v1070
    %v1072 = vpack.c.bf16 %v1071, %v1071
    %v1074 = vsel %vm1014, %v1072, 0
    %v1077 = vsel %vm1030, %v974, 0
    %1079 = vmatpush.bf16.msra.mxu0 0
    %1080 = vmatpush.bf16.msra.mxu0 0
    %1081 = vmatpush.bf16.msra.mxu0 0
    %1082 = vmatpush.bf16.msra.mxu0 0
    %1083 = vmatpush.bf16.msra.mxu0 0
    %1084 = vmatpush.bf16.msra.mxu0 0
    %1085 = vmatpush.bf16.msra.mxu0 0
    %1086 = vmatpush.bf16.msra.mxu0 %v1077
    %1087 = vmatmul.bf16.gmra.mxu0 %v1074
    %v1088 = vpop.f32.mrf.mxu0
    %v1089 = vadd.f32 0.0, %v1088
    %v1090 = vpop.f32.mrf.mxu0
    %1091 = vdwg.mxu0
    %1092 = vst [vmem:[#allocation2 + $0x10] sm:$0xff] %v1089
    %v1093 = vmul.f32 %v851, %v967
    %v1094 = vmul.f32 %v853, %v968
    %1095 = vrot.lane.b32.xlu0 %v851, 64
    %v1096 = vpop.permute.xlu0 %1095
    %1097 = vrot.lane.b32.xlu0 %v853, 64
    %v1098 = vpop.permute.xlu0 %1097
    %v1099 = vmul.f32 %v1096, %v969
    %v1100 = vmul.f32 %v1098, %v970
    %v1101 = vadd.f32 %v1093, %v1099
    %v1102 = vadd.f32 %v1094, %v1100
    %v1103 = vmul.f32 %v907, %v967
    %v1104 = vmul.f32 %v909, %v968
    %1105 = vrot.lane.b32.xlu0 %v907, 64
    %v1106 = vpop.permute.xlu0 %1105
    %1107 = vrot.lane.b32.xlu0 %v909, 64
    %v1108 = vpop.permute.xlu0 %1107
    %v1109 = vmul.f32 %v1106, %v969
    %v1110 = vmul.f32 %v1108, %v970
    %v1111 = vadd.f32 %v1103, %v1109
    %v1112 = vadd.f32 %v1104, %v1110
    %v1113 = vmul.f32 %v1101, 0.088388346
    %v1114 = vmul.f32 %v1102, 0.088388346
    %v1115 = vpack.c.bf16 %v1113, %v1113
    %v1116 = vpack.c.bf16 %v1114, %v1114
    %v1117 = vpack.c.bf16 %v1111, %v1111
    %v1118 = vpack.c.bf16 %v1112, %v1112
    %1119 = vmatpush.bf16.xpose.msra.mxu0 0
    %1120 = vmatpush.bf16.xpose.msra.mxu0 0
    %1121 = vmatpush.bf16.xpose.msra.mxu0 0
    %1122 = vmatpush.bf16.xpose.msra.mxu0 0
    %1123 = vmatpush.bf16.xpose.msra.mxu0 0
    %1124 = vmatpush.bf16.xpose.msra.mxu0 0
    %1125 = vmatpush.bf16.xpose.msra.mxu0 0
    %1126 = vmatpush.bf16.xpose.msra.mxu0 %v1117
    %1127 = vmatmul.bf16.gmra.mxu0 %v1115
    %v1128 = vpop.f32.mrf.mxu0
    %v1129 = vadd.f32 %v971, %v1128
    %v1130 = vpop.f32.mrf.mxu0
    %1131 = vdwg.mxu0
    %v1132 = vsel %vm1014, %v1129, -inf
    %1133 = vmax.xlane.f32.xlu0 %v1132
    %v1134 = vpop.xlane.xlu0 %1133
    %v1135 = vsub.f32 %v1129, %v1134
    %v1136 = vmul.f32 %v1135, 1.442695
    %v1137 = vpow.pop %v1136
    %v1138 = vsel %vm1014, %v1137, 0.0
    %1139 = vadd.xlane.f32.xlu0 %v1138
    %v1140 = vpop.xlane.xlu0 %1139
    %v1141 = vrcp.pop %v1140
    %v1142 = vmul.f32 %v1137, %v1141
    %v1143 = vpack.c.bf16 %v1142, %v1142
    %v1145 = vunpack.c.h.b16 %v973
    %v1146 = vpack.c.b16 %v1145, %v1145
    %v1148 = vsel %vm1014, %v1143, 0
    %v1151 = vsel %vm1030, %v1146, 0
    %1153 = vmatpush.bf16.msra.mxu0 0
    %1154 = vmatpush.bf16.msra.mxu0 0
    %1155 = vmatpush.bf16.msra.mxu0 0
    %1156 = vmatpush.bf16.msra.mxu0 0
    %1157 = vmatpush.bf16.msra.mxu0 0
    %1158 = vmatpush.bf16.msra.mxu0 0
    %1159 = vmatpush.bf16.msra.mxu0 0
    %1160 = vmatpush.bf16.msra.mxu0 %v1151
    %1161 = vmatmul.bf16.gmra.mxu0 %v1148
    %v1162 = vpop.f32.mrf.mxu0
    %v1163 = vadd.f32 0.0, %v1162
    %v1164 = vpop.f32.mrf.mxu0
    %1165 = vdwg.mxu0
    %1166 = vst [vmem:[#allocation2 + $0x8] sm:$0xff] %v1163
    %1167 = vmatpush.bf16.xpose.msra.mxu0 0
    %1168 = vmatpush.bf16.xpose.msra.mxu0 0
    %1169 = vmatpush.bf16.xpose.msra.mxu0 0
    %1170 = vmatpush.bf16.xpose.msra.mxu0 0
    %1171 = vmatpush.bf16.xpose.msra.mxu0 0
    %1172 = vmatpush.bf16.xpose.msra.mxu0 0
    %1173 = vmatpush.bf16.xpose.msra.mxu0 0
    %1174 = vmatpush.bf16.xpose.msra.mxu0 %v1118
    %1175 = vmatmul.bf16.gmra.mxu0 %v1116
    %v1176 = vpop.f32.mrf.mxu0
    %v1177 = vadd.f32 %v972, %v1176
    %v1178 = vpop.f32.mrf.mxu0
    %1179 = vdwg.mxu0
    %v1180 = vsel %vm1014, %v1177, -inf
    %1181 = vmax.xlane.f32.xlu0 %v1180
    %v1182 = vpop.xlane.xlu0 %1181
    %v1183 = vsub.f32 %v1177, %v1182
    %v1184 = vmul.f32 %v1183, 1.442695
    %v1185 = vpow.pop %v1184
    %v1186 = vsel %vm1014, %v1185, 0.0
    %1187 = vadd.xlane.f32.xlu0 %v1186
    %v1188 = vpop.xlane.xlu0 %1187
    %v1189 = vrcp.pop %v1188
    %v1190 = vmul.f32 %v1185, %v1189
    %v1191 = vpack.c.bf16 %v1190, %v1190
    %v1193 = vunpack.c.h.b16 %v974
    %v1194 = vpack.c.b16 %v1193, %v1193
    %v1196 = vsel %vm1014, %v1191, 0
    %v1199 = vsel %vm1030, %v1194, 0
    %1201 = vmatpush.bf16.msra.mxu0 0
    %1202 = vmatpush.bf16.msra.mxu0 0
    %1203 = vmatpush.bf16.msra.mxu0 0
    %1204 = vmatpush.bf16.msra.mxu0 0
    %1205 = vmatpush.bf16.msra.mxu0 0
    %1206 = vmatpush.bf16.msra.mxu0 0
    %1207 = vmatpush.bf16.msra.mxu0 0
    %1208 = vmatpush.bf16.msra.mxu0 %v1199
    %1209 = vmatmul.bf16.gmra.mxu0 %v1196
    %v1210 = vpop.f32.mrf.mxu0
    %v1211 = vadd.f32 0.0, %v1210
    %v1212 = vpop.f32.mrf.mxu0
    %1213 = vdwg.mxu0
    %1214 = vst [vmem:[#allocation2 + $0x18] sm:$0xff] %v1211
    %v1215 = vld [vmem:[#allocation2] sm:$0xff]
    %v1216 = vld [vmem:[#allocation2 + $0x8] sm:$0xff]
    %v1217 = vld [vmem:[#allocation2 + $0x10] sm:$0xff]
    %v1218 = vld [vmem:[#allocation2 + $0x18] sm:$0xff]
    %v1219 = vpack.c.bf16 %v1217, %v1215
    %v1220 = vpack.c.bf16 %v1218, %v1216
    %v1221 = vld [vmem:[#allocation12] sm:$0xff]
    %v1222 = vld [vmem:[#allocation12 + $0x8] sm:$0xff]
    %v1223 = vld [vmem:[#allocation12 + $0x10] sm:$0xff]
    %v1224 = vld [vmem:[#allocation12 + $0x18] sm:$0xff]
    %v1225 = vld [vmem:[#allocation12 + $0x20] sm:$0xff]
    %v1226 = vld [vmem:[#allocation12 + $0x28] sm:$0xff]
    %v1227 = vld [vmem:[#allocation12 + $0x30] sm:$0xff]
    %v1228 = vld [vmem:[#allocation12 + $0x38] sm:$0xff]
    %v1229 = vld [vmem:[#allocation12 + $0x40] sm:$0xff]
    %v1230 = vld [vmem:[#allocation12 + $0x48] sm:$0xff]
    %v1231 = vld [vmem:[#allocation12 + $0x50] sm:$0xff]
    %v1232 = vld [vmem:[#allocation12 + $0x58] sm:$0xff]
    %v1233 = vld [vmem:[#allocation12 + $0x60] sm:$0xff]
    %v1234 = vld [vmem:[#allocation12 + $0x68] sm:$0xff]
    %v1235 = vld [vmem:[#allocation12 + $0x70] sm:$0xff]
    %v1236 = vld [vmem:[#allocation12 + $0x78] sm:$0xff]
    %v1237 = vld [vmem:[#allocation12 + $0x80] sm:$0xff]
    %v1238 = vld [vmem:[#allocation12 + $0x88] sm:$0xff]
    %v1239 = vld [vmem:[#allocation12 + $0x90] sm:$0xff]
    %v1240 = vld [vmem:[#allocation12 + $0x98] sm:$0xff]
    %v1241 = vld [vmem:[#allocation12 + $0xa0] sm:$0xff]
    %v1242 = vld [vmem:[#allocation12 + $0xa8] sm:$0xff]
    %v1243 = vld [vmem:[#allocation12 + $0xb0] sm:$0xff]
    %v1244 = vld [vmem:[#allocation12 + $0xb8] sm:$0xff]
    %v1245 = vld [vmem:[#allocation12 + $0xc0] sm:$0xff]
    %v1246 = vld [vmem:[#allocation12 + $0xc8] sm:$0xff]
    %v1247 = vld [vmem:[#allocation12 + $0xd0] sm:$0xff]
    %v1248 = vld [vmem:[#allocation12 + $0xd8] sm:$0xff]
    %v1249 = vld [vmem:[#allocation12 + $0xe0] sm:$0xff]
    %v1250 = vld [vmem:[#allocation12 + $0xe8] sm:$0xff]
    %v1251 = vld [vmem:[#allocation12 + $0xf0] sm:$0xff]
    %v1252 = vld [vmem:[#allocation12 + $0xf8] sm:$0xff]
    %v1285 = vunpack.c.l.b16 %v1221
    %v1286 = vunpack.c.h.b16 %v1221
    %v1287 = vunpack.c.l.b16 %v1222
    %v1288 = vunpack.c.h.b16 %v1222
    %v1289 = vunpack.c.l.b16 %v1223
    %v1290 = vunpack.c.h.b16 %v1223
    %v1291 = vunpack.c.l.b16 %v1224
    %v1292 = vunpack.c.h.b16 %v1224
    %v1293 = vunpack.c.l.b16 %v1225
    %v1294 = vunpack.c.h.b16 %v1225
    %v1295 = vunpack.c.l.b16 %v1226
    %v1296 = vunpack.c.h.b16 %v1226
    %v1297 = vunpack.c.l.b16 %v1227
    %v1298 = vunpack.c.h.b16 %v1227
    %v1299 = vunpack.c.l.b16 %v1228
    %v1300 = vunpack.c.h.b16 %v1228
    %v1301 = vunpack.c.l.b16 %v1229
    %v1302 = vunpack.c.h.b16 %v1229
    %v1303 = vunpack.c.l.b16 %v1230
    %v1304 = vunpack.c.h.b16 %v1230
    %v1305 = vunpack.c.l.b16 %v1231
    %v1306 = vunpack.c.h.b16 %v1231
    %v1307 = vunpack.c.l.b16 %v1232
    %v1308 = vunpack.c.h.b16 %v1232
    %v1309 = vunpack.c.l.b16 %v1233
    %v1310 = vunpack.c.h.b16 %v1233
    %v1311 = vunpack.c.l.b16 %v1234
    %v1312 = vunpack.c.h.b16 %v1234
    %v1313 = vunpack.c.l.b16 %v1235
    %v1314 = vunpack.c.h.b16 %v1235
    %v1315 = vunpack.c.l.b16 %v1236
    %v1316 = vunpack.c.h.b16 %v1236
    %v1317 = vunpack.c.l.b16 %v1237
    %v1318 = vunpack.c.h.b16 %v1237
    %v1319 = vunpack.c.l.b16 %v1238
    %v1320 = vunpack.c.h.b16 %v1238
    %v1321 = vunpack.c.l.b16 %v1239
    %v1322 = vunpack.c.h.b16 %v1239
    %v1323 = vunpack.c.l.b16 %v1240
    %v1324 = vunpack.c.h.b16 %v1240
    %v1325 = vunpack.c.l.b16 %v1241
    %v1326 = vunpack.c.h.b16 %v1241
    %v1327 = vunpack.c.l.b16 %v1242
    %v1328 = vunpack.c.h.b16 %v1242
    %v1329 = vunpack.c.l.b16 %v1243
    %v1330 = vunpack.c.h.b16 %v1243
    %v1331 = vunpack.c.l.b16 %v1244
    %v1332 = vunpack.c.h.b16 %v1244
    %v1333 = vunpack.c.l.b16 %v1245
    %v1334 = vunpack.c.h.b16 %v1245
    %v1335 = vunpack.c.l.b16 %v1246
    %v1336 = vunpack.c.h.b16 %v1246
    %v1337 = vunpack.c.l.b16 %v1247
    %v1338 = vunpack.c.h.b16 %v1247
    %v1339 = vunpack.c.l.b16 %v1248
    %v1340 = vunpack.c.h.b16 %v1248
    %v1341 = vunpack.c.l.b16 %v1249
    %v1342 = vunpack.c.h.b16 %v1249
    %v1343 = vunpack.c.l.b16 %v1250
    %v1344 = vunpack.c.h.b16 %v1250
    %v1345 = vunpack.c.l.b16 %v1251
    %v1346 = vunpack.c.h.b16 %v1251
    %v1347 = vunpack.c.l.b16 %v1252
    %v1348 = vunpack.c.h.b16 %v1252
    %v1349 = vpack.c.b16 %v1287, %v1285
    %v1350 = vpack.c.b16 %v1288, %v1286
    %v1351 = vpack.c.b16 %v1291, %v1289
    %v1352 = vpack.c.b16 %v1292, %v1290
    %v1353 = vpack.c.b16 %v1295, %v1293
    %v1354 = vpack.c.b16 %v1296, %v1294
    %v1355 = vpack.c.b16 %v1299, %v1297
    %v1356 = vpack.c.b16 %v1300, %v1298
    %v1357 = vpack.c.b16 %v1303, %v1301
    %v1358 = vpack.c.b16 %v1304, %v1302
    %v1359 = vpack.c.b16 %v1307, %v1305
    %v1360 = vpack.c.b16 %v1308, %v1306
    %v1361 = vpack.c.b16 %v1311, %v1309
    %v1362 = vpack.c.b16 %v1312, %v1310
    %v1363 = vpack.c.b16 %v1315, %v1313
    %v1364 = vpack.c.b16 %v1316, %v1314
    %v1365 = vpack.c.b16 %v1319, %v1317
    %v1366 = vpack.c.b16 %v1320, %v1318
    %v1367 = vpack.c.b16 %v1323, %v1321
    %v1368 = vpack.c.b16 %v1324, %v1322
    %v1369 = vpack.c.b16 %v1327, %v1325
    %v1370 = vpack.c.b16 %v1328, %v1326
    %v1371 = vpack.c.b16 %v1331, %v1329
    %v1372 = vpack.c.b16 %v1332, %v1330
    %v1373 = vpack.c.b16 %v1335, %v1333
    %v1374 = vpack.c.b16 %v1336, %v1334
    %v1375 = vpack.c.b16 %v1339, %v1337
    %v1376 = vpack.c.b16 %v1340, %v1338
    %v1377 = vpack.c.b16 %v1343, %v1341
    %v1378 = vpack.c.b16 %v1344, %v1342
    %v1379 = vpack.c.b16 %v1347, %v1345
    %v1380 = vpack.c.b16 %v1348, %v1346
    %1413 = vmatpush.bf16.msra.mxu0 %v1363
    %1414 = vmatpush.bf16.msra.mxu0 %v1361
    %1415 = vmatpush.bf16.msra.mxu0 %v1359
    %1416 = vmatpush.bf16.msra.mxu0 %v1357
    %1417 = vmatpush.bf16.msra.mxu0 %v1355
    %1418 = vmatpush.bf16.msra.mxu0 %v1353
    %1419 = vmatpush.bf16.msra.mxu0 %v1351
    %1420 = vmatpush.bf16.msra.mxu0 %v1349
    %1421 = vmatmul.bf16.gmra.mxu0 %v1219
    %v1422 = vpop.f32.mrf.mxu0
    %v1423 = vadd.f32 0.0, %v1422
    %v1424 = vpop.f32.mrf.mxu0
    %v1425 = vadd.f32 0.0, %v1424
    %1426 = vdwg.mxu0
    %1427 = vmatpush.bf16.msra.mxu0 %v1379
    %1428 = vmatpush.bf16.msra.mxu0 %v1377
    %1429 = vmatpush.bf16.msra.mxu0 %v1375
    %1430 = vmatpush.bf16.msra.mxu0 %v1373
    %1431 = vmatpush.bf16.msra.mxu0 %v1371
    %1432 = vmatpush.bf16.msra.mxu0 %v1369
    %1433 = vmatpush.bf16.msra.mxu0 %v1367
    %1434 = vmatpush.bf16.msra.mxu0 %v1365
    %1435 = vmatmul.bf16.gmra.mxu0 %v1220
    %v1436 = vpop.f32.mrf.mxu0
    %v1437 = vadd.f32 %v1423, %v1436
    %v1438 = vpop.f32.mrf.mxu0
    %v1439 = vadd.f32 %v1425, %v1438
    %1440 = vdwg.mxu0
    %1441 = vmatpush.bf16.msra.mxu0 %v1364
    %1442 = vmatpush.bf16.msra.mxu0 %v1362
    %1443 = vmatpush.bf16.msra.mxu0 %v1360
    %1444 = vmatpush.bf16.msra.mxu0 %v1358
    %1445 = vmatpush.bf16.msra.mxu0 %v1356
    %1446 = vmatpush.bf16.msra.mxu0 %v1354
    %1447 = vmatpush.bf16.msra.mxu0 %v1352
    %1448 = vmatpush.bf16.msra.mxu0 %v1350
    %1449 = vmatmul.bf16.gmra.mxu0 %v1219
    %v1450 = vpop.f32.mrf.mxu0
    %v1451 = vadd.f32 0.0, %v1450
    %v1452 = vpop.f32.mrf.mxu0
    %v1453 = vadd.f32 0.0, %v1452
    %1454 = vdwg.mxu0
    %1455 = vmatpush.bf16.msra.mxu0 %v1380
    %1456 = vmatpush.bf16.msra.mxu0 %v1378
    %1457 = vmatpush.bf16.msra.mxu0 %v1376
    %1458 = vmatpush.bf16.msra.mxu0 %v1374
    %1459 = vmatpush.bf16.msra.mxu0 %v1372
    %1460 = vmatpush.bf16.msra.mxu0 %v1370
    %1461 = vmatpush.bf16.msra.mxu0 %v1368
    %1462 = vmatpush.bf16.msra.mxu0 %v1366
    %1463 = vmatmul.bf16.gmra.mxu0 %v1220
    %v1464 = vpop.f32.mrf.mxu0
    %v1465 = vadd.f32 %v1451, %v1464
    %v1466 = vpop.f32.mrf.mxu0
    %v1467 = vadd.f32 %v1453, %v1466
    %1468 = vdwg.mxu0
    %v1469 = vadd.f32 %v162, %v1437
    %v1470 = vadd.f32 %v163, %v1465
    %v1471 = vadd.f32 %v164, %v1439
    %v1472 = vadd.f32 %v165, %v1467
    %v1473 = vmul.f32 %v1469, %v1469
    %v1474 = vmul.f32 %v1470, %v1470
    %v1475 = vmul.f32 %v1471, %v1471
    %v1476 = vmul.f32 %v1472, %v1472
    %v1477 = vadd.f32 %v1473, %v1474
    %1478 = vadd.xlane.f32.xlu0 %v1477
    %v1479 = vpop.xlane.xlu0 %1478
    %v1480 = vadd.f32 %v1475, %v1476
    %1481 = vadd.xlane.f32.xlu0 %v1480
    %v1482 = vpop.xlane.xlu0 %1481
    %v1483 = vmul.f32 %v1479, %v182
    %v1484 = vmul.f32 %v1482, %v182
    %v1485 = vadd.f32 %v1483, 1e-06
    %v1486 = vadd.f32 %v1484, 1e-06
    %v1487 = vrsqrt.pop %v1485
    %v1488 = vmul.f32 %v1487, %v1485
    %v1489 = vmul.f32 %v1488, %v1487
    %v1490 = vmul.f32 0.5, %v1489
    %v1491 = vsub.f32 1.5, %v1490
    %v1492 = vmul.f32 %v1487, %v1491
    %vm1493 = vweird.f32 %v1485
    %vm1494 = vweird.f32 %v1487
    %vm1495 = vmor %vm1493, %vm1494
    %v1496 = vsel %vm1495, %v1487, %v1492
    %v1497 = vrsqrt.pop %v1486
    %v1498 = vmul.f32 %v1497, %v1486
    %v1499 = vmul.f32 %v1498, %v1497
    %v1500 = vmul.f32 0.5, %v1499
    %v1501 = vsub.f32 1.5, %v1500
    %v1502 = vmul.f32 %v1497, %v1501
    %vm1503 = vweird.f32 %v1486
    %vm1504 = vweird.f32 %v1497
    %vm1505 = vmor %vm1503, %vm1504
    %v1506 = vsel %vm1505, %v1497, %v1502
    %v1507 = vmul.f32 %v1469, %v1496
    %v1508 = vmul.f32 %v1470, %v1496
    %v1509 = vmul.f32 %v1471, %v1506
    %v1510 = vmul.f32 %v1472, %v1506
    %v1511 = vld [vmem:[%s5] sm:$0x3]
    %v1513 = vperm.slane %v1511, 0
    %v1514 = vperm.slane %v1511, 1
    %v1517 = vmul.f32 %v1507, %v1513
    %v1518 = vmul.f32 %v1508, %v1514
    %v1519 = vmul.f32 %v1509, %v1513
    %v1520 = vmul.f32 %v1510, %v1514
    %v1521 = vpack.c.bf16 %v1519, %v1517
    %v1522 = vpack.c.bf16 %v1520, %v1518
    %v1523 = vld [vmem:[#allocation14] sm:$0xff]
    %v1524 = vld [vmem:[#allocation14 + $0x8] sm:$0xff]
    %v1525 = vld [vmem:[#allocation14 + $0x10] sm:$0xff]
    %v1526 = vld [vmem:[#allocation14 + $0x18] sm:$0xff]
    %v1527 = vld [vmem:[#allocation14 + $0x20] sm:$0xff]
    %v1528 = vld [vmem:[#allocation14 + $0x28] sm:$0xff]
    %v1529 = vld [vmem:[#allocation14 + $0x30] sm:$0xff]
    %v1530 = vld [vmem:[#allocation14 + $0x38] sm:$0xff]
    %v1531 = vld [vmem:[#allocation14 + $0x40] sm:$0xff]
    %v1532 = vld [vmem:[#allocation14 + $0x48] sm:$0xff]
    %v1533 = vld [vmem:[#allocation14 + $0x50] sm:$0xff]
    %v1534 = vld [vmem:[#allocation14 + $0x58] sm:$0xff]
    %v1535 = vld [vmem:[#allocation14 + $0x60] sm:$0xff]
    %v1536 = vld [vmem:[#allocation14 + $0x68] sm:$0xff]
    %v1537 = vld [vmem:[#allocation14 + $0x70] sm:$0xff]
    %v1538 = vld [vmem:[#allocation14 + $0x78] sm:$0xff]
    %v1539 = vld [vmem:[#allocation14 + $0x80] sm:$0xff]
    %v1540 = vld [vmem:[#allocation14 + $0x88] sm:$0xff]
    %v1541 = vld [vmem:[#allocation14 + $0x90] sm:$0xff]
    %v1542 = vld [vmem:[#allocation14 + $0x98] sm:$0xff]
    %v1543 = vld [vmem:[#allocation14 + $0xa0] sm:$0xff]
    %v1544 = vld [vmem:[#allocation14 + $0xa8] sm:$0xff]
    %v1545 = vld [vmem:[#allocation14 + $0xb0] sm:$0xff]
    %v1546 = vld [vmem:[#allocation14 + $0xb8] sm:$0xff]
    %v1547 = vld [vmem:[#allocation14 + $0xc0] sm:$0xff]
    %v1548 = vld [vmem:[#allocation14 + $0xc8] sm:$0xff]
    %v1549 = vld [vmem:[#allocation14 + $0xd0] sm:$0xff]
    %v1550 = vld [vmem:[#allocation14 + $0xd8] sm:$0xff]
    %v1551 = vld [vmem:[#allocation14 + $0xe0] sm:$0xff]
    %v1552 = vld [vmem:[#allocation14 + $0xe8] sm:$0xff]
    %v1553 = vld [vmem:[#allocation14 + $0xf0] sm:$0xff]
    %v1554 = vld [vmem:[#allocation14 + $0xf8] sm:$0xff]
    %v1555 = vld [vmem:[#allocation14 + $0x100] sm:$0xff]
    %v1556 = vld [vmem:[#allocation14 + $0x108] sm:$0xff]
    %v1557 = vld [vmem:[#allocation14 + $0x110] sm:$0xff]
    %v1558 = vld [vmem:[#allocation14 + $0x118] sm:$0xff]
    %v1559 = vld [vmem:[#allocation14 + $0x120] sm:$0xff]
    %v1560 = vld [vmem:[#allocation14 + $0x128] sm:$0xff]
    %v1561 = vld [vmem:[#allocation14 + $0x130] sm:$0xff]
    %v1562 = vld [vmem:[#allocation14 + $0x138] sm:$0xff]
    %v1563 = vld [vmem:[#allocation14 + $0x140] sm:$0xff]
    %v1564 = vld [vmem:[#allocation14 + $0x148] sm:$0xff]
    %v1565 = vld [vmem:[#allocation14 + $0x150] sm:$0xff]
    %v1566 = vld [vmem:[#allocation14 + $0x158] sm:$0xff]
    %v1567 = vld [vmem:[#allocation14 + $0x160] sm:$0xff]
    %v1568 = vld [vmem:[#allocation14 + $0x168] sm:$0xff]
    %v1569 = vld [vmem:[#allocation14 + $0x170] sm:$0xff]
    %v1570 = vld [vmem:[#allocation14 + $0x178] sm:$0xff]
    %v1571 = vld [vmem:[#allocation14 + $0x180] sm:$0xff]
    %v1572 = vld [vmem:[#allocation14 + $0x188] sm:$0xff]
    %v1573 = vld [vmem:[#allocation14 + $0x190] sm:$0xff]
    %v1574 = vld [vmem:[#allocation14 + $0x198] sm:$0xff]
    %v1575 = vld [vmem:[#allocation14 + $0x1a0] sm:$0xff]
    %v1576 = vld [vmem:[#allocation14 + $0x1a8] sm:$0xff]
    %v1577 = vld [vmem:[#allocation14 + $0x1b0] sm:$0xff]
    %v1578 = vld [vmem:[#allocation14 + $0x1b8] sm:$0xff]
    %v1579 = vld [vmem:[#allocation14 + $0x1c0] sm:$0xff]
    %v1580 = vld [vmem:[#allocation14 + $0x1c8] sm:$0xff]
    %v1581 = vld [vmem:[#allocation14 + $0x1d0] sm:$0xff]
    %v1582 = vld [vmem:[#allocation14 + $0x1d8] sm:$0xff]
    %v1583 = vld [vmem:[#allocation14 + $0x1e0] sm:$0xff]
    %v1584 = vld [vmem:[#allocation14 + $0x1e8] sm:$0xff]
    %v1585 = vld [vmem:[#allocation14 + $0x1f0] sm:$0xff]
    %v1586 = vld [vmem:[#allocation14 + $0x1f8] sm:$0xff]
    %v1587 = vld [vmem:[#allocation14 + $0x200] sm:$0xff]
    %v1588 = vld [vmem:[#allocation14 + $0x208] sm:$0xff]
    %v1589 = vld [vmem:[#allocation14 + $0x210] sm:$0xff]
    %v1590 = vld [vmem:[#allocation14 + $0x218] sm:$0xff]
    %v1591 = vld [vmem:[#allocation14 + $0x220] sm:$0xff]
    %v1592 = vld [vmem:[#allocation14 + $0x228] sm:$0xff]
    %v1593 = vld [vmem:[#allocation14 + $0x230] sm:$0xff]
    %v1594 = vld [vmem:[#allocation14 + $0x238] sm:$0xff]
    %v1595 = vld [vmem:[#allocation14 + $0x240] sm:$0xff]
    %v1596 = vld [vmem:[#allocation14 + $0x248] sm:$0xff]
    %v1597 = vld [vmem:[#allocation14 + $0x250] sm:$0xff]
    %v1598 = vld [vmem:[#allocation14 + $0x258] sm:$0xff]
    %v1599 = vld [vmem:[#allocation14 + $0x260] sm:$0xff]
    %v1600 = vld [vmem:[#allocation14 + $0x268] sm:$0xff]
    %v1601 = vld [vmem:[#allocation14 + $0x270] sm:$0xff]
    %v1602 = vld [vmem:[#allocation14 + $0x278] sm:$0xff]
    %v1603 = vld [vmem:[#allocation14 + $0x280] sm:$0xff]
    %v1604 = vld [vmem:[#allocation14 + $0x288] sm:$0xff]
    %v1605 = vld [vmem:[#allocation14 + $0x290] sm:$0xff]
    %v1606 = vld [vmem:[#allocation14 + $0x298] sm:$0xff]
    %v1607 = vld [vmem:[#allocation14 + $0x2a0] sm:$0xff]
    %v1608 = vld [vmem:[#allocation14 + $0x2a8] sm:$0xff]
    %v1609 = vld [vmem:[#allocation14 + $0x2b0] sm:$0xff]
    %v1610 = vld [vmem:[#allocation14 + $0x2b8] sm:$0xff]
    %v1611 = vld [vmem:[#allocation14 + $0x2c0] sm:$0xff]
    %v1612 = vld [vmem:[#allocation14 + $0x2c8] sm:$0xff]
    %v1613 = vld [vmem:[#allocation14 + $0x2d0] sm:$0xff]
    %v1614 = vld [vmem:[#allocation14 + $0x2d8] sm:$0xff]
    %v1615 = vld [vmem:[#allocation14 + $0x2e0] sm:$0xff]
    %v1616 = vld [vmem:[#allocation14 + $0x2e8] sm:$0xff]
    %v1617 = vld [vmem:[#allocation14 + $0x2f0] sm:$0xff]
    %v1618 = vld [vmem:[#allocation14 + $0x2f8] sm:$0xff]
    %v1619 = vld [vmem:[#allocation14 + $0x300] sm:$0xff]
    %v1620 = vld [vmem:[#allocation14 + $0x308] sm:$0xff]
    %v1621 = vld [vmem:[#allocation14 + $0x310] sm:$0xff]
    %v1622 = vld [vmem:[#allocation14 + $0x318] sm:$0xff]
    %v1623 = vld [vmem:[#allocation14 + $0x320] sm:$0xff]
    %v1624 = vld [vmem:[#allocation14 + $0x328] sm:$0xff]
    %v1625 = vld [vmem:[#allocation14 + $0x330] sm:$0xff]
    %v1626 = vld [vmem:[#allocation14 + $0x338] sm:$0xff]
    %v1627 = vld [vmem:[#allocation14 + $0x340] sm:$0xff]
    %v1628 = vld [vmem:[#allocation14 + $0x348] sm:$0xff]
    %v1629 = vld [vmem:[#allocation14 + $0x350] sm:$0xff]
    %v1630 = vld [vmem:[#allocation14 + $0x358] sm:$0xff]
    %v1631 = vld [vmem:[#allocation14 + $0x360] sm:$0xff]
    %v1632 = vld [vmem:[#allocation14 + $0x368] sm:$0xff]
    %v1633 = vld [vmem:[#allocation14 + $0x370] sm:$0xff]
    %v1634 = vld [vmem:[#allocation14 + $0x378] sm:$0xff]
    %v1635 = vld [vmem:[#allocation14 + $0x380] sm:$0xff]
    %v1636 = vld [vmem:[#allocation14 + $0x388] sm:$0xff]
    %v1637 = vld [vmem:[#allocation14 + $0x390] sm:$0xff]
    %v1638 = vld [vmem:[#allocation14 + $0x398] sm:$0xff]
    %v1639 = vld [vmem:[#allocation14 + $0x3a0] sm:$0xff]
    %v1640 = vld [vmem:[#allocation14 + $0x3a8] sm:$0xff]
    %v1641 = vld [vmem:[#allocation14 + $0x3b0] sm:$0xff]
    %v1642 = vld [vmem:[#allocation14 + $0x3b8] sm:$0xff]
    %v1643 = vld [vmem:[#allocation14 + $0x3c0] sm:$0xff]
    %v1644 = vld [vmem:[#allocation14 + $0x3c8] sm:$0xff]
    %v1645 = vld [vmem:[#allocation14 + $0x3d0] sm:$0xff]
    %v1646 = vld [vmem:[#allocation14 + $0x3d8] sm:$0xff]
    %v1647 = vld [vmem:[#allocation14 + $0x3e0] sm:$0xff]
    %v1648 = vld [vmem:[#allocation14 + $0x3e8] sm:$0xff]
    %v1649 = vld [vmem:[#allocation14 + $0x3f0] sm:$0xff]
    %v1650 = vld [vmem:[#allocation14 + $0x3f8] sm:$0xff]
    %v1779 = vunpack.c.l.b16 %v1523
    %v1780 = vunpack.c.h.b16 %v1523
    %v1781 = vunpack.c.l.b16 %v1524
    %v1782 = vunpack.c.h.b16 %v1524
    %v1783 = vunpack.c.l.b16 %v1525
    %v1784 = vunpack.c.h.b16 %v1525
    %v1785 = vunpack.c.l.b16 %v1526
    %v1786 = vunpack.c.h.b16 %v1526
    %v1787 = vunpack.c.l.b16 %v1527
    %v1788 = vunpack.c.h.b16 %v1527
    %v1789 = vunpack.c.l.b16 %v1528
    %v1790 = vunpack.c.h.b16 %v1528
    %v1791 = vunpack.c.l.b16 %v1529
    %v1792 = vunpack.c.h.b16 %v1529
    %v1793 = vunpack.c.l.b16 %v1530
    %v1794 = vunpack.c.h.b16 %v1530
    %v1795 = vunpack.c.l.b16 %v1531
    %v1796 = vunpack.c.h.b16 %v1531
    %v1797 = vunpack.c.l.b16 %v1532
    %v1798 = vunpack.c.h.b16 %v1532
    %v1799 = vunpack.c.l.b16 %v1533
    %v1800 = vunpack.c.h.b16 %v1533
    %v1801 = vunpack.c.l.b16 %v1534
    %v1802 = vunpack.c.h.b16 %v1534
    %v1803 = vunpack.c.l.b16 %v1535
    %v1804 = vunpack.c.h.b16 %v1535
    %v1805 = vunpack.c.l.b16 %v1536
    %v1806 = vunpack.c.h.b16 %v1536
    %v1807 = vunpack.c.l.b16 %v1537
    %v1808 = vunpack.c.h.b16 %v1537
    %v1809 = vunpack.c.l.b16 %v1538
    %v1810 = vunpack.c.h.b16 %v1538
    %v1811 = vunpack.c.l.b16 %v1539
    %v1812 = vunpack.c.h.b16 %v1539
    %v1813 = vunpack.c.l.b16 %v1540
    %v1814 = vunpack.c.h.b16 %v1540
    %v1815 = vunpack.c.l.b16 %v1541
    %v1816 = vunpack.c.h.b16 %v1541
    %v1817 = vunpack.c.l.b16 %v1542
    %v1818 = vunpack.c.h.b16 %v1542
    %v1819 = vunpack.c.l.b16 %v1543
    %v1820 = vunpack.c.h.b16 %v1543
    %v1821 = vunpack.c.l.b16 %v1544
    %v1822 = vunpack.c.h.b16 %v1544
    %v1823 = vunpack.c.l.b16 %v1545
    %v1824 = vunpack.c.h.b16 %v1545
    %v1825 = vunpack.c.l.b16 %v1546
    %v1826 = vunpack.c.h.b16 %v1546
    %v1827 = vunpack.c.l.b16 %v1547
    %v1828 = vunpack.c.h.b16 %v1547
    %v1829 = vunpack.c.l.b16 %v1548
    %v1830 = vunpack.c.h.b16 %v1548
    %v1831 = vunpack.c.l.b16 %v1549
    %v1832 = vunpack.c.h.b16 %v1549
    %v1833 = vunpack.c.l.b16 %v1550
    %v1834 = vunpack.c.h.b16 %v1550
    %v1835 = vunpack.c.l.b16 %v1551
    %v1836 = vunpack.c.h.b16 %v1551
    %v1837 = vunpack.c.l.b16 %v1552
    %v1838 = vunpack.c.h.b16 %v1552
    %v1839 = vunpack.c.l.b16 %v1553
    %v1840 = vunpack.c.h.b16 %v1553
    %v1841 = vunpack.c.l.b16 %v1554
    %v1842 = vunpack.c.h.b16 %v1554
    %v1843 = vunpack.c.l.b16 %v1555
    %v1844 = vunpack.c.h.b16 %v1555
    %v1845 = vunpack.c.l.b16 %v1556
    %v1846 = vunpack.c.h.b16 %v1556
    %v1847 = vunpack.c.l.b16 %v1557
    %v1848 = vunpack.c.h.b16 %v1557
    %v1849 = vunpack.c.l.b16 %v1558
    %v1850 = vunpack.c.h.b16 %v1558
    %v1851 = vunpack.c.l.b16 %v1559
    %v1852 = vunpack.c.h.b16 %v1559
    %v1853 = vunpack.c.l.b16 %v1560
    %v1854 = vunpack.c.h.b16 %v1560
    %v1855 = vunpack.c.l.b16 %v1561
    %v1856 = vunpack.c.h.b16 %v1561
    %v1857 = vunpack.c.l.b16 %v1562
    %v1858 = vunpack.c.h.b16 %v1562
    %v1859 = vunpack.c.l.b16 %v1563
    %v1860 = vunpack.c.h.b16 %v1563
    %v1861 = vunpack.c.l.b16 %v1564
    %v1862 = vunpack.c.h.b16 %v1564
    %v1863 = vunpack.c.l.b16 %v1565
    %v1864 = vunpack.c.h.b16 %v1565
    %v1865 = vunpack.c.l.b16 %v1566
    %v1866 = vunpack.c.h.b16 %v1566
    %v1867 = vunpack.c.l.b16 %v1567
    %v1868 = vunpack.c.h.b16 %v1567
    %v1869 = vunpack.c.l.b16 %v1568
    %v1870 = vunpack.c.h.b16 %v1568
    %v1871 = vunpack.c.l.b16 %v1569
    %v1872 = vunpack.c.h.b16 %v1569
    %v1873 = vunpack.c.l.b16 %v1570
    %v1874 = vunpack.c.h.b16 %v1570
    %v1875 = vunpack.c.l.b16 %v1571
    %v1876 = vunpack.c.h.b16 %v1571
    %v1877 = vunpack.c.l.b16 %v1572
    %v1878 = vunpack.c.h.b16 %v1572
    %v1879 = vunpack.c.l.b16 %v1573
    %v1880 = vunpack.c.h.b16 %v1573
    %v1881 = vunpack.c.l.b16 %v1574
    %v1882 = vunpack.c.h.b16 %v1574
    %v1883 = vunpack.c.l.b16 %v1575
    %v1884 = vunpack.c.h.b16 %v1575
    %v1885 = vunpack.c.l.b16 %v1576
    %v1886 = vunpack.c.h.b16 %v1576
    %v1887 = vunpack.c.l.b16 %v1577
    %v1888 = vunpack.c.h.b16 %v1577
    %v1889 = vunpack.c.l.b16 %v1578
    %v1890 = vunpack.c.h.b16 %v1578
    %v1891 = vunpack.c.l.b16 %v1579
    %v1892 = vunpack.c.h.b16 %v1579
    %v1893 = vunpack.c.l.b16 %v1580
    %v1894 = vunpack.c.h.b16 %v1580
    %v1895 = vunpack.c.l.b16 %v1581
    %v1896 = vunpack.c.h.b16 %v1581
    %v1897 = vunpack.c.l.b16 %v1582
    %v1898 = vunpack.c.h.b16 %v1582
    %v1899 = vunpack.c.l.b16 %v1583
    %v1900 = vunpack.c.h.b16 %v1583
    %v1901 = vunpack.c.l.b16 %v1584
    %v1902 = vunpack.c.h.b16 %v1584
    %v1903 = vunpack.c.l.b16 %v1585
    %v1904 = vunpack.c.h.b16 %v1585
    %v1905 = vunpack.c.l.b16 %v1586
    %v1906 = vunpack.c.h.b16 %v1586
    %v1907 = vunpack.c.l.b16 %v1587
    %v1908 = vunpack.c.h.b16 %v1587
    %v1909 = vunpack.c.l.b16 %v1588
    %v1910 = vunpack.c.h.b16 %v1588
    %v1911 = vunpack.c.l.b16 %v1589
    %v1912 = vunpack.c.h.b16 %v1589
    %v1913 = vunpack.c.l.b16 %v1590
    %v1914 = vunpack.c.h.b16 %v1590
    %v1915 = vunpack.c.l.b16 %v1591
    %v1916 = vunpack.c.h.b16 %v1591
    %v1917 = vunpack.c.l.b16 %v1592
    %v1918 = vunpack.c.h.b16 %v1592
    %v1919 = vunpack.c.l.b16 %v1593
    %v1920 = vunpack.c.h.b16 %v1593
    %v1921 = vunpack.c.l.b16 %v1594
    %v1922 = vunpack.c.h.b16 %v1594
    %v1923 = vunpack.c.l.b16 %v1595
    %v1924 = vunpack.c.h.b16 %v1595
    %v1925 = vunpack.c.l.b16 %v1596
    %v1926 = vunpack.c.h.b16 %v1596
    %v1927 = vunpack.c.l.b16 %v1597
    %v1928 = vunpack.c.h.b16 %v1597
    %v1929 = vunpack.c.l.b16 %v1598
    %v1930 = vunpack.c.h.b16 %v1598
    %v1931 = vunpack.c.l.b16 %v1599
    %v1932 = vunpack.c.h.b16 %v1599
    %v1933 = vunpack.c.l.b16 %v1600
    %v1934 = vunpack.c.h.b16 %v1600
    %v1935 = vunpack.c.l.b16 %v1601
    %v1936 = vunpack.c.h.b16 %v1601
    %v1937 = vunpack.c.l.b16 %v1602
    %v1938 = vunpack.c.h.b16 %v1602
    %v1939 = vunpack.c.l.b16 %v1603
    %v1940 = vunpack.c.h.b16 %v1603
    %v1941 = vunpack.c.l.b16 %v1604
    %v1942 = vunpack.c.h.b16 %v1604
    %v1943 = vunpack.c.l.b16 %v1605
    %v1944 = vunpack.c.h.b16 %v1605
    %v1945 = vunpack.c.l.b16 %v1606
    %v1946 = vunpack.c.h.b16 %v1606
    %v1947 = vunpack.c.l.b16 %v1607
    %v1948 = vunpack.c.h.b16 %v1607
    %v1949 = vunpack.c.l.b16 %v1608
    %v1950 = vunpack.c.h.b16 %v1608
    %v1951 = vunpack.c.l.b16 %v1609
    %v1952 = vunpack.c.h.b16 %v1609
    %v1953 = vunpack.c.l.b16 %v1610
    %v1954 = vunpack.c.h.b16 %v1610
    %v1955 = vunpack.c.l.b16 %v1611
    %v1956 = vunpack.c.h.b16 %v1611
    %v1957 = vunpack.c.l.b16 %v1612
    %v1958 = vunpack.c.h.b16 %v1612
    %v1959 = vunpack.c.l.b16 %v1613
    %v1960 = vunpack.c.h.b16 %v1613
    %v1961 = vunpack.c.l.b16 %v1614
    %v1962 = vunpack.c.h.b16 %v1614
    %v1963 = vunpack.c.l.b16 %v1615
    %v1964 = vunpack.c.h.b16 %v1615
    %v1965 = vunpack.c.l.b16 %v1616
    %v1966 = vunpack.c.h.b16 %v1616
    %v1967 = vunpack.c.l.b16 %v1617
    %v1968 = vunpack.c.h.b16 %v1617
    %v1969 = vunpack.c.l.b16 %v1618
    %v1970 = vunpack.c.h.b16 %v1618
    %v1971 = vunpack.c.l.b16 %v1619
    %v1972 = vunpack.c.h.b16 %v1619
    %v1973 = vunpack.c.l.b16 %v1620
    %v1974 = vunpack.c.h.b16 %v1620
    %v1975 = vunpack.c.l.b16 %v1621
    %v1976 = vunpack.c.h.b16 %v1621
    %v1977 = vunpack.c.l.b16 %v1622
    %v1978 = vunpack.c.h.b16 %v1622
    %v1979 = vunpack.c.l.b16 %v1623
    %v1980 = vunpack.c.h.b16 %v1623
    %v1981 = vunpack.c.l.b16 %v1624
    %v1982 = vunpack.c.h.b16 %v1624
    %v1983 = vunpack.c.l.b16 %v1625
    %v1984 = vunpack.c.h.b16 %v1625
    %v1985 = vunpack.c.l.b16 %v1626
    %v1986 = vunpack.c.h.b16 %v1626
    %v1987 = vunpack.c.l.b16 %v1627
    %v1988 = vunpack.c.h.b16 %v1627
    %v1989 = vunpack.c.l.b16 %v1628
    %v1990 = vunpack.c.h.b16 %v1628
    %v1991 = vunpack.c.l.b16 %v1629
    %v1992 = vunpack.c.h.b16 %v1629
    %v1993 = vunpack.c.l.b16 %v1630
    %v1994 = vunpack.c.h.b16 %v1630
    %v1995 = vunpack.c.l.b16 %v1631
    %v1996 = vunpack.c.h.b16 %v1631
    %v1997 = vunpack.c.l.b16 %v1632
    %v1998 = vunpack.c.h.b16 %v1632
    %v1999 = vunpack.c.l.b16 %v1633
    %v2000 = vunpack.c.h.b16 %v1633
    %v2001 = vunpack.c.l.b16 %v1634
    %v2002 = vunpack.c.h.b16 %v1634
    %v2003 = vunpack.c.l.b16 %v1635
    %v2004 = vunpack.c.h.b16 %v1635
    %v2005 = vunpack.c.l.b16 %v1636
    %v2006 = vunpack.c.h.b16 %v1636
    %v2007 = vunpack.c.l.b16 %v1637
    %v2008 = vunpack.c.h.b16 %v1637
    %v2009 = vunpack.c.l.b16 %v1638
    %v2010 = vunpack.c.h.b16 %v1638
    %v2011 = vunpack.c.l.b16 %v1639
    %v2012 = vunpack.c.h.b16 %v1639
    %v2013 = vunpack.c.l.b16 %v1640
    %v2014 = vunpack.c.h.b16 %v1640
    %v2015 = vunpack.c.l.b16 %v1641
    %v2016 = vunpack.c.h.b16 %v1641
    %v2017 = vunpack.c.l.b16 %v1642
    %v2018 = vunpack.c.h.b16 %v1642
    %v2019 = vunpack.c.l.b16 %v1643
    %v2020 = vunpack.c.h.b16 %v1643
    %v2021 = vunpack.c.l.b16 %v1644
    %v2022 = vunpack.c.h.b16 %v1644
    %v2023 = vunpack.c.l.b16 %v1645
    %v2024 = vunpack.c.h.b16 %v1645
    %v2025 = vunpack.c.l.b16 %v1646
    %v2026 = vunpack.c.h.b16 %v1646
    %v2027 = vunpack.c.l.b16 %v1647
    %v2028 = vunpack.c.h.b16 %v1647
    %v2029 = vunpack.c.l.b16 %v1648
    %v2030 = vunpack.c.h.b16 %v1648
    %v2031 = vunpack.c.l.b16 %v1649
    %v2032 = vunpack.c.h.b16 %v1649
    %v2033 = vunpack.c.l.b16 %v1650
    %v2034 = vunpack.c.h.b16 %v1650
    %v2035 = vpack.c.b16 %v1787, %v1779
    %v2036 = vpack.c.b16 %v1788, %v1780
    %v2037 = vpack.c.b16 %v1789, %v1781
    %v2038 = vpack.c.b16 %v1790, %v1782
    %v2039 = vpack.c.b16 %v1791, %v1783
    %v2040 = vpack.c.b16 %v1792, %v1784
    %v2041 = vpack.c.b16 %v1793, %v1785
    %v2042 = vpack.c.b16 %v1794, %v1786
    %v2043 = vpack.c.b16 %v1803, %v1795
    %v2044 = vpack.c.b16 %v1804, %v1796
    %v2045 = vpack.c.b16 %v1805, %v1797
    %v2046 = vpack.c.b16 %v1806, %v1798
    %v2047 = vpack.c.b16 %v1807, %v1799
    %v2048 = vpack.c.b16 %v1808, %v1800
    %v2049 = vpack.c.b16 %v1809, %v1801
    %v2050 = vpack.c.b16 %v1810, %v1802
    %v2051 = vpack.c.b16 %v1819, %v1811
    %v2052 = vpack.c.b16 %v1820, %v1812
    %v2053 = vpack.c.b16 %v1821, %v1813
    %v2054 = vpack.c.b16 %v1822, %v1814
    %v2055 = vpack.c.b16 %v1823, %v1815
    %v2056 = vpack.c.b16 %v1824, %v1816
    %v2057 = vpack.c.b16 %v1825, %v1817
    %v2058 = vpack.c.b16 %v1826, %v1818
    %v2059 = vpack.c.b16 %v1835, %v1827
    %v2060 = vpack.c.b16 %v1836, %v1828
    %v2061 = vpack.c.b16 %v1837, %v1829
    %v2062 = vpack.c.b16 %v1838, %v1830
    %v2063 = vpack.c.b16 %v1839, %v1831
    %v2064 = vpack.c.b16 %v1840, %v1832
    %v2065 = vpack.c.b16 %v1841, %v1833
    %v2066 = vpack.c.b16 %v1842, %v1834
    %v2067 = vpack.c.b16 %v1851, %v1843
    %v2068 = vpack.c.b16 %v1852, %v1844
    %v2069 = vpack.c.b16 %v1853, %v1845
    %v2070 = vpack.c.b16 %v1854, %v1846
    %v2071 = vpack.c.b16 %v1855, %v1847
    %v2072 = vpack.c.b16 %v1856, %v1848
    %v2073 = vpack.c.b16 %v1857, %v1849
    %v2074 = vpack.c.b16 %v1858, %v1850
    %v2075 = vpack.c.b16 %v1867, %v1859
    %v2076 = vpack.c.b16 %v1868, %v1860
    %v2077 = vpack.c.b16 %v1869, %v1861
    %v2078 = vpack.c.b16 %v1870, %v1862
    %v2079 = vpack.c.b16 %v1871, %v1863
    %v2080 = vpack.c.b16 %v1872, %v1864
    %v2081 = vpack.c.b16 %v1873, %v1865
    %v2082 = vpack.c.b16 %v1874, %v1866
    %v2083 = vpack.c.b16 %v1883, %v1875
    %v2084 = vpack.c.b16 %v1884, %v1876
    %v2085 = vpack.c.b16 %v1885, %v1877
    %v2086 = vpack.c.b16 %v1886, %v1878
    %v2087 = vpack.c.b16 %v1887, %v1879
    %v2088 = vpack.c.b16 %v1888, %v1880
    %v2089 = vpack.c.b16 %v1889, %v1881
    %v2090 = vpack.c.b16 %v1890, %v1882
    %v2091 = vpack.c.b16 %v1899, %v1891
    %v2092 = vpack.c.b16 %v1900, %v1892
    %v2093 = vpack.c.b16 %v1901, %v1893
    %v2094 = vpack.c.b16 %v1902, %v1894
    %v2095 = vpack.c.b16 %v1903, %v1895
    %v2096 = vpack.c.b16 %v1904, %v1896
    %v2097 = vpack.c.b16 %v1905, %v1897
    %v2098 = vpack.c.b16 %v1906, %v1898
    %v2099 = vpack.c.b16 %v1915, %v1907
    %v2100 = vpack.c.b16 %v1916, %v1908
    %v2101 = vpack.c.b16 %v1917, %v1909
    %v2102 = vpack.c.b16 %v1918, %v1910
    %v2103 = vpack.c.b16 %v1919, %v1911
    %v2104 = vpack.c.b16 %v1920, %v1912
    %v2105 = vpack.c.b16 %v1921, %v1913
    %v2106 = vpack.c.b16 %v1922, %v1914
    %v2107 = vpack.c.b16 %v1931, %v1923
    %v2108 = vpack.c.b16 %v1932, %v1924
    %v2109 = vpack.c.b16 %v1933, %v1925
    %v2110 = vpack.c.b16 %v1934, %v1926
    %v2111 = vpack.c.b16 %v1935, %v1927
    %v2112 = vpack.c.b16 %v1936, %v1928
    %v2113 = vpack.c.b16 %v1937, %v1929
    %v2114 = vpack.c.b16 %v1938, %v1930
    %v2115 = vpack.c.b16 %v1947, %v1939
    %v2116 = vpack.c.b16 %v1948, %v1940
    %v2117 = vpack.c.b16 %v1949, %v1941
    %v2118 = vpack.c.b16 %v1950, %v1942
    %v2119 = vpack.c.b16 %v1951, %v1943
    %v2120 = vpack.c.b16 %v1952, %v1944
    %v2121 = vpack.c.b16 %v1953, %v1945
    %v2122 = vpack.c.b16 %v1954, %v1946
    %v2123 = vpack.c.b16 %v1963, %v1955
    %v2124 = vpack.c.b16 %v1964, %v1956
    %v2125 = vpack.c.b16 %v1965, %v1957
    %v2126 = vpack.c.b16 %v1966, %v1958
    %v2127 = vpack.c.b16 %v1967, %v1959
    %v2128 = vpack.c.b16 %v1968, %v1960
    %v2129 = vpack.c.b16 %v1969, %v1961
    %v2130 = vpack.c.b16 %v1970, %v1962
    %v2131 = vpack.c.b16 %v1979, %v1971
    %v2132 = vpack.c.b16 %v1980, %v1972
    %v2133 = vpack.c.b16 %v1981, %v1973
    %v2134 = vpack.c.b16 %v1982, %v1974
    %v2135 = vpack.c.b16 %v1983, %v1975
    %v2136 = vpack.c.b16 %v1984, %v1976
    %v2137 = vpack.c.b16 %v1985, %v1977
    %v2138 = vpack.c.b16 %v1986, %v1978
    %v2139 = vpack.c.b16 %v1995, %v1987
    %v2140 = vpack.c.b16 %v1996, %v1988
    %v2141 = vpack.c.b16 %v1997, %v1989
    %v2142 = vpack.c.b16 %v1998, %v1990
    %v2143 = vpack.c.b16 %v1999, %v1991
    %v2144 = vpack.c.b16 %v2000, %v1992
    %v2145 = vpack.c.b16 %v2001, %v1993
    %v2146 = vpack.c.b16 %v2002, %v1994
    %v2147 = vpack.c.b16 %v2011, %v2003
    %v2148 = vpack.c.b16 %v2012, %v2004
    %v2149 = vpack.c.b16 %v2013, %v2005
    %v2150 = vpack.c.b16 %v2014, %v2006
    %v2151 = vpack.c.b16 %v2015, %v2007
    %v2152 = vpack.c.b16 %v2016, %v2008
    %v2153 = vpack.c.b16 %v2017, %v2009
    %v2154 = vpack.c.b16 %v2018, %v2010
    %v2155 = vpack.c.b16 %v2027, %v2019
    %v2156 = vpack.c.b16 %v2028, %v2020
    %v2157 = vpack.c.b16 %v2029, %v2021
    %v2158 = vpack.c.b16 %v2030, %v2022
    %v2159 = vpack.c.b16 %v2031, %v2023
    %v2160 = vpack.c.b16 %v2032, %v2024
    %v2161 = vpack.c.b16 %v2033, %v2025
    %v2162 = vpack.c.b16 %v2034, %v2026
    %2291 = vmatpush.bf16.msra.mxu0 %v2091
    %2292 = vmatpush.bf16.msra.mxu0 %v2083
    %2293 = vmatpush.bf16.msra.mxu0 %v2075
    %2294 = vmatpush.bf16.msra.mxu0 %v2067
    %2295 = vmatpush.bf16.msra.mxu0 %v2059
    %2296 = vmatpush.bf16.msra.mxu0 %v2051
    %2297 = vmatpush.bf16.msra.mxu0 %v2043
    %2298 = vmatpush.bf16.msra.mxu0 %v2035
    %2299 = vmatmul.bf16.gmra.mxu0 %v1521
    %v2300 = vpop.f32.mrf.mxu0
    %v2301 = vadd.f32 0.0, %v2300
    %v2302 = vpop.f32.mrf.mxu0
    %v2303 = vadd.f32 0.0, %v2302
    %2304 = vdwg.mxu0
    %2305 = vmatpush.bf16.msra.mxu0 %v2155
    %2306 = vmatpush.bf16.msra.mxu0 %v2147
    %2307 = vmatpush.bf16.msra.mxu0 %v2139
    %2308 = vmatpush.bf16.msra.mxu0 %v2131
    %2309 = vmatpush.bf16.msra.mxu0 %v2123
    %2310 = vmatpush.bf16.msra.mxu0 %v2115
    %2311 = vmatpush.bf16.msra.mxu0 %v2107
    %2312 = vmatpush.bf16.msra.mxu0 %v2099
    %2313 = vmatmul.bf16.gmra.mxu0 %v1522
    %v2314 = vpop.f32.mrf.mxu0
    %v2315 = vadd.f32 %v2301, %v2314
    %v2316 = vpop.f32.mrf.mxu0
    %v2317 = vadd.f32 %v2303, %v2316
    %2318 = vdwg.mxu0
    %2319 = vmatpush.bf16.msra.mxu0 %v2092
    %2320 = vmatpush.bf16.msra.mxu0 %v2084
    %2321 = vmatpush.bf16.msra.mxu0 %v2076
    %2322 = vmatpush.bf16.msra.mxu0 %v2068
    %2323 = vmatpush.bf16.msra.mxu0 %v2060
    %2324 = vmatpush.bf16.msra.mxu0 %v2052
    %2325 = vmatpush.bf16.msra.mxu0 %v2044
    %2326 = vmatpush.bf16.msra.mxu0 %v2036
    %2327 = vmatmul.bf16.gmra.mxu0 %v1521
    %v2328 = vpop.f32.mrf.mxu0
    %v2329 = vadd.f32 0.0, %v2328
    %v2330 = vpop.f32.mrf.mxu0
    %v2331 = vadd.f32 0.0, %v2330
    %2332 = vdwg.mxu0
    %2333 = vmatpush.bf16.msra.mxu0 %v2156
    %2334 = vmatpush.bf16.msra.mxu0 %v2148
    %2335 = vmatpush.bf16.msra.mxu0 %v2140
    %2336 = vmatpush.bf16.msra.mxu0 %v2132
    %2337 = vmatpush.bf16.msra.mxu0 %v2124
    %2338 = vmatpush.bf16.msra.mxu0 %v2116
    %2339 = vmatpush.bf16.msra.mxu0 %v2108
    %2340 = vmatpush.bf16.msra.mxu0 %v2100
    %2341 = vmatmul.bf16.gmra.mxu0 %v1522
    %v2342 = vpop.f32.mrf.mxu0
    %v2343 = vadd.f32 %v2329, %v2342
    %v2344 = vpop.f32.mrf.mxu0
    %v2345 = vadd.f32 %v2331, %v2344
    %2346 = vdwg.mxu0
    %2347 = vmatpush.bf16.msra.mxu0 %v2093
    %2348 = vmatpush.bf16.msra.mxu0 %v2085
    %2349 = vmatpush.bf16.msra.mxu0 %v2077
    %2350 = vmatpush.bf16.msra.mxu0 %v2069
    %2351 = vmatpush.bf16.msra.mxu0 %v2061
    %2352 = vmatpush.bf16.msra.mxu0 %v2053
    %2353 = vmatpush.bf16.msra.mxu0 %v2045
    %2354 = vmatpush.bf16.msra.mxu0 %v2037
    %2355 = vmatmul.bf16.gmra.mxu0 %v1521
    %v2356 = vpop.f32.mrf.mxu0
    %v2357 = vadd.f32 0.0, %v2356
    %v2358 = vpop.f32.mrf.mxu0
    %v2359 = vadd.f32 0.0, %v2358
    %2360 = vdwg.mxu0
    %2361 = vmatpush.bf16.msra.mxu0 %v2157
    %2362 = vmatpush.bf16.msra.mxu0 %v2149
    %2363 = vmatpush.bf16.msra.mxu0 %v2141
    %2364 = vmatpush.bf16.msra.mxu0 %v2133
    %2365 = vmatpush.bf16.msra.mxu0 %v2125
    %2366 = vmatpush.bf16.msra.mxu0 %v2117
    %2367 = vmatpush.bf16.msra.mxu0 %v2109
    %2368 = vmatpush.bf16.msra.mxu0 %v2101
    %2369 = vmatmul.bf16.gmra.mxu0 %v1522
    %v2370 = vpop.f32.mrf.mxu0
    %v2371 = vadd.f32 %v2357, %v2370
    %v2372 = vpop.f32.mrf.mxu0
    %v2373 = vadd.f32 %v2359, %v2372
    %2374 = vdwg.mxu0
    %2375 = vmatpush.bf16.msra.mxu0 %v2094
    %2376 = vmatpush.bf16.msra.mxu0 %v2086
    %2377 = vmatpush.bf16.msra.mxu0 %v2078
    %2378 = vmatpush.bf16.msra.mxu0 %v2070
    %2379 = vmatpush.bf16.msra.mxu0 %v2062
    %2380 = vmatpush.bf16.msra.mxu0 %v2054
    %2381 = vmatpush.bf16.msra.mxu0 %v2046
    %2382 = vmatpush.bf16.msra.mxu0 %v2038
    %2383 = vmatmul.bf16.gmra.mxu0 %v1521
    %v2384 = vpop.f32.mrf.mxu0
    %v2385 = vadd.f32 0.0, %v2384
    %v2386 = vpop.f32.mrf.mxu0
    %v2387 = vadd.f32 0.0, %v2386
    %2388 = vdwg.mxu0
    %2389 = vmatpush.bf16.msra.mxu0 %v2158
    %2390 = vmatpush.bf16.msra.mxu0 %v2150
    %2391 = vmatpush.bf16.msra.mxu0 %v2142
    %2392 = vmatpush.bf16.msra.mxu0 %v2134
    %2393 = vmatpush.bf16.msra.mxu0 %v2126
    %2394 = vmatpush.bf16.msra.mxu0 %v2118
    %2395 = vmatpush.bf16.msra.mxu0 %v2110
    %2396 = vmatpush.bf16.msra.mxu0 %v2102
    %2397 = vmatmul.bf16.gmra.mxu0 %v1522
    %v2398 = vpop.f32.mrf.mxu0
    %v2399 = vadd.f32 %v2385, %v2398
    %v2400 = vpop.f32.mrf.mxu0
    %v2401 = vadd.f32 %v2387, %v2400
    %2402 = vdwg.mxu0
    %2403 = vmatpush.bf16.msra.mxu0 %v2095
    %2404 = vmatpush.bf16.msra.mxu0 %v2087
    %2405 = vmatpush.bf16.msra.mxu0 %v2079
    %2406 = vmatpush.bf16.msra.mxu0 %v2071
    %2407 = vmatpush.bf16.msra.mxu0 %v2063
    %2408 = vmatpush.bf16.msra.mxu0 %v2055
    %2409 = vmatpush.bf16.msra.mxu0 %v2047
    %2410 = vmatpush.bf16.msra.mxu0 %v2039
    %2411 = vmatmul.bf16.gmra.mxu0 %v1521
    %v2412 = vpop.f32.mrf.mxu0
    %v2413 = vadd.f32 0.0, %v2412
    %v2414 = vpop.f32.mrf.mxu0
    %v2415 = vadd.f32 0.0, %v2414
    %2416 = vdwg.mxu0
    %2417 = vmatpush.bf16.msra.mxu0 %v2159
    %2418 = vmatpush.bf16.msra.mxu0 %v2151
    %2419 = vmatpush.bf16.msra.mxu0 %v2143
    %2420 = vmatpush.bf16.msra.mxu0 %v2135
    %2421 = vmatpush.bf16.msra.mxu0 %v2127
    %2422 = vmatpush.bf16.msra.mxu0 %v2119
    %2423 = vmatpush.bf16.msra.mxu0 %v2111
    %2424 = vmatpush.bf16.msra.mxu0 %v2103
    %2425 = vmatmul.bf16.gmra.mxu0 %v1522
    %v2426 = vpop.f32.mrf.mxu0
    %v2427 = vadd.f32 %v2413, %v2426
    %v2428 = vpop.f32.mrf.mxu0
    %v2429 = vadd.f32 %v2415, %v2428
    %2430 = vdwg.mxu0
    %2431 = vmatpush.bf16.msra.mxu0 %v2096
    %2432 = vmatpush.bf16.msra.mxu0 %v2088
    %2433 = vmatpush.bf16.msra.mxu0 %v2080
    %2434 = vmatpush.bf16.msra.mxu0 %v2072
    %2435 = vmatpush.bf16.msra.mxu0 %v2064
    %2436 = vmatpush.bf16.msra.mxu0 %v2056
    %2437 = vmatpush.bf16.msra.mxu0 %v2048
    %2438 = vmatpush.bf16.msra.mxu0 %v2040
    %2439 = vmatmul.bf16.gmra.mxu0 %v1521
    %v2440 = vpop.f32.mrf.mxu0
    %v2441 = vadd.f32 0.0, %v2440
    %v2442 = vpop.f32.mrf.mxu0
    %v2443 = vadd.f32 0.0, %v2442
    %2444 = vdwg.mxu0
    %2445 = vmatpush.bf16.msra.mxu0 %v2160
    %2446 = vmatpush.bf16.msra.mxu0 %v2152
    %2447 = vmatpush.bf16.msra.mxu0 %v2144
    %2448 = vmatpush.bf16.msra.mxu0 %v2136
    %2449 = vmatpush.bf16.msra.mxu0 %v2128
    %2450 = vmatpush.bf16.msra.mxu0 %v2120
    %2451 = vmatpush.bf16.msra.mxu0 %v2112
    %2452 = vmatpush.bf16.msra.mxu0 %v2104
    %2453 = vmatmul.bf16.gmra.mxu0 %v1522
    %v2454 = vpop.f32.mrf.mxu0
    %v2455 = vadd.f32 %v2441, %v2454
    %v2456 = vpop.f32.mrf.mxu0
    %v2457 = vadd.f32 %v2443, %v2456
    %2458 = vdwg.mxu0
    %2459 = vmatpush.bf16.msra.mxu0 %v2097
    %2460 = vmatpush.bf16.msra.mxu0 %v2089
    %2461 = vmatpush.bf16.msra.mxu0 %v2081
    %2462 = vmatpush.bf16.msra.mxu0 %v2073
    %2463 = vmatpush.bf16.msra.mxu0 %v2065
    %2464 = vmatpush.bf16.msra.mxu0 %v2057
    %2465 = vmatpush.bf16.msra.mxu0 %v2049
    %2466 = vmatpush.bf16.msra.mxu0 %v2041
    %2467 = vmatmul.bf16.gmra.mxu0 %v1521
    %v2468 = vpop.f32.mrf.mxu0
    %v2469 = vadd.f32 0.0, %v2468
    %v2470 = vpop.f32.mrf.mxu0
    %v2471 = vadd.f32 0.0, %v2470
    %2472 = vdwg.mxu0
    %2473 = vmatpush.bf16.msra.mxu0 %v2161
    %2474 = vmatpush.bf16.msra.mxu0 %v2153
    %2475 = vmatpush.bf16.msra.mxu0 %v2145
    %2476 = vmatpush.bf16.msra.mxu0 %v2137
    %2477 = vmatpush.bf16.msra.mxu0 %v2129
    %2478 = vmatpush.bf16.msra.mxu0 %v2121
    %2479 = vmatpush.bf16.msra.mxu0 %v2113
    %2480 = vmatpush.bf16.msra.mxu0 %v2105
    %2481 = vmatmul.bf16.gmra.mxu0 %v1522
    %v2482 = vpop.f32.mrf.mxu0
    %v2483 = vadd.f32 %v2469, %v2482
    %v2484 = vpop.f32.mrf.mxu0
    %v2485 = vadd.f32 %v2471, %v2484
    %2486 = vdwg.mxu0
    %2487 = vmatpush.bf16.msra.mxu0 %v2098
    %2488 = vmatpush.bf16.msra.mxu0 %v2090
    %2489 = vmatpush.bf16.msra.mxu0 %v2082
    %2490 = vmatpush.bf16.msra.mxu0 %v2074
    %2491 = vmatpush.bf16.msra.mxu0 %v2066
    %2492 = vmatpush.bf16.msra.mxu0 %v2058
    %2493 = vmatpush.bf16.msra.mxu0 %v2050
    %2494 = vmatpush.bf16.msra.mxu0 %v2042
    %2495 = vmatmul.bf16.gmra.mxu0 %v1521
    %v2496 = vpop.f32.mrf.mxu0
    %v2497 = vadd.f32 0.0, %v2496
    %v2498 = vpop.f32.mrf.mxu0
    %v2499 = vadd.f32 0.0, %v2498
    %2500 = vdwg.mxu0
    %2501 = vmatpush.bf16.msra.mxu0 %v2162
    %2502 = vmatpush.bf16.msra.mxu0 %v2154
    %2503 = vmatpush.bf16.msra.mxu0 %v2146
    %2504 = vmatpush.bf16.msra.mxu0 %v2138
    %2505 = vmatpush.bf16.msra.mxu0 %v2130
    %2506 = vmatpush.bf16.msra.mxu0 %v2122
    %2507 = vmatpush.bf16.msra.mxu0 %v2114
    %2508 = vmatpush.bf16.msra.mxu0 %v2106
    %2509 = vmatmul.bf16.gmra.mxu0 %v1522
    %v2510 = vpop.f32.mrf.mxu0
    %v2511 = vadd.f32 %v2497, %v2510
    %v2512 = vpop.f32.mrf.mxu0
    %v2513 = vadd.f32 %v2499, %v2512
    %2514 = vdwg.mxu0
    %v2515 = vxor.u32 %v2315, 2147483648
    %v2516 = vxor.u32 %v2343, 2147483648
    %v2517 = vxor.u32 %v2371, 2147483648
    %v2518 = vxor.u32 %v2399, 2147483648
    %v2519 = vxor.u32 %v2317, 2147483648
    %v2520 = vxor.u32 %v2345, 2147483648
    %v2521 = vxor.u32 %v2373, 2147483648
    %v2522 = vxor.u32 %v2401, 2147483648
    %v2523 = vmul.f32 %v2515, 1.442695
    %v2524 = vpow.pop %v2523
    %v2525 = vmul.f32 %v2516, 1.442695
    %v2526 = vpow.pop %v2525
    %v2527 = vmul.f32 %v2517, 1.442695
    %v2528 = vpow.pop %v2527
    %v2529 = vmul.f32 %v2518, 1.442695
    %v2530 = vpow.pop %v2529
    %v2531 = vmul.f32 %v2519, 1.442695
    %v2532 = vpow.pop %v2531
    %v2533 = vmul.f32 %v2520, 1.442695
    %v2534 = vpow.pop %v2533
    %v2535 = vmul.f32 %v2521, 1.442695
    %v2536 = vpow.pop %v2535
    %v2537 = vmul.f32 %v2522, 1.442695
    %v2538 = vpow.pop %v2537
    %v2539 = vadd.f32 %v2524, 1.0
    %v2540 = vadd.f32 %v2526, 1.0
    %v2541 = vadd.f32 %v2528, 1.0
    %v2542 = vadd.f32 %v2530, 1.0
    %v2543 = vadd.f32 %v2532, 1.0
    %v2544 = vadd.f32 %v2534, 1.0
    %v2545 = vadd.f32 %v2536, 1.0
    %v2546 = vadd.f32 %v2538, 1.0
    %v2547 = vrcp.pop %v2539
    %v2548 = vmul.f32 %v2539, %v2547
    %v2549 = vsub.f32 1.0, %v2548
    %v2550 = vmul.f32 %v2547, %v2549
    %v2551 = vadd.f32 %v2547, %v2550
    %vm2552 = vweird.f32 %v2539
    %vm2553 = vweird.f32 %v2547
    %vm2554 = vmor %vm2552, %vm2553
    %v2555 = vsel %vm2554, %v2547, %v2551
    %v2556 = vand.u32 2147483647, %v2539
    %vm2557 = vcmp.eq.f32.partialorder %v2556, 8.507059e+37
    %v2558 = vand.u32 %v2539, 2147483648
    %v2559 = vor.u32 1.1754944e-38, %v2558
    %v2560 = vsel %vm2557, %v2559, %v2555
    %v2561 = vmul.f32 1.0, %v2560
    %v2562 = vrcp.pop %v2540
    %v2563 = vmul.f32 %v2540, %v2562
    %v2564 = vsub.f32 1.0, %v2563
    %v2565 = vmul.f32 %v2562, %v2564
    %v2566 = vadd.f32 %v2562, %v2565
    %vm2567 = vweird.f32 %v2540
    %vm2568 = vweird.f32 %v2562
    %vm2569 = vmor %vm2567, %vm2568
    %v2570 = vsel %vm2569, %v2562, %v2566
    %v2571 = vand.u32 2147483647, %v2540
    %vm2572 = vcmp.eq.f32.partialorder %v2571, 8.507059e+37
    %v2573 = vand.u32 %v2540, 2147483648
    %v2574 = vor.u32 1.1754944e-38, %v2573
    %v2575 = vsel %vm2572, %v2574, %v2570
    %v2576 = vmul.f32 1.0, %v2575
    %v2577 = vrcp.pop %v2541
    %v2578 = vmul.f32 %v2541, %v2577
    %v2579 = vsub.f32 1.0, %v2578
    %v2580 = vmul.f32 %v2577, %v2579
    %v2581 = vadd.f32 %v2577, %v2580
    %vm2582 = vweird.f32 %v2541
    %vm2583 = vweird.f32 %v2577
    %vm2584 = vmor %vm2582, %vm2583
    %v2585 = vsel %vm2584, %v2577, %v2581
    %v2586 = vand.u32 2147483647, %v2541
    %vm2587 = vcmp.eq.f32.partialorder %v2586, 8.507059e+37
    %v2588 = vand.u32 %v2541, 2147483648
    %v2589 = vor.u32 1.1754944e-38, %v2588
    %v2590 = vsel %vm2587, %v2589, %v2585
    %v2591 = vmul.f32 1.0, %v2590
    %v2592 = vrcp.pop %v2542
    %v2593 = vmul.f32 %v2542, %v2592
    %v2594 = vsub.f32 1.0, %v2593
    %v2595 = vmul.f32 %v2592, %v2594
    %v2596 = vadd.f32 %v2592, %v2595
    %vm2597 = vweird.f32 %v2542
    %vm2598 = vweird.f32 %v2592
    %vm2599 = vmor %vm2597, %vm2598
    %v2600 = vsel %vm2599, %v2592, %v2596
    %v2601 = vand.u32 2147483647, %v2542
    %vm2602 = vcmp.eq.f32.partialorder %v2601, 8.507059e+37
    %v2603 = vand.u32 %v2542, 2147483648
    %v2604 = vor.u32 1.1754944e-38, %v2603
    %v2605 = vsel %vm2602, %v2604, %v2600
    %v2606 = vmul.f32 1.0, %v2605
    %v2607 = vrcp.pop %v2543
    %v2608 = vmul.f32 %v2543, %v2607
    %v2609 = vsub.f32 1.0, %v2608
    %v2610 = vmul.f32 %v2607, %v2609
    %v2611 = vadd.f32 %v2607, %v2610
    %vm2612 = vweird.f32 %v2543
    %vm2613 = vweird.f32 %v2607
    %vm2614 = vmor %vm2612, %vm2613
    %v2615 = vsel %vm2614, %v2607, %v2611
    %v2616 = vand.u32 2147483647, %v2543
    %vm2617 = vcmp.eq.f32.partialorder %v2616, 8.507059e+37
    %v2618 = vand.u32 %v2543, 2147483648
    %v2619 = vor.u32 1.1754944e-38, %v2618
    %v2620 = vsel %vm2617, %v2619, %v2615
    %v2621 = vmul.f32 1.0, %v2620
    %v2622 = vrcp.pop %v2544
    %v2623 = vmul.f32 %v2544, %v2622
    %v2624 = vsub.f32 1.0, %v2623
    %v2625 = vmul.f32 %v2622, %v2624
    %v2626 = vadd.f32 %v2622, %v2625
    %vm2627 = vweird.f32 %v2544
    %vm2628 = vweird.f32 %v2622
    %vm2629 = vmor %vm2627, %vm2628
    %v2630 = vsel %vm2629, %v2622, %v2626
    %v2631 = vand.u32 2147483647, %v2544
    %vm2632 = vcmp.eq.f32.partialorder %v2631, 8.507059e+37
    %v2633 = vand.u32 %v2544, 2147483648
    %v2634 = vor.u32 1.1754944e-38, %v2633
    %v2635 = vsel %vm2632, %v2634, %v2630
    %v2636 = vmul.f32 1.0, %v2635
    %v2637 = vrcp.pop %v2545
    %v2638 = vmul.f32 %v2545, %v2637
    %v2639 = vsub.f32 1.0, %v2638
    %v2640 = vmul.f32 %v2637, %v2639
    %v2641 = vadd.f32 %v2637, %v2640
    %vm2642 = vweird.f32 %v2545
    %vm2643 = vweird.f32 %v2637
    %vm2644 = vmor %vm2642, %vm2643
    %v2645 = vsel %vm2644, %v2637, %v2641
    %v2646 = vand.u32 2147483647, %v2545
    %vm2647 = vcmp.eq.f32.partialorder %v2646, 8.507059e+37
    %v2648 = vand.u32 %v2545, 2147483648
    %v2649 = vor.u32 1.1754944e-38, %v2648
    %v2650 = vsel %vm2647, %v2649, %v2645
    %v2651 = vmul.f32 1.0, %v2650
    %v2652 = vrcp.pop %v2546
    %v2653 = vmul.f32 %v2546, %v2652
    %v2654 = vsub.f32 1.0, %v2653
    %v2655 = vmul.f32 %v2652, %v2654
    %v2656 = vadd.f32 %v2652, %v2655
    %vm2657 = vweird.f32 %v2546
    %vm2658 = vweird.f32 %v2652
    %vm2659 = vmor %vm2657, %vm2658
    %v2660 = vsel %vm2659, %v2652, %v2656
    %v2661 = vand.u32 2147483647, %v2546
    %vm2662 = vcmp.eq.f32.partialorder %v2661, 8.507059e+37
    %v2663 = vand.u32 %v2546, 2147483648
    %v2664 = vor.u32 1.1754944e-38, %v2663
    %v2665 = vsel %vm2662, %v2664, %v2660
    %v2666 = vmul.f32 1.0, %v2665
    %v2667 = vmul.f32 %v2315, %v2561
    %v2668 = vmul.f32 %v2343, %v2576
    %v2669 = vmul.f32 %v2371, %v2591
    %v2670 = vmul.f32 %v2399, %v2606
    %v2671 = vmul.f32 %v2317, %v2621
    %v2672 = vmul.f32 %v2345, %v2636
    %v2673 = vmul.f32 %v2373, %v2651
    %v2674 = vmul.f32 %v2401, %v2666
    %v2675 = vmul.f32 %v2667, %v2427
    %v2676 = vmul.f32 %v2668, %v2455
    %v2677 = vmul.f32 %v2669, %v2483
    %v2678 = vmul.f32 %v2670, %v2511
    %v2679 = vmul.f32 %v2671, %v2429
    %v2680 = vmul.f32 %v2672, %v2457
    %v2681 = vmul.f32 %v2673, %v2485
    %v2682 = vmul.f32 %v2674, %v2513
    %v2683 = vpack.c.bf16 %v2679, %v2675
    %v2684 = vpack.c.bf16 %v2680, %v2676
    %v2685 = vpack.c.bf16 %v2681, %v2677
    %v2686 = vpack.c.bf16 %v2682, %v2678
    %v2687 = vld [vmem:[#allocation15] sm:$0xff]
    %v2688 = vld [vmem:[#allocation15 + $0x8] sm:$0xff]
    %v2689 = vld [vmem:[#allocation15 + $0x10] sm:$0xff]
    %v2690 = vld [vmem:[#allocation15 + $0x18] sm:$0xff]
    %v2691 = vld [vmem:[#allocation15 + $0x20] sm:$0xff]
    %v2692 = vld [vmem:[#allocation15 + $0x28] sm:$0xff]
    %v2693 = vld [vmem:[#allocation15 + $0x30] sm:$0xff]
    %v2694 = vld [vmem:[#allocation15 + $0x38] sm:$0xff]
    %v2695 = vld [vmem:[#allocation15 + $0x40] sm:$0xff]
    %v2696 = vld [vmem:[#allocation15 + $0x48] sm:$0xff]
    %v2697 = vld [vmem:[#allocation15 + $0x50] sm:$0xff]
    %v2698 = vld [vmem:[#allocation15 + $0x58] sm:$0xff]
    %v2699 = vld [vmem:[#allocation15 + $0x60] sm:$0xff]
    %v2700 = vld [vmem:[#allocation15 + $0x68] sm:$0xff]
    %v2701 = vld [vmem:[#allocation15 + $0x70] sm:$0xff]
    %v2702 = vld [vmem:[#allocation15 + $0x78] sm:$0xff]
    %v2703 = vld [vmem:[#allocation15 + $0x80] sm:$0xff]
    %v2704 = vld [vmem:[#allocation15 + $0x88] sm:$0xff]
    %v2705 = vld [vmem:[#allocation15 + $0x90] sm:$0xff]
    %v2706 = vld [vmem:[#allocation15 + $0x98] sm:$0xff]
    %v2707 = vld [vmem:[#allocation15 + $0xa0] sm:$0xff]
    %v2708 = vld [vmem:[#allocation15 + $0xa8] sm:$0xff]
    %v2709 = vld [vmem:[#allocation15 + $0xb0] sm:$0xff]
    %v2710 = vld [vmem:[#allocation15 + $0xb8] sm:$0xff]
    %v2711 = vld [vmem:[#allocation15 + $0xc0] sm:$0xff]
    %v2712 = vld [vmem:[#allocation15 + $0xc8] sm:$0xff]
    %v2713 = vld [vmem:[#allocation15 + $0xd0] sm:$0xff]
    %v2714 = vld [vmem:[#allocation15 + $0xd8] sm:$0xff]
    %v2715 = vld [vmem:[#allocation15 + $0xe0] sm:$0xff]
    %v2716 = vld [vmem:[#allocation15 + $0xe8] sm:$0xff]
    %v2717 = vld [vmem:[#allocation15 + $0xf0] sm:$0xff]
    %v2718 = vld [vmem:[#allocation15 + $0xf8] sm:$0xff]
    %v2719 = vld [vmem:[#allocation15 + $0x100] sm:$0xff]
    %v2720 = vld [vmem:[#allocation15 + $0x108] sm:$0xff]
    %v2721 = vld [vmem:[#allocation15 + $0x110] sm:$0xff]
    %v2722 = vld [vmem:[#allocation15 + $0x118] sm:$0xff]
    %v2723 = vld [vmem:[#allocation15 + $0x120] sm:$0xff]
    %v2724 = vld [vmem:[#allocation15 + $0x128] sm:$0xff]
    %v2725 = vld [vmem:[#allocation15 + $0x130] sm:$0xff]
    %v2726 = vld [vmem:[#allocation15 + $0x138] sm:$0xff]
    %v2727 = vld [vmem:[#allocation15 + $0x140] sm:$0xff]
    %v2728 = vld [vmem:[#allocation15 + $0x148] sm:$0xff]
    %v2729 = vld [vmem:[#allocation15 + $0x150] sm:$0xff]
    %v2730 = vld [vmem:[#allocation15 + $0x158] sm:$0xff]
    %v2731 = vld [vmem:[#allocation15 + $0x160] sm:$0xff]
    %v2732 = vld [vmem:[#allocation15 + $0x168] sm:$0xff]
    %v2733 = vld [vmem:[#allocation15 + $0x170] sm:$0xff]
    %v2734 = vld [vmem:[#allocation15 + $0x178] sm:$0xff]
    %v2735 = vld [vmem:[#allocation15 + $0x180] sm:$0xff]
    %v2736 = vld [vmem:[#allocation15 + $0x188] sm:$0xff]
    %v2737 = vld [vmem:[#allocation15 + $0x190] sm:$0xff]
    %v2738 = vld [vmem:[#allocation15 + $0x198] sm:$0xff]
    %v2739 = vld [vmem:[#allocation15 + $0x1a0] sm:$0xff]
    %v2740 = vld [vmem:[#allocation15 + $0x1a8] sm:$0xff]
    %v2741 = vld [vmem:[#allocation15 + $0x1b0] sm:$0xff]
    %v2742 = vld [vmem:[#allocation15 + $0x1b8] sm:$0xff]
    %v2743 = vld [vmem:[#allocation15 + $0x1c0] sm:$0xff]
    %v2744 = vld [vmem:[#allocation15 + $0x1c8] sm:$0xff]
    %v2745 = vld [vmem:[#allocation15 + $0x1d0] sm:$0xff]
    %v2746 = vld [vmem:[#allocation15 + $0x1d8] sm:$0xff]
    %v2747 = vld [vmem:[#allocation15 + $0x1e0] sm:$0xff]
    %v2748 = vld [vmem:[#allocation15 + $0x1e8] sm:$0xff]
    %v2749 = vld [vmem:[#allocation15 + $0x1f0] sm:$0xff]
    %v2750 = vld [vmem:[#allocation15 + $0x1f8] sm:$0xff]
    %v2815 = vunpack.c.l.b16 %v2687
    %v2816 = vunpack.c.h.b16 %v2687
    %v2817 = vunpack.c.l.b16 %v2688
    %v2818 = vunpack.c.h.b16 %v2688
    %v2819 = vunpack.c.l.b16 %v2689
    %v2820 = vunpack.c.h.b16 %v2689
    %v2821 = vunpack.c.l.b16 %v2690
    %v2822 = vunpack.c.h.b16 %v2690
    %v2823 = vunpack.c.l.b16 %v2691
    %v2824 = vunpack.c.h.b16 %v2691
    %v2825 = vunpack.c.l.b16 %v2692
    %v2826 = vunpack.c.h.b16 %v2692
    %v2827 = vunpack.c.l.b16 %v2693
    %v2828 = vunpack.c.h.b16 %v2693
    %v2829 = vunpack.c.l.b16 %v2694
    %v2830 = vunpack.c.h.b16 %v2694
    %v2831 = vunpack.c.l.b16 %v2695
    %v2832 = vunpack.c.h.b16 %v2695
    %v2833 = vunpack.c.l.b16 %v2696
    %v2834 = vunpack.c.h.b16 %v2696
    %v2835 = vunpack.c.l.b16 %v2697
    %v2836 = vunpack.c.h.b16 %v2697
    %v2837 = vunpack.c.l.b16 %v2698
    %v2838 = vunpack.c.h.b16 %v2698
    %v2839 = vunpack.c.l.b16 %v2699
    %v2840 = vunpack.c.h.b16 %v2699
    %v2841 = vunpack.c.l.b16 %v2700
    %v2842 = vunpack.c.h.b16 %v2700
    %v2843 = vunpack.c.l.b16 %v2701
    %v2844 = vunpack.c.h.b16 %v2701
    %v2845 = vunpack.c.l.b16 %v2702
    %v2846 = vunpack.c.h.b16 %v2702
    %v2847 = vunpack.c.l.b16 %v2703
    %v2848 = vunpack.c.h.b16 %v2703
    %v2849 = vunpack.c.l.b16 %v2704
    %v2850 = vunpack.c.h.b16 %v2704
    %v2851 = vunpack.c.l.b16 %v2705
    %v2852 = vunpack.c.h.b16 %v2705
    %v2853 = vunpack.c.l.b16 %v2706
    %v2854 = vunpack.c.h.b16 %v2706
    %v2855 = vunpack.c.l.b16 %v2707
    %v2856 = vunpack.c.h.b16 %v2707
    %v2857 = vunpack.c.l.b16 %v2708
    %v2858 = vunpack.c.h.b16 %v2708
    %v2859 = vunpack.c.l.b16 %v2709
    %v2860 = vunpack.c.h.b16 %v2709
    %v2861 = vunpack.c.l.b16 %v2710
    %v2862 = vunpack.c.h.b16 %v2710
    %v2863 = vunpack.c.l.b16 %v2711
    %v2864 = vunpack.c.h.b16 %v2711
    %v2865 = vunpack.c.l.b16 %v2712
    %v2866 = vunpack.c.h.b16 %v2712
    %v2867 = vunpack.c.l.b16 %v2713
    %v2868 = vunpack.c.h.b16 %v2713
    %v2869 = vunpack.c.l.b16 %v2714
    %v2870 = vunpack.c.h.b16 %v2714
    %v2871 = vunpack.c.l.b16 %v2715
    %v2872 = vunpack.c.h.b16 %v2715
    %v2873 = vunpack.c.l.b16 %v2716
    %v2874 = vunpack.c.h.b16 %v2716
    %v2875 = vunpack.c.l.b16 %v2717
    %v2876 = vunpack.c.h.b16 %v2717
    %v2877 = vunpack.c.l.b16 %v2718
    %v2878 = vunpack.c.h.b16 %v2718
    %v2879 = vunpack.c.l.b16 %v2719
    %v2880 = vunpack.c.h.b16 %v2719
    %v2881 = vunpack.c.l.b16 %v2720
    %v2882 = vunpack.c.h.b16 %v2720
    %v2883 = vunpack.c.l.b16 %v2721
    %v2884 = vunpack.c.h.b16 %v2721
    %v2885 = vunpack.c.l.b16 %v2722
    %v2886 = vunpack.c.h.b16 %v2722
    %v2887 = vunpack.c.l.b16 %v2723
    %v2888 = vunpack.c.h.b16 %v2723
    %v2889 = vunpack.c.l.b16 %v2724
    %v2890 = vunpack.c.h.b16 %v2724
    %v2891 = vunpack.c.l.b16 %v2725
    %v2892 = vunpack.c.h.b16 %v2725
    %v2893 = vunpack.c.l.b16 %v2726
    %v2894 = vunpack.c.h.b16 %v2726
    %v2895 = vunpack.c.l.b16 %v2727
    %v2896 = vunpack.c.h.b16 %v2727
    %v2897 = vunpack.c.l.b16 %v2728
    %v2898 = vunpack.c.h.b16 %v2728
    %v2899 = vunpack.c.l.b16 %v2729
    %v2900 = vunpack.c.h.b16 %v2729
    %v2901 = vunpack.c.l.b16 %v2730
    %v2902 = vunpack.c.h.b16 %v2730
    %v2903 = vunpack.c.l.b16 %v2731
    %v2904 = vunpack.c.h.b16 %v2731
    %v2905 = vunpack.c.l.b16 %v2732
    %v2906 = vunpack.c.h.b16 %v2732
    %v2907 = vunpack.c.l.b16 %v2733
    %v2908 = vunpack.c.h.b16 %v2733
    %v2909 = vunpack.c.l.b16 %v2734
    %v2910 = vunpack.c.h.b16 %v2734
    %v2911 = vunpack.c.l.b16 %v2735
    %v2912 = vunpack.c.h.b16 %v2735
    %v2913 = vunpack.c.l.b16 %v2736
    %v2914 = vunpack.c.h.b16 %v2736
    %v2915 = vunpack.c.l.b16 %v2737
    %v2916 = vunpack.c.h.b16 %v2737
    %v2917 = vunpack.c.l.b16 %v2738
    %v2918 = vunpack.c.h.b16 %v2738
    %v2919 = vunpack.c.l.b16 %v2739
    %v2920 = vunpack.c.h.b16 %v2739
    %v2921 = vunpack.c.l.b16 %v2740
    %v2922 = vunpack.c.h.b16 %v2740
    %v2923 = vunpack.c.l.b16 %v2741
    %v2924 = vunpack.c.h.b16 %v2741
    %v2925 = vunpack.c.l.b16 %v2742
    %v2926 = vunpack.c.h.b16 %v2742
    %v2927 = vunpack.c.l.b16 %v2743
    %v2928 = vunpack.c.h.b16 %v2743
    %v2929 = vunpack.c.l.b16 %v2744
    %v2930 = vunpack.c.h.b16 %v2744
    %v2931 = vunpack.c.l.b16 %v2745
    %v2932 = vunpack.c.h.b16 %v2745
    %v2933 = vunpack.c.l.b16 %v2746
    %v2934 = vunpack.c.h.b16 %v2746
    %v2935 = vunpack.c.l.b16 %v2747
    %v2936 = vunpack.c.h.b16 %v2747
    %v2937 = vunpack.c.l.b16 %v2748
    %v2938 = vunpack.c.h.b16 %v2748
    %v2939 = vunpack.c.l.b16 %v2749
    %v2940 = vunpack.c.h.b16 %v2749
    %v2941 = vunpack.c.l.b16 %v2750
    %v2942 = vunpack.c.h.b16 %v2750
    %v2943 = vpack.c.b16 %v2817, %v2815
    %v2944 = vpack.c.b16 %v2818, %v2816
    %v2945 = vpack.c.b16 %v2821, %v2819
    %v2946 = vpack.c.b16 %v2822, %v2820
    %v2947 = vpack.c.b16 %v2825, %v2823
    %v2948 = vpack.c.b16 %v2826, %v2824
    %v2949 = vpack.c.b16 %v2829, %v2827
    %v2950 = vpack.c.b16 %v2830, %v2828
    %v2951 = vpack.c.b16 %v2833, %v2831
    %v2952 = vpack.c.b16 %v2834, %v2832
    %v2953 = vpack.c.b16 %v2837, %v2835
    %v2954 = vpack.c.b16 %v2838, %v2836
    %v2955 = vpack.c.b16 %v2841, %v2839
    %v2956 = vpack.c.b16 %v2842, %v2840
    %v2957 = vpack.c.b16 %v2845, %v2843
    %v2958 = vpack.c.b16 %v2846, %v2844
    %v2959 = vpack.c.b16 %v2849, %v2847
    %v2960 = vpack.c.b16 %v2850, %v2848
    %v2961 = vpack.c.b16 %v2853, %v2851
    %v2962 = vpack.c.b16 %v2854, %v2852
    %v2963 = vpack.c.b16 %v2857, %v2855
    %v2964 = vpack.c.b16 %v2858, %v2856
    %v2965 = vpack.c.b16 %v2861, %v2859
    %v2966 = vpack.c.b16 %v2862, %v2860
    %v2967 = vpack.c.b16 %v2865, %v2863
    %v2968 = vpack.c.b16 %v2866, %v2864
    %v2969 = vpack.c.b16 %v2869, %v2867
    %v2970 = vpack.c.b16 %v2870, %v2868
    %v2971 = vpack.c.b16 %v2873, %v2871
    %v2972 = vpack.c.b16 %v2874, %v2872
    %v2973 = vpack.c.b16 %v2877, %v2875
    %v2974 = vpack.c.b16 %v2878, %v2876
    %v2975 = vpack.c.b16 %v2881, %v2879
    %v2976 = vpack.c.b16 %v2882, %v2880
    %v2977 = vpack.c.b16 %v2885, %v2883
    %v2978 = vpack.c.b16 %v2886, %v2884
    %v2979 = vpack.c.b16 %v2889, %v2887
    %v2980 = vpack.c.b16 %v2890, %v2888
    %v2981 = vpack.c.b16 %v2893, %v2891
    %v2982 = vpack.c.b16 %v2894, %v2892
    %v2983 = vpack.c.b16 %v2897, %v2895
    %v2984 = vpack.c.b16 %v2898, %v2896
    %v2985 = vpack.c.b16 %v2901, %v2899
    %v2986 = vpack.c.b16 %v2902, %v2900
    %v2987 = vpack.c.b16 %v2905, %v2903
    %v2988 = vpack.c.b16 %v2906, %v2904
    %v2989 = vpack.c.b16 %v2909, %v2907
    %v2990 = vpack.c.b16 %v2910, %v2908
    %v2991 = vpack.c.b16 %v2913, %v2911
    %v2992 = vpack.c.b16 %v2914, %v2912
    %v2993 = vpack.c.b16 %v2917, %v2915
    %v2994 = vpack.c.b16 %v2918, %v2916
    %v2995 = vpack.c.b16 %v2921, %v2919
    %v2996 = vpack.c.b16 %v2922, %v2920
    %v2997 = vpack.c.b16 %v2925, %v2923
    %v2998 = vpack.c.b16 %v2926, %v2924
    %v2999 = vpack.c.b16 %v2929, %v2927
    %v3000 = vpack.c.b16 %v2930, %v2928
    %v3001 = vpack.c.b16 %v2933, %v2931
    %v3002 = vpack.c.b16 %v2934, %v2932
    %v3003 = vpack.c.b16 %v2937, %v2935
    %v3004 = vpack.c.b16 %v2938, %v2936
    %v3005 = vpack.c.b16 %v2941, %v2939
    %v3006 = vpack.c.b16 %v2942, %v2940
    %3071 = vmatpush.bf16.msra.mxu0 %v2957
    %3072 = vmatpush.bf16.msra.mxu0 %v2955
    %3073 = vmatpush.bf16.msra.mxu0 %v2953
    %3074 = vmatpush.bf16.msra.mxu0 %v2951
    %3075 = vmatpush.bf16.msra.mxu0 %v2949
    %3076 = vmatpush.bf16.msra.mxu0 %v2947
    %3077 = vmatpush.bf16.msra.mxu0 %v2945
    %3078 = vmatpush.bf16.msra.mxu0 %v2943
    %3079 = vmatmul.bf16.gmra.mxu0 %v2683
    %v3080 = vpop.f32.mrf.mxu0
    %v3081 = vadd.f32 0.0, %v3080
    %v3082 = vpop.f32.mrf.mxu0
    %v3083 = vadd.f32 0.0, %v3082
    %3084 = vdwg.mxu0
    %3085 = vmatpush.bf16.msra.mxu0 %v2973
    %3086 = vmatpush.bf16.msra.mxu0 %v2971
    %3087 = vmatpush.bf16.msra.mxu0 %v2969
    %3088 = vmatpush.bf16.msra.mxu0 %v2967
    %3089 = vmatpush.bf16.msra.mxu0 %v2965
    %3090 = vmatpush.bf16.msra.mxu0 %v2963
    %3091 = vmatpush.bf16.msra.mxu0 %v2961
    %3092 = vmatpush.bf16.msra.mxu0 %v2959
    %3093 = vmatmul.bf16.gmra.mxu0 %v2684
    %v3094 = vpop.f32.mrf.mxu0
    %v3095 = vadd.f32 %v3081, %v3094
    %v3096 = vpop.f32.mrf.mxu0
    %v3097 = vadd.f32 %v3083, %v3096
    %3098 = vdwg.mxu0
    %3099 = vmatpush.bf16.msra.mxu0 %v2989
    %3100 = vmatpush.bf16.msra.mxu0 %v2987
    %3101 = vmatpush.bf16.msra.mxu0 %v2985
    %3102 = vmatpush.bf16.msra.mxu0 %v2983
    %3103 = vmatpush.bf16.msra.mxu0 %v2981
    %3104 = vmatpush.bf16.msra.mxu0 %v2979
    %3105 = vmatpush.bf16.msra.mxu0 %v2977
    %3106 = vmatpush.bf16.msra.mxu0 %v2975
    %3107 = vmatmul.bf16.gmra.mxu0 %v2685
    %v3108 = vpop.f32.mrf.mxu0
    %v3109 = vadd.f32 %v3095, %v3108
    %v3110 = vpop.f32.mrf.mxu0
    %v3111 = vadd.f32 %v3097, %v3110
    %3112 = vdwg.mxu0
    %3113 = vmatpush.bf16.msra.mxu0 %v3005
    %3114 = vmatpush.bf16.msra.mxu0 %v3003
    %3115 = vmatpush.bf16.msra.mxu0 %v3001
    %3116 = vmatpush.bf16.msra.mxu0 %v2999
    %3117 = vmatpush.bf16.msra.mxu0 %v2997
    %3118 = vmatpush.bf16.msra.mxu0 %v2995
    %3119 = vmatpush.bf16.msra.mxu0 %v2993
    %3120 = vmatpush.bf16.msra.mxu0 %v2991
    %3121 = vmatmul.bf16.gmra.mxu0 %v2686
    %v3122 = vpop.f32.mrf.mxu0
    %v3123 = vadd.f32 %v3109, %v3122
    %v3124 = vpop.f32.mrf.mxu0
    %v3125 = vadd.f32 %v3111, %v3124
    %3126 = vdwg.mxu0
    %3127 = vmatpush.bf16.msra.mxu0 %v2958
    %3128 = vmatpush.bf16.msra.mxu0 %v2956
    %3129 = vmatpush.bf16.msra.mxu0 %v2954
    %3130 = vmatpush.bf16.msra.mxu0 %v2952
    %3131 = vmatpush.bf16.msra.mxu0 %v2950
    %3132 = vmatpush.bf16.msra.mxu0 %v2948
    %3133 = vmatpush.bf16.msra.mxu0 %v2946
    %3134 = vmatpush.bf16.msra.mxu0 %v2944
    %3135 = vmatmul.bf16.gmra.mxu0 %v2683
    %v3136 = vpop.f32.mrf.mxu0
    %v3137 = vadd.f32 0.0, %v3136
    %v3138 = vpop.f32.mrf.mxu0
    %v3139 = vadd.f32 0.0, %v3138
    %3140 = vdwg.mxu0
    %3141 = vmatpush.bf16.msra.mxu0 %v2974
    %3142 = vmatpush.bf16.msra.mxu0 %v2972
    %3143 = vmatpush.bf16.msra.mxu0 %v2970
    %3144 = vmatpush.bf16.msra.mxu0 %v2968
    %3145 = vmatpush.bf16.msra.mxu0 %v2966
    %3146 = vmatpush.bf16.msra.mxu0 %v2964
    %3147 = vmatpush.bf16.msra.mxu0 %v2962
    %3148 = vmatpush.bf16.msra.mxu0 %v2960
    %3149 = vmatmul.bf16.gmra.mxu0 %v2684
    %v3150 = vpop.f32.mrf.mxu0
    %v3151 = vadd.f32 %v3137, %v3150
    %v3152 = vpop.f32.mrf.mxu0
    %v3153 = vadd.f32 %v3139, %v3152
    %3154 = vdwg.mxu0
    %3155 = vmatpush.bf16.msra.mxu0 %v2990
    %3156 = vmatpush.bf16.msra.mxu0 %v2988
    %3157 = vmatpush.bf16.msra.mxu0 %v2986
    %3158 = vmatpush.bf16.msra.mxu0 %v2984
    %3159 = vmatpush.bf16.msra.mxu0 %v2982
    %3160 = vmatpush.bf16.msra.mxu0 %v2980
    %3161 = vmatpush.bf16.msra.mxu0 %v2978
    %3162 = vmatpush.bf16.msra.mxu0 %v2976
    %3163 = vmatmul.bf16.gmra.mxu0 %v2685
    %v3164 = vpop.f32.mrf.mxu0
    %v3165 = vadd.f32 %v3151, %v3164
    %v3166 = vpop.f32.mrf.mxu0
    %v3167 = vadd.f32 %v3153, %v3166
    %3168 = vdwg.mxu0
    %3169 = vmatpush.bf16.msra.mxu0 %v3006
    %3170 = vmatpush.bf16.msra.mxu0 %v3004
    %3171 = vmatpush.bf16.msra.mxu0 %v3002
    %3172 = vmatpush.bf16.msra.mxu0 %v3000
    %3173 = vmatpush.bf16.msra.mxu0 %v2998
    %3174 = vmatpush.bf16.msra.mxu0 %v2996
    %3175 = vmatpush.bf16.msra.mxu0 %v2994
    %3176 = vmatpush.bf16.msra.mxu0 %v2992
    %3177 = vmatmul.bf16.gmra.mxu0 %v2686
    %v3178 = vpop.f32.mrf.mxu0
    %v3179 = vadd.f32 %v3165, %v3178
    %v3180 = vpop.f32.mrf.mxu0
    %v3181 = vadd.f32 %v3167, %v3180
    %3182 = vdwg.mxu0
    %v3183 = vadd.f32 %v1469, %v3123
    %v3184 = vadd.f32 %v1470, %v3179
    %v3185 = vadd.f32 %v1471, %v3125
    %v3186 = vadd.f32 %v1472, %v3181
    %3187 = vst [vmem:[#allocation17] sm:$0xff] %v3183
    %3188 = vst [vmem:[#allocation17 + $0x8] sm:$0xff] %v3184
    %3189 = vst [vmem:[#allocation17 + $0x10] sm:$0xff] %v3185
    %3190 = vst [vmem:[#allocation17 + $0x18] sm:$0xff] %v3186
    // Predicated region
    $region74: #{tpu_custom_call.1} parent=1 // pred_check
      _
    $region75: #{tpu_custom_call.1} parent=1 // pred_check_branch
      %3192 = sbr.rel (0) target = $region77
    $region76: #{tpu_custom_call.1} parent=1 // pred_region
      %3194 = vsyncadd [#allocation5], 0
      %s3195 = sshll.u32 [#allocation17], 4
      %s3196 = int_to_ptr.vmem [resolvable:$true] %s3195
      %s3197 = sshll.u32 %s10, 4
      %s3198 = int_to_ptr.hbm [resolvable:$true] %s3197
      %3203 = dma.vmem_to_hbm [thread:$0]  %s3196, 512, %s3198, [#allocation5], 256, 256, 16
    $region77: #{tpu_custom_call.1} parent=1 // pred_fallthru
      _
    // Predicated region
    $region78: #{tpu_custom_call.1} parent=1 // pred_check
      _
    $region79: #{tpu_custom_call.1} parent=1 // pred_check_branch
      %3205 = sbr.rel (0) target = $region81
    $region80: #{tpu_custom_call.1} parent=1 // pred_region
      %3207 = dma.done [#allocation5], 512
    $region81: #{tpu_custom_call.1} parent=1 // pred_fallthru
      _
    %3208 = vsyncpa [#allocation4], 1
    %3209 = vsyncpa [#allocation7], 1
    %3210 = vsyncpa [#allocation10], 1
    %3211 = vsyncpa [#allocation13], 1
    %3212 = vsyncpa [#allocation16], 1
    %3213 = vsyncpa [#allocation5], 1

</llo_original>
